<compile_context>
chip_gen: v6e
topology: v6e:2x2x1
jax: 0.10.0
libtpu: 0.0.40
codegen_flags: <defaults>
</compile_context>

<pallas_src>
import functools

import numpy as np
import jax
import jax.numpy as jnp
from jax.experimental import pallas as pl
from jax.experimental.pallas import tpu as pltpu


def _fused_cnn_kernel(*refs, n_layers, ks, H, W):
    """refs = (x_ref, taps_ref, w_0, b_0, ..., w_{L-1}, b_{L-1}, o_ref).

    x_ref:    (C_in, HW)            f32, lane-dense
    taps_ref: (ks*ks, HW, HW)       bf16 0/1 shift-selection matrices
    w_l:      (ks*ks, C_out, C_in)  f32  (one (C_out, C_in) slab per tap)
    b_l:      (C_out, 1)            f32
    o_ref:    (C_last, HW)          f32, lane-dense
    """
    x_ref, taps_ref = refs[0], refs[1]
    o_ref = refs[-1]
    wb = refs[2:-1]
    HW = H * W
    kk = ks * ks
    center = (ks // 2) * ks + (ks // 2)   # zero-shift tap == identity

    # Cast tap matrices to f32 once; reused by every layer (live in VMEM).
    taps = [None if t == center else taps_ref[t].astype(jnp.float32)
            for t in range(kk)]

    act = x_ref[...].astype(jnp.float32)              # (C_in, HW)
    for l in range(n_layers):
        w_ref, b_ref = wb[2 * l], wb[2 * l + 1]
        c_out = w_ref.shape[1]
        y = jnp.broadcast_to(b_ref[...], (c_out, HW)) # bias broadcast over lanes
        for t in range(kk):
            # shifted[c, p] = act[c, neighbor_t(p)], zero outside the image.
            if t == center:
                shifted = act
            else:
                shifted = jnp.dot(act, taps[t],
                                  preferred_element_type=jnp.float32)
            y = y + jnp.dot(w_ref[t], shifted,        # (C_out,C_in)@(C_in,HW)
                            preferred_element_type=jnp.float32)
        if l < n_layers - 1:
            y = jnp.maximum(y, 0.0)                   # ReLU between conv layers
        act = y
    o_ref[...] = act.astype(o_ref.dtype)


def _build_tap_matrices(H, W, ks):
    """0/1 matrices M_t so that (act @ M_t)[c, p] is the zero-padded shift."""
    HW = H * W
    pad = ks // 2
    p = np.arange(HW)
    pr, pc = p // W, p % W
    src = np.arange(HW)[:, None]
    mats = []
    for di in range(ks):
        for dj in range(ks):
            si, sj = di - pad, dj - pad
            valid = ((pr + si >= 0) & (pr + si < H) &
                     (pc + sj >= 0) & (pc + sj < W))
            m = (src == (p + si * W + sj)[None, :]) & valid[None, :]
            mats.append(m)
    # bf16 halves the one-time HBM->VMEM DMA; 0/1 values are exact in bf16.
    return jnp.asarray(np.stack(mats, axis=0), dtype=jnp.bfloat16)


def tddft_cnn_forward(x, params, *, ks):
    """TDDFTCNN.forward: x (N, C_in, H, W) -> (N, hc[-1], H, W)."""
    N, C_in, H, W = x.shape
    HW = H * W
    n_layers = len(params)
    C_last = params[-1][0].shape[0]

    taps = _build_tap_matrices(H, W, ks)

    inputs = [x.reshape(N, C_in, HW).astype(jnp.float32), taps]
    in_specs = [
        pl.BlockSpec((pl.Squeezed(), C_in, HW), lambda n: (n, 0, 0)),
        # constant block index -> stays VMEM-resident across grid steps
        pl.BlockSpec((ks * ks, HW, HW), lambda n: (0, 0, 0)),
    ]
    for (w, b) in params:
        c_out, c_in_l, kh, kw = w.shape
        # (C_out, C_in, kh, kw) -> (kh*kw, C_out, C_in): one slab per tap.
        wt = jnp.transpose(w, (2, 3, 0, 1)).reshape(kh * kw, c_out, c_in_l)
        bt = b.reshape(c_out, 1)
        inputs += [wt.astype(jnp.float32), bt.astype(jnp.float32)]
        in_specs += [
            pl.BlockSpec((kh * kw, c_out, c_in_l), lambda n: (0, 0, 0)),
            pl.BlockSpec((c_out, 1), lambda n: (0, 0)),
        ]

    kern = functools.partial(_fused_cnn_kernel, n_layers=n_layers,
                             ks=ks, H=H, W=W)
    out = pl.pallas_call(
        kern,
        out_shape=jax.ShapeDtypeStruct((N, C_last, HW), jnp.float32),
        grid=(N,),
        in_specs=in_specs,
        out_specs=pl.BlockSpec((pl.Squeezed(), C_last, HW),
                               lambda n: (n, 0, 0)),
        compiler_params=pltpu.CompilerParams(
            dimension_semantics=("parallel",)),
    )(*inputs)
    # Lane-dense (N, C_last, HW) output reshapes straight to NCHW (no transpose).
    return out.reshape(N, C_last, H, W)


def init_tddft_cnn_params(key, in_channels, hidden_channels, ks):
    """Deterministic PyTorch-style (kaiming-uniform bound) init."""
    params = []
    c_in = in_channels
    for c_out in hidden_channels:
        key, k1, k2 = jax.random.split(key, 3)
        fan_in = c_in * ks * ks
        bound = 1.0 / (fan_in ** 0.5)
        w = jax.random.uniform(k1, (c_out, c_in, ks, ks), jnp.float32,
                               minval=-bound, maxval=bound)
        b = jax.random.uniform(k2, (c_out,), jnp.float32,
                               minval=-bound, maxval=bound)
        params.append((w, b))
        c_in = c_out
    return params


def _reference_forward(x, params):
    """Pure-JAX/XLA reference of the assumed ConvBlock stack."""
    act = x
    n = len(params)
    for i, (w, b) in enumerate(params):
        act = jax.lax.conv_general_dilated(
            act, w, window_strides=(1, 1), padding="SAME",
            dimension_numbers=("NCHW", "OIHW", "NCHW"),
            precision=jax.lax.Precision.HIGHEST)
        act = act + b[None, :, None, None]
        if i < n - 1:
            act = jnp.maximum(act, 0.0)
    return act


if __name__ == "__main__":
    key = jax.random.PRNGKey(0)
    k_x, k_p = jax.random.split(key)

    # Small shapes consistent with the module's usage in `prediction`:
    # 2 input channels (potential v + density n), last hidden channel = 1.
    N, C_in, H, W = 2, 2, 16, 16
    hidden_channels = [8, 8, 1]
    ks = 3

    x = jax.random.normal(k_x, (N, C_in, H, W), jnp.float32)
    params = init_tddft_cnn_params(k_p, C_in, hidden_channels, ks)

    fwd = jax.jit(functools.partial(tddft_cnn_forward, ks=ks))
    y = fwd(x, params)
    jax.block_until_ready(y)
    assert y.shape == (N, hidden_channels[-1], H, W)

    # Correctness check against the XLA reference.
    y_ref = _reference_forward(x, params)
    max_err = float(jnp.max(jnp.abs(y - y_ref)))
    assert jnp.allclose(y, y_ref, atol=5e-2, rtol=5e-2), f"max abs err {max_err}"

    print("KERNEL_OK")
</pallas_src>

<mosaic_0001>
module attributes {stable_mosaic.version = 11 : i64} {
  func.func @_fused_cnn_kernel(%arg0: i32, %arg1: memref<1x2x256xf32, #tpu.memory_space<vmem>>, %arg2: memref<9x256x256xbf16, #tpu.memory_space<vmem>>, %arg3: memref<9x8x2xf32, #tpu.memory_space<vmem>>, %arg4: memref<8x1xf32, #tpu.memory_space<vmem>>, %arg5: memref<9x8x8xf32, #tpu.memory_space<vmem>>, %arg6: memref<8x1xf32, #tpu.memory_space<vmem>>, %arg7: memref<9x1x8xf32, #tpu.memory_space<vmem>>, %arg8: memref<1x1xf32, #tpu.memory_space<vmem>>, %arg9: memref<1x1x256xf32, #tpu.memory_space<vmem>>) attributes {dimension_semantics = [#tpu.dimension_semantics<parallel>], iteration_bounds = array<i64: 2>, scalar_prefetch = 0 : i64, scratch_operands = 0 : i64, tpu.core_type = #tpu.core_type<tc>, window_params = [{transform_indices = @transform_0, window_bounds = array<i64: 1, 2, 256>}, {pipeline_mode = #tpu.pipeline_mode<synchronous>, transform_indices = @transform_1, window_bounds = array<i64: 9, 256, 256>}, {pipeline_mode = #tpu.pipeline_mode<synchronous>, transform_indices = @transform_2, window_bounds = array<i64: 9, 8, 2>}, {pipeline_mode = #tpu.pipeline_mode<synchronous>, transform_indices = @transform_3, window_bounds = array<i64: 8, 1>}, {pipeline_mode = #tpu.pipeline_mode<synchronous>, transform_indices = @transform_4, window_bounds = array<i64: 9, 8, 8>}, {pipeline_mode = #tpu.pipeline_mode<synchronous>, transform_indices = @transform_5, window_bounds = array<i64: 8, 1>}, {pipeline_mode = #tpu.pipeline_mode<synchronous>, transform_indices = @transform_6, window_bounds = array<i64: 9, 1, 8>}, {pipeline_mode = #tpu.pipeline_mode<synchronous>, transform_indices = @transform_7, window_bounds = array<i64: 1, 1>}, {transform_indices = @transform_8, window_bounds = array<i64: 1, 1, 256>}]} {
    %c0 = arith.constant 0 : index
    %c0_0 = arith.constant 0 : index
    %c0_1 = arith.constant 0 : index
    %0 = vector.load %arg2[%c0, %c0_0, %c0_1] : memref<9x256x256xbf16, #tpu.memory_space<vmem>>, vector<1x256x256xbf16>
    %1 = vector.shape_cast %0 : vector<1x256x256xbf16> to vector<256x256xbf16>
    %2 = arith.extf %1 : vector<256x256xbf16> to vector<256x256xf32>
    %c1 = arith.constant 1 : index
    %c0_2 = arith.constant 0 : index
    %c0_3 = arith.constant 0 : index
    %3 = vector.load %arg2[%c1, %c0_2, %c0_3] : memref<9x256x256xbf16, #tpu.memory_space<vmem>>, vector<1x256x256xbf16>
    %4 = vector.shape_cast %3 : vector<1x256x256xbf16> to vector<256x256xbf16>
    %5 = arith.extf %4 : vector<256x256xbf16> to vector<256x256xf32>
    %c2 = arith.constant 2 : index
    %c0_4 = arith.constant 0 : index
    %c0_5 = arith.constant 0 : index
    %6 = vector.load %arg2[%c2, %c0_4, %c0_5] : memref<9x256x256xbf16, #tpu.memory_space<vmem>>, vector<1x256x256xbf16>
    %7 = vector.shape_cast %6 : vector<1x256x256xbf16> to vector<256x256xbf16>
    %8 = arith.extf %7 : vector<256x256xbf16> to vector<256x256xf32>
    %c3 = arith.constant 3 : index
    %c0_6 = arith.constant 0 : index
    %c0_7 = arith.constant 0 : index
    %9 = vector.load %arg2[%c3, %c0_6, %c0_7] : memref<9x256x256xbf16, #tpu.memory_space<vmem>>, vector<1x256x256xbf16>
    %10 = vector.shape_cast %9 : vector<1x256x256xbf16> to vector<256x256xbf16>
    %11 = arith.extf %10 : vector<256x256xbf16> to vector<256x256xf32>
    %c5 = arith.constant 5 : index
    %c0_8 = arith.constant 0 : index
    %c0_9 = arith.constant 0 : index
    %12 = vector.load %arg2[%c5, %c0_8, %c0_9] : memref<9x256x256xbf16, #tpu.memory_space<vmem>>, vector<1x256x256xbf16>
    %13 = vector.shape_cast %12 : vector<1x256x256xbf16> to vector<256x256xbf16>
    %14 = arith.extf %13 : vector<256x256xbf16> to vector<256x256xf32>
    %c6 = arith.constant 6 : index
    %c0_10 = arith.constant 0 : index
    %c0_11 = arith.constant 0 : index
    %15 = vector.load %arg2[%c6, %c0_10, %c0_11] : memref<9x256x256xbf16, #tpu.memory_space<vmem>>, vector<1x256x256xbf16>
    %16 = vector.shape_cast %15 : vector<1x256x256xbf16> to vector<256x256xbf16>
    %17 = arith.extf %16 : vector<256x256xbf16> to vector<256x256xf32>
    %c7 = arith.constant 7 : index
    %c0_12 = arith.constant 0 : index
    %c0_13 = arith.constant 0 : index
    %18 = vector.load %arg2[%c7, %c0_12, %c0_13] : memref<9x256x256xbf16, #tpu.memory_space<vmem>>, vector<1x256x256xbf16>
    %19 = vector.shape_cast %18 : vector<1x256x256xbf16> to vector<256x256xbf16>
    %20 = arith.extf %19 : vector<256x256xbf16> to vector<256x256xf32>
    %c8 = arith.constant 8 : index
    %c0_14 = arith.constant 0 : index
    %c0_15 = arith.constant 0 : index
    %21 = vector.load %arg2[%c8, %c0_14, %c0_15] : memref<9x256x256xbf16, #tpu.memory_space<vmem>>, vector<1x256x256xbf16>
    %22 = vector.shape_cast %21 : vector<1x256x256xbf16> to vector<256x256xbf16>
    %23 = arith.extf %22 : vector<256x256xbf16> to vector<256x256xf32>
    %c0_16 = arith.constant 0 : index
    %c0_17 = arith.constant 0 : index
    %c0_18 = arith.constant 0 : index
    %24 = vector.load %arg1[%c0_16, %c0_17, %c0_18] : memref<1x2x256xf32, #tpu.memory_space<vmem>>, vector<1x2x256xf32>
    %25 = vector.shape_cast %24 : vector<1x2x256xf32> to vector<2x256xf32>
    %c0_19 = arith.constant 0 : index
    %c0_20 = arith.constant 0 : index
    %26 = vector.load %arg4[%c0_19, %c0_20] : memref<8x1xf32, #tpu.memory_space<vmem>>, vector<8x1xf32>
    %27 = vector.shape_cast %26 : vector<8x1xf32> to vector<8x1xf32>
    %28 = vector.broadcast %27 : vector<8x1xf32> to vector<8x256xf32>
    %cst = arith.constant dense<0.000000e+00> : vector<2x256xf32>
    %29 = tpu.matmul %25, %2, %cst {dimension_numbers = #tpu.dot_dimension_numbers<[1], [0], [0], [1], [0, 0, 1, 1], [], []>} : vector<2x256xf32>, vector<256x256xf32>, vector<2x256xf32> -> vector<2x256xf32>
    %c0_21 = arith.constant 0 : index
    %c0_22 = arith.constant 0 : index
    %c0_23 = arith.constant 0 : index
    %30 = vector.load %arg3[%c0_21, %c0_22, %c0_23] : memref<9x8x2xf32, #tpu.memory_space<vmem>>, vector<1x8x2xf32>
    %31 = vector.shape_cast %30 : vector<1x8x2xf32> to vector<8x2xf32>
    %cst_24 = arith.constant dense<0.000000e+00> : vector<8x256xf32>
    %32 = tpu.matmul %31, %29, %cst_24 {dimension_numbers = #tpu.dot_dimension_numbers<[1], [0], [0], [1], [0, 0, 1, 1], [], []>} : vector<8x2xf32>, vector<2x256xf32>, vector<8x256xf32> -> vector<8x256xf32>
    %33 = arith.addf %28, %32 : vector<8x256xf32>
    %cst_25 = arith.constant dense<0.000000e+00> : vector<2x256xf32>
    %34 = tpu.matmul %25, %5, %cst_25 {dimension_numbers = #tpu.dot_dimension_numbers<[1], [0], [0], [1], [0, 0, 1, 1], [], []>} : vector<2x256xf32>, vector<256x256xf32>, vector<2x256xf32> -> vector<2x256xf32>
    %c1_26 = arith.constant 1 : index
    %c0_27 = arith.constant 0 : index
    %c0_28 = arith.constant 0 : index
    %35 = vector.load %arg3[%c1_26, %c0_27, %c0_28] : memref<9x8x2xf32, #tpu.memory_space<vmem>>, vector<1x8x2xf32>
    %36 = vector.shape_cast %35 : vector<1x8x2xf32> to vector<8x2xf32>
    %cst_29 = arith.constant dense<0.000000e+00> : vector<8x256xf32>
    %37 = tpu.matmul %36, %34, %cst_29 {dimension_numbers = #tpu.dot_dimension_numbers<[1], [0], [0], [1], [0, 0, 1, 1], [], []>} : vector<8x2xf32>, vector<2x256xf32>, vector<8x256xf32> -> vector<8x256xf32>
    %38 = arith.addf %33, %37 : vector<8x256xf32>
    %cst_30 = arith.constant dense<0.000000e+00> : vector<2x256xf32>
    %39 = tpu.matmul %25, %8, %cst_30 {dimension_numbers = #tpu.dot_dimension_numbers<[1], [0], [0], [1], [0, 0, 1, 1], [], []>} : vector<2x256xf32>, vector<256x256xf32>, vector<2x256xf32> -> vector<2x256xf32>
    %c2_31 = arith.constant 2 : index
    %c0_32 = arith.constant 0 : index
    %c0_33 = arith.constant 0 : index
    %40 = vector.load %arg3[%c2_31, %c0_32, %c0_33] : memref<9x8x2xf32, #tpu.memory_space<vmem>>, vector<1x8x2xf32>
    %41 = vector.shape_cast %40 : vector<1x8x2xf32> to vector<8x2xf32>
    %cst_34 = arith.constant dense<0.000000e+00> : vector<8x256xf32>
    %42 = tpu.matmul %41, %39, %cst_34 {dimension_numbers = #tpu.dot_dimension_numbers<[1], [0], [0], [1], [0, 0, 1, 1], [], []>} : vector<8x2xf32>, vector<2x256xf32>, vector<8x256xf32> -> vector<8x256xf32>
    %43 = arith.addf %38, %42 : vector<8x256xf32>
    %cst_35 = arith.constant dense<0.000000e+00> : vector<2x256xf32>
    %44 = tpu.matmul %25, %11, %cst_35 {dimension_numbers = #tpu.dot_dimension_numbers<[1], [0], [0], [1], [0, 0, 1, 1], [], []>} : vector<2x256xf32>, vector<256x256xf32>, vector<2x256xf32> -> vector<2x256xf32>
    %c3_36 = arith.constant 3 : index
    %c0_37 = arith.constant 0 : index
    %c0_38 = arith.constant 0 : index
    %45 = vector.load %arg3[%c3_36, %c0_37, %c0_38] : memref<9x8x2xf32, #tpu.memory_space<vmem>>, vector<1x8x2xf32>
    %46 = vector.shape_cast %45 : vector<1x8x2xf32> to vector<8x2xf32>
    %cst_39 = arith.constant dense<0.000000e+00> : vector<8x256xf32>
    %47 = tpu.matmul %46, %44, %cst_39 {dimension_numbers = #tpu.dot_dimension_numbers<[1], [0], [0], [1], [0, 0, 1, 1], [], []>} : vector<8x2xf32>, vector<2x256xf32>, vector<8x256xf32> -> vector<8x256xf32>
    %48 = arith.addf %43, %47 : vector<8x256xf32>
    %c4 = arith.constant 4 : index
    %c0_40 = arith.constant 0 : index
    %c0_41 = arith.constant 0 : index
    %49 = vector.load %arg3[%c4, %c0_40, %c0_41] : memref<9x8x2xf32, #tpu.memory_space<vmem>>, vector<1x8x2xf32>
    %50 = vector.shape_cast %49 : vector<1x8x2xf32> to vector<8x2xf32>
    %cst_42 = arith.constant dense<0.000000e+00> : vector<8x256xf32>
    %51 = tpu.matmul %50, %25, %cst_42 {dimension_numbers = #tpu.dot_dimension_numbers<[1], [0], [0], [1], [0, 0, 1, 1], [], []>} : vector<8x2xf32>, vector<2x256xf32>, vector<8x256xf32> -> vector<8x256xf32>
    %52 = arith.addf %48, %51 : vector<8x256xf32>
    %cst_43 = arith.constant dense<0.000000e+00> : vector<2x256xf32>
    %53 = tpu.matmul %25, %14, %cst_43 {dimension_numbers = #tpu.dot_dimension_numbers<[1], [0], [0], [1], [0, 0, 1, 1], [], []>} : vector<2x256xf32>, vector<256x256xf32>, vector<2x256xf32> -> vector<2x256xf32>
    %c5_44 = arith.constant 5 : index
    %c0_45 = arith.constant 0 : index
    %c0_46 = arith.constant 0 : index
    %54 = vector.load %arg3[%c5_44, %c0_45, %c0_46] : memref<9x8x2xf32, #tpu.memory_space<vmem>>, vector<1x8x2xf32>
    %55 = vector.shape_cast %54 : vector<1x8x2xf32> to vector<8x2xf32>
    %cst_47 = arith.constant dense<0.000000e+00> : vector<8x256xf32>
    %56 = tpu.matmul %55, %53, %cst_47 {dimension_numbers = #tpu.dot_dimension_numbers<[1], [0], [0], [1], [0, 0, 1, 1], [], []>} : vector<8x2xf32>, vector<2x256xf32>, vector<8x256xf32> -> vector<8x256xf32>
    %57 = arith.addf %52, %56 : vector<8x256xf32>
    %cst_48 = arith.constant dense<0.000000e+00> : vector<2x256xf32>
    %58 = tpu.matmul %25, %17, %cst_48 {dimension_numbers = #tpu.dot_dimension_numbers<[1], [0], [0], [1], [0, 0, 1, 1], [], []>} : vector<2x256xf32>, vector<256x256xf32>, vector<2x256xf32> -> vector<2x256xf32>
    %c6_49 = arith.constant 6 : index
    %c0_50 = arith.constant 0 : index
    %c0_51 = arith.constant 0 : index
    %59 = vector.load %arg3[%c6_49, %c0_50, %c0_51] : memref<9x8x2xf32, #tpu.memory_space<vmem>>, vector<1x8x2xf32>
    %60 = vector.shape_cast %59 : vector<1x8x2xf32> to vector<8x2xf32>
    %cst_52 = arith.constant dense<0.000000e+00> : vector<8x256xf32>
    %61 = tpu.matmul %60, %58, %cst_52 {dimension_numbers = #tpu.dot_dimension_numbers<[1], [0], [0], [1], [0, 0, 1, 1], [], []>} : vector<8x2xf32>, vector<2x256xf32>, vector<8x256xf32> -> vector<8x256xf32>
    %62 = arith.addf %57, %61 : vector<8x256xf32>
    %cst_53 = arith.constant dense<0.000000e+00> : vector<2x256xf32>
    %63 = tpu.matmul %25, %20, %cst_53 {dimension_numbers = #tpu.dot_dimension_numbers<[1], [0], [0], [1], [0, 0, 1, 1], [], []>} : vector<2x256xf32>, vector<256x256xf32>, vector<2x256xf32> -> vector<2x256xf32>
    %c7_54 = arith.constant 7 : index
    %c0_55 = arith.constant 0 : index
    %c0_56 = arith.constant 0 : index
    %64 = vector.load %arg3[%c7_54, %c0_55, %c0_56] : memref<9x8x2xf32, #tpu.memory_space<vmem>>, vector<1x8x2xf32>
    %65 = vector.shape_cast %64 : vector<1x8x2xf32> to vector<8x2xf32>
    %cst_57 = arith.constant dense<0.000000e+00> : vector<8x256xf32>
    %66 = tpu.matmul %65, %63, %cst_57 {dimension_numbers = #tpu.dot_dimension_numbers<[1], [0], [0], [1], [0, 0, 1, 1], [], []>} : vector<8x2xf32>, vector<2x256xf32>, vector<8x256xf32> -> vector<8x256xf32>
    %67 = arith.addf %62, %66 : vector<8x256xf32>
    %cst_58 = arith.constant dense<0.000000e+00> : vector<2x256xf32>
    %68 = tpu.matmul %25, %23, %cst_58 {dimension_numbers = #tpu.dot_dimension_numbers<[1], [0], [0], [1], [0, 0, 1, 1], [], []>} : vector<2x256xf32>, vector<256x256xf32>, vector<2x256xf32> -> vector<2x256xf32>
    %c8_59 = arith.constant 8 : index
    %c0_60 = arith.constant 0 : index
    %c0_61 = arith.constant 0 : index
    %69 = vector.load %arg3[%c8_59, %c0_60, %c0_61] : memref<9x8x2xf32, #tpu.memory_space<vmem>>, vector<1x8x2xf32>
    %70 = vector.shape_cast %69 : vector<1x8x2xf32> to vector<8x2xf32>
    %cst_62 = arith.constant dense<0.000000e+00> : vector<8x256xf32>
    %71 = tpu.matmul %70, %68, %cst_62 {dimension_numbers = #tpu.dot_dimension_numbers<[1], [0], [0], [1], [0, 0, 1, 1], [], []>} : vector<8x2xf32>, vector<2x256xf32>, vector<8x256xf32> -> vector<8x256xf32>
    %72 = arith.addf %67, %71 : vector<8x256xf32>
    %cst_63 = arith.constant 0.000000e+00 : f32
    %73 = vector.broadcast %cst_63 : f32 to vector<8x256xf32>
    %74 = arith.maximumf %72, %73 : vector<8x256xf32>
    %c0_64 = arith.constant 0 : index
    %c0_65 = arith.constant 0 : index
    %75 = vector.load %arg6[%c0_64, %c0_65] : memref<8x1xf32, #tpu.memory_space<vmem>>, vector<8x1xf32>
    %76 = vector.shape_cast %75 : vector<8x1xf32> to vector<8x1xf32>
    %77 = vector.broadcast %76 : vector<8x1xf32> to vector<8x256xf32>
    %cst_66 = arith.constant dense<0.000000e+00> : vector<8x256xf32>
    %78 = tpu.matmul %74, %2, %cst_66 {dimension_numbers = #tpu.dot_dimension_numbers<[1], [0], [0], [1], [0, 0, 1, 1], [], []>} : vector<8x256xf32>, vector<256x256xf32>, vector<8x256xf32> -> vector<8x256xf32>
    %c0_67 = arith.constant 0 : index
    %c0_68 = arith.constant 0 : index
    %c0_69 = arith.constant 0 : index
    %79 = vector.load %arg5[%c0_67, %c0_68, %c0_69] : memref<9x8x8xf32, #tpu.memory_space<vmem>>, vector<1x8x8xf32>
    %80 = vector.shape_cast %79 : vector<1x8x8xf32> to vector<8x8xf32>
    %cst_70 = arith.constant dense<0.000000e+00> : vector<8x256xf32>
    %81 = tpu.matmul %80, %78, %cst_70 {dimension_numbers = #tpu.dot_dimension_numbers<[1], [0], [0], [1], [0, 0, 1, 1], [], []>} : vector<8x8xf32>, vector<8x256xf32>, vector<8x256xf32> -> vector<8x256xf32>
    %82 = arith.addf %77, %81 : vector<8x256xf32>
    %cst_71 = arith.constant dense<0.000000e+00> : vector<8x256xf32>
    %83 = tpu.matmul %74, %5, %cst_71 {dimension_numbers = #tpu.dot_dimension_numbers<[1], [0], [0], [1], [0, 0, 1, 1], [], []>} : vector<8x256xf32>, vector<256x256xf32>, vector<8x256xf32> -> vector<8x256xf32>
    %c1_72 = arith.constant 1 : index
    %c0_73 = arith.constant 0 : index
    %c0_74 = arith.constant 0 : index
    %84 = vector.load %arg5[%c1_72, %c0_73, %c0_74] : memref<9x8x8xf32, #tpu.memory_space<vmem>>, vector<1x8x8xf32>
    %85 = vector.shape_cast %84 : vector<1x8x8xf32> to vector<8x8xf32>
    %cst_75 = arith.constant dense<0.000000e+00> : vector<8x256xf32>
    %86 = tpu.matmul %85, %83, %cst_75 {dimension_numbers = #tpu.dot_dimension_numbers<[1], [0], [0], [1], [0, 0, 1, 1], [], []>} : vector<8x8xf32>, vector<8x256xf32>, vector<8x256xf32> -> vector<8x256xf32>
    %87 = arith.addf %82, %86 : vector<8x256xf32>
    %cst_76 = arith.constant dense<0.000000e+00> : vector<8x256xf32>
    %88 = tpu.matmul %74, %8, %cst_76 {dimension_numbers = #tpu.dot_dimension_numbers<[1], [0], [0], [1], [0, 0, 1, 1], [], []>} : vector<8x256xf32>, vector<256x256xf32>, vector<8x256xf32> -> vector<8x256xf32>
    %c2_77 = arith.constant 2 : index
    %c0_78 = arith.constant 0 : index
    %c0_79 = arith.constant 0 : index
    %89 = vector.load %arg5[%c2_77, %c0_78, %c0_79] : memref<9x8x8xf32, #tpu.memory_space<vmem>>, vector<1x8x8xf32>
    %90 = vector.shape_cast %89 : vector<1x8x8xf32> to vector<8x8xf32>
    %cst_80 = arith.constant dense<0.000000e+00> : vector<8x256xf32>
    %91 = tpu.matmul %90, %88, %cst_80 {dimension_numbers = #tpu.dot_dimension_numbers<[1], [0], [0], [1], [0, 0, 1, 1], [], []>} : vector<8x8xf32>, vector<8x256xf32>, vector<8x256xf32> -> vector<8x256xf32>
    %92 = arith.addf %87, %91 : vector<8x256xf32>
    %cst_81 = arith.constant dense<0.000000e+00> : vector<8x256xf32>
    %93 = tpu.matmul %74, %11, %cst_81 {dimension_numbers = #tpu.dot_dimension_numbers<[1], [0], [0], [1], [0, 0, 1, 1], [], []>} : vector<8x256xf32>, vector<256x256xf32>, vector<8x256xf32> -> vector<8x256xf32>
    %c3_82 = arith.constant 3 : index
    %c0_83 = arith.constant 0 : index
    %c0_84 = arith.constant 0 : index
    %94 = vector.load %arg5[%c3_82, %c0_83, %c0_84] : memref<9x8x8xf32, #tpu.memory_space<vmem>>, vector<1x8x8xf32>
    %95 = vector.shape_cast %94 : vector<1x8x8xf32> to vector<8x8xf32>
    %cst_85 = arith.constant dense<0.000000e+00> : vector<8x256xf32>
    %96 = tpu.matmul %95, %93, %cst_85 {dimension_numbers = #tpu.dot_dimension_numbers<[1], [0], [0], [1], [0, 0, 1, 1], [], []>} : vector<8x8xf32>, vector<8x256xf32>, vector<8x256xf32> -> vector<8x256xf32>
    %97 = arith.addf %92, %96 : vector<8x256xf32>
    %c4_86 = arith.constant 4 : index
    %c0_87 = arith.constant 0 : index
    %c0_88 = arith.constant 0 : index
    %98 = vector.load %arg5[%c4_86, %c0_87, %c0_88] : memref<9x8x8xf32, #tpu.memory_space<vmem>>, vector<1x8x8xf32>
    %99 = vector.shape_cast %98 : vector<1x8x8xf32> to vector<8x8xf32>
    %cst_89 = arith.constant dense<0.000000e+00> : vector<8x256xf32>
    %100 = tpu.matmul %99, %74, %cst_89 {dimension_numbers = #tpu.dot_dimension_numbers<[1], [0], [0], [1], [0, 0, 1, 1], [], []>} : vector<8x8xf32>, vector<8x256xf32>, vector<8x256xf32> -> vector<8x256xf32>
    %101 = arith.addf %97, %100 : vector<8x256xf32>
    %cst_90 = arith.constant dense<0.000000e+00> : vector<8x256xf32>
    %102 = tpu.matmul %74, %14, %cst_90 {dimension_numbers = #tpu.dot_dimension_numbers<[1], [0], [0], [1], [0, 0, 1, 1], [], []>} : vector<8x256xf32>, vector<256x256xf32>, vector<8x256xf32> -> vector<8x256xf32>
    %c5_91 = arith.constant 5 : index
    %c0_92 = arith.constant 0 : index
    %c0_93 = arith.constant 0 : index
    %103 = vector.load %arg5[%c5_91, %c0_92, %c0_93] : memref<9x8x8xf32, #tpu.memory_space<vmem>>, vector<1x8x8xf32>
    %104 = vector.shape_cast %103 : vector<1x8x8xf32> to vector<8x8xf32>
    %cst_94 = arith.constant dense<0.000000e+00> : vector<8x256xf32>
    %105 = tpu.matmul %104, %102, %cst_94 {dimension_numbers = #tpu.dot_dimension_numbers<[1], [0], [0], [1], [0, 0, 1, 1], [], []>} : vector<8x8xf32>, vector<8x256xf32>, vector<8x256xf32> -> vector<8x256xf32>
    %106 = arith.addf %101, %105 : vector<8x256xf32>
    %cst_95 = arith.constant dense<0.000000e+00> : vector<8x256xf32>
    %107 = tpu.matmul %74, %17, %cst_95 {dimension_numbers = #tpu.dot_dimension_numbers<[1], [0], [0], [1], [0, 0, 1, 1], [], []>} : vector<8x256xf32>, vector<256x256xf32>, vector<8x256xf32> -> vector<8x256xf32>
    %c6_96 = arith.constant 6 : index
    %c0_97 = arith.constant 0 : index
    %c0_98 = arith.constant 0 : index
    %108 = vector.load %arg5[%c6_96, %c0_97, %c0_98] : memref<9x8x8xf32, #tpu.memory_space<vmem>>, vector<1x8x8xf32>
    %109 = vector.shape_cast %108 : vector<1x8x8xf32> to vector<8x8xf32>
    %cst_99 = arith.constant dense<0.000000e+00> : vector<8x256xf32>
    %110 = tpu.matmul %109, %107, %cst_99 {dimension_numbers = #tpu.dot_dimension_numbers<[1], [0], [0], [1], [0, 0, 1, 1], [], []>} : vector<8x8xf32>, vector<8x256xf32>, vector<8x256xf32> -> vector<8x256xf32>
    %111 = arith.addf %106, %110 : vector<8x256xf32>
    %cst_100 = arith.constant dense<0.000000e+00> : vector<8x256xf32>
    %112 = tpu.matmul %74, %20, %cst_100 {dimension_numbers = #tpu.dot_dimension_numbers<[1], [0], [0], [1], [0, 0, 1, 1], [], []>} : vector<8x256xf32>, vector<256x256xf32>, vector<8x256xf32> -> vector<8x256xf32>
    %c7_101 = arith.constant 7 : index
    %c0_102 = arith.constant 0 : index
    %c0_103 = arith.constant 0 : index
    %113 = vector.load %arg5[%c7_101, %c0_102, %c0_103] : memref<9x8x8xf32, #tpu.memory_space<vmem>>, vector<1x8x8xf32>
    %114 = vector.shape_cast %113 : vector<1x8x8xf32> to vector<8x8xf32>
    %cst_104 = arith.constant dense<0.000000e+00> : vector<8x256xf32>
    %115 = tpu.matmul %114, %112, %cst_104 {dimension_numbers = #tpu.dot_dimension_numbers<[1], [0], [0], [1], [0, 0, 1, 1], [], []>} : vector<8x8xf32>, vector<8x256xf32>, vector<8x256xf32> -> vector<8x256xf32>
    %116 = arith.addf %111, %115 : vector<8x256xf32>
    %cst_105 = arith.constant dense<0.000000e+00> : vector<8x256xf32>
    %117 = tpu.matmul %74, %23, %cst_105 {dimension_numbers = #tpu.dot_dimension_numbers<[1], [0], [0], [1], [0, 0, 1, 1], [], []>} : vector<8x256xf32>, vector<256x256xf32>, vector<8x256xf32> -> vector<8x256xf32>
    %c8_106 = arith.constant 8 : index
    %c0_107 = arith.constant 0 : index
    %c0_108 = arith.constant 0 : index
    %118 = vector.load %arg5[%c8_106, %c0_107, %c0_108] : memref<9x8x8xf32, #tpu.memory_space<vmem>>, vector<1x8x8xf32>
    %119 = vector.shape_cast %118 : vector<1x8x8xf32> to vector<8x8xf32>
    %cst_109 = arith.constant dense<0.000000e+00> : vector<8x256xf32>
    %120 = tpu.matmul %119, %117, %cst_109 {dimension_numbers = #tpu.dot_dimension_numbers<[1], [0], [0], [1], [0, 0, 1, 1], [], []>} : vector<8x8xf32>, vector<8x256xf32>, vector<8x256xf32> -> vector<8x256xf32>
    %121 = arith.addf %116, %120 : vector<8x256xf32>
    %cst_110 = arith.constant 0.000000e+00 : f32
    %122 = vector.broadcast %cst_110 : f32 to vector<8x256xf32>
    %123 = arith.maximumf %121, %122 : vector<8x256xf32>
    %c0_111 = arith.constant 0 : index
    %c0_112 = arith.constant 0 : index
    %124 = vector.load %arg8[%c0_111, %c0_112] : memref<1x1xf32, #tpu.memory_space<vmem>>, vector<1x1xf32>
    %125 = vector.shape_cast %124 : vector<1x1xf32> to vector<1x1xf32>
    %126 = vector.broadcast %125 : vector<1x1xf32> to vector<1x256xf32>
    %cst_113 = arith.constant dense<0.000000e+00> : vector<8x256xf32>
    %127 = tpu.matmul %123, %2, %cst_113 {dimension_numbers = #tpu.dot_dimension_numbers<[1], [0], [0], [1], [0, 0, 1, 1], [], []>} : vector<8x256xf32>, vector<256x256xf32>, vector<8x256xf32> -> vector<8x256xf32>
    %c0_114 = arith.constant 0 : index
    %c0_115 = arith.constant 0 : index
    %c0_116 = arith.constant 0 : index
    %128 = vector.load %arg7[%c0_114, %c0_115, %c0_116] : memref<9x1x8xf32, #tpu.memory_space<vmem>>, vector<1x1x8xf32>
    %129 = vector.shape_cast %128 : vector<1x1x8xf32> to vector<1x8xf32>
    %cst_117 = arith.constant dense<0.000000e+00> : vector<1x256xf32>
    %130 = tpu.matmul %129, %127, %cst_117 {dimension_numbers = #tpu.dot_dimension_numbers<[1], [0], [0], [1], [0, 0, 1, 1], [], []>} : vector<1x8xf32>, vector<8x256xf32>, vector<1x256xf32> -> vector<1x256xf32>
    %131 = arith.addf %126, %130 : vector<1x256xf32>
    %cst_118 = arith.constant dense<0.000000e+00> : vector<8x256xf32>
    %132 = tpu.matmul %123, %5, %cst_118 {dimension_numbers = #tpu.dot_dimension_numbers<[1], [0], [0], [1], [0, 0, 1, 1], [], []>} : vector<8x256xf32>, vector<256x256xf32>, vector<8x256xf32> -> vector<8x256xf32>
    %c1_119 = arith.constant 1 : index
    %c0_120 = arith.constant 0 : index
    %c0_121 = arith.constant 0 : index
    %133 = vector.load %arg7[%c1_119, %c0_120, %c0_121] : memref<9x1x8xf32, #tpu.memory_space<vmem>>, vector<1x1x8xf32>
    %134 = vector.shape_cast %133 : vector<1x1x8xf32> to vector<1x8xf32>
    %cst_122 = arith.constant dense<0.000000e+00> : vector<1x256xf32>
    %135 = tpu.matmul %134, %132, %cst_122 {dimension_numbers = #tpu.dot_dimension_numbers<[1], [0], [0], [1], [0, 0, 1, 1], [], []>} : vector<1x8xf32>, vector<8x256xf32>, vector<1x256xf32> -> vector<1x256xf32>
    %136 = arith.addf %131, %135 : vector<1x256xf32>
    %cst_123 = arith.constant dense<0.000000e+00> : vector<8x256xf32>
    %137 = tpu.matmul %123, %8, %cst_123 {dimension_numbers = #tpu.dot_dimension_numbers<[1], [0], [0], [1], [0, 0, 1, 1], [], []>} : vector<8x256xf32>, vector<256x256xf32>, vector<8x256xf32> -> vector<8x256xf32>
    %c2_124 = arith.constant 2 : index
    %c0_125 = arith.constant 0 : index
    %c0_126 = arith.constant 0 : index
    %138 = vector.load %arg7[%c2_124, %c0_125, %c0_126] : memref<9x1x8xf32, #tpu.memory_space<vmem>>, vector<1x1x8xf32>
    %139 = vector.shape_cast %138 : vector<1x1x8xf32> to vector<1x8xf32>
    %cst_127 = arith.constant dense<0.000000e+00> : vector<1x256xf32>
    %140 = tpu.matmul %139, %137, %cst_127 {dimension_numbers = #tpu.dot_dimension_numbers<[1], [0], [0], [1], [0, 0, 1, 1], [], []>} : vector<1x8xf32>, vector<8x256xf32>, vector<1x256xf32> -> vector<1x256xf32>
    %141 = arith.addf %136, %140 : vector<1x256xf32>
    %cst_128 = arith.constant dense<0.000000e+00> : vector<8x256xf32>
    %142 = tpu.matmul %123, %11, %cst_128 {dimension_numbers = #tpu.dot_dimension_numbers<[1], [0], [0], [1], [0, 0, 1, 1], [], []>} : vector<8x256xf32>, vector<256x256xf32>, vector<8x256xf32> -> vector<8x256xf32>
    %c3_129 = arith.constant 3 : index
    %c0_130 = arith.constant 0 : index
    %c0_131 = arith.constant 0 : index
    %143 = vector.load %arg7[%c3_129, %c0_130, %c0_131] : memref<9x1x8xf32, #tpu.memory_space<vmem>>, vector<1x1x8xf32>
    %144 = vector.shape_cast %143 : vector<1x1x8xf32> to vector<1x8xf32>
    %cst_132 = arith.constant dense<0.000000e+00> : vector<1x256xf32>
    %145 = tpu.matmul %144, %142, %cst_132 {dimension_numbers = #tpu.dot_dimension_numbers<[1], [0], [0], [1], [0, 0, 1, 1], [], []>} : vector<1x8xf32>, vector<8x256xf32>, vector<1x256xf32> -> vector<1x256xf32>
    %146 = arith.addf %141, %145 : vector<1x256xf32>
    %c4_133 = arith.constant 4 : index
    %c0_134 = arith.constant 0 : index
    %c0_135 = arith.constant 0 : index
    %147 = vector.load %arg7[%c4_133, %c0_134, %c0_135] : memref<9x1x8xf32, #tpu.memory_space<vmem>>, vector<1x1x8xf32>
    %148 = vector.shape_cast %147 : vector<1x1x8xf32> to vector<1x8xf32>
    %cst_136 = arith.constant dense<0.000000e+00> : vector<1x256xf32>
    %149 = tpu.matmul %148, %123, %cst_136 {dimension_numbers = #tpu.dot_dimension_numbers<[1], [0], [0], [1], [0, 0, 1, 1], [], []>} : vector<1x8xf32>, vector<8x256xf32>, vector<1x256xf32> -> vector<1x256xf32>
    %150 = arith.addf %146, %149 : vector<1x256xf32>
    %cst_137 = arith.constant dense<0.000000e+00> : vector<8x256xf32>
    %151 = tpu.matmul %123, %14, %cst_137 {dimension_numbers = #tpu.dot_dimension_numbers<[1], [0], [0], [1], [0, 0, 1, 1], [], []>} : vector<8x256xf32>, vector<256x256xf32>, vector<8x256xf32> -> vector<8x256xf32>
    %c5_138 = arith.constant 5 : index
    %c0_139 = arith.constant 0 : index
    %c0_140 = arith.constant 0 : index
    %152 = vector.load %arg7[%c5_138, %c0_139, %c0_140] : memref<9x1x8xf32, #tpu.memory_space<vmem>>, vector<1x1x8xf32>
    %153 = vector.shape_cast %152 : vector<1x1x8xf32> to vector<1x8xf32>
    %cst_141 = arith.constant dense<0.000000e+00> : vector<1x256xf32>
    %154 = tpu.matmul %153, %151, %cst_141 {dimension_numbers = #tpu.dot_dimension_numbers<[1], [0], [0], [1], [0, 0, 1, 1], [], []>} : vector<1x8xf32>, vector<8x256xf32>, vector<1x256xf32> -> vector<1x256xf32>
    %155 = arith.addf %150, %154 : vector<1x256xf32>
    %cst_142 = arith.constant dense<0.000000e+00> : vector<8x256xf32>
    %156 = tpu.matmul %123, %17, %cst_142 {dimension_numbers = #tpu.dot_dimension_numbers<[1], [0], [0], [1], [0, 0, 1, 1], [], []>} : vector<8x256xf32>, vector<256x256xf32>, vector<8x256xf32> -> vector<8x256xf32>
    %c6_143 = arith.constant 6 : index
    %c0_144 = arith.constant 0 : index
    %c0_145 = arith.constant 0 : index
    %157 = vector.load %arg7[%c6_143, %c0_144, %c0_145] : memref<9x1x8xf32, #tpu.memory_space<vmem>>, vector<1x1x8xf32>
    %158 = vector.shape_cast %157 : vector<1x1x8xf32> to vector<1x8xf32>
    %cst_146 = arith.constant dense<0.000000e+00> : vector<1x256xf32>
    %159 = tpu.matmul %158, %156, %cst_146 {dimension_numbers = #tpu.dot_dimension_numbers<[1], [0], [0], [1], [0, 0, 1, 1], [], []>} : vector<1x8xf32>, vector<8x256xf32>, vector<1x256xf32> -> vector<1x256xf32>
    %160 = arith.addf %155, %159 : vector<1x256xf32>
    %cst_147 = arith.constant dense<0.000000e+00> : vector<8x256xf32>
    %161 = tpu.matmul %123, %20, %cst_147 {dimension_numbers = #tpu.dot_dimension_numbers<[1], [0], [0], [1], [0, 0, 1, 1], [], []>} : vector<8x256xf32>, vector<256x256xf32>, vector<8x256xf32> -> vector<8x256xf32>
    %c7_148 = arith.constant 7 : index
    %c0_149 = arith.constant 0 : index
    %c0_150 = arith.constant 0 : index
    %162 = vector.load %arg7[%c7_148, %c0_149, %c0_150] : memref<9x1x8xf32, #tpu.memory_space<vmem>>, vector<1x1x8xf32>
    %163 = vector.shape_cast %162 : vector<1x1x8xf32> to vector<1x8xf32>
    %cst_151 = arith.constant dense<0.000000e+00> : vector<1x256xf32>
    %164 = tpu.matmul %163, %161, %cst_151 {dimension_numbers = #tpu.dot_dimension_numbers<[1], [0], [0], [1], [0, 0, 1, 1], [], []>} : vector<1x8xf32>, vector<8x256xf32>, vector<1x256xf32> -> vector<1x256xf32>
    %165 = arith.addf %160, %164 : vector<1x256xf32>
    %cst_152 = arith.constant dense<0.000000e+00> : vector<8x256xf32>
    %166 = tpu.matmul %123, %23, %cst_152 {dimension_numbers = #tpu.dot_dimension_numbers<[1], [0], [0], [1], [0, 0, 1, 1], [], []>} : vector<8x256xf32>, vector<256x256xf32>, vector<8x256xf32> -> vector<8x256xf32>
    %c8_153 = arith.constant 8 : index
    %c0_154 = arith.constant 0 : index
    %c0_155 = arith.constant 0 : index
    %167 = vector.load %arg7[%c8_153, %c0_154, %c0_155] : memref<9x1x8xf32, #tpu.memory_space<vmem>>, vector<1x1x8xf32>
    %168 = vector.shape_cast %167 : vector<1x1x8xf32> to vector<1x8xf32>
    %cst_156 = arith.constant dense<0.000000e+00> : vector<1x256xf32>
    %169 = tpu.matmul %168, %166, %cst_156 {dimension_numbers = #tpu.dot_dimension_numbers<[1], [0], [0], [1], [0, 0, 1, 1], [], []>} : vector<1x8xf32>, vector<8x256xf32>, vector<1x256xf32> -> vector<1x256xf32>
    %170 = arith.addf %165, %169 : vector<1x256xf32>
    %c0_157 = arith.constant 0 : index
    %c0_158 = arith.constant 0 : index
    %c0_159 = arith.constant 0 : index
    %171 = vector.load %arg9[%c0_157, %c0_158, %c0_159] : memref<1x1x256xf32, #tpu.memory_space<vmem>>, vector<1x1x256xf32>
    %172 = vector.shape_cast %171 : vector<1x1x256xf32> to vector<1x256xf32>
    %173 = vector.shape_cast %170 : vector<1x256xf32> to vector<1x1x256xf32>
    tpu.vector_store %arg9[%c0_157, %c0_158, %c0_159], %173 {strides = array<i32>} : memref<1x1x256xf32, #tpu.memory_space<vmem>>, vector<1x1x256xf32>,
    return
  }
  func.func @transform_0(%arg0: i32) -> (i32, i32, i32) {
    %c0_i32 = arith.constant 0 : i32
    %c0_i32_0 = arith.constant 0 : i32
    %c0_i32_1 = arith.constant 0 : i32
    return %arg0, %c0_i32, %c0_i32_0 : i32, i32, i32
  }
  func.func @transform_1(%arg0: i32) -> (i32, i32, i32) {
    %c0_i32 = arith.constant 0 : i32
    %c0_i32_0 = arith.constant 0 : i32
    %c0_i32_1 = arith.constant 0 : i32
    %c0_i32_2 = arith.constant 0 : i32
    return %c0_i32, %c0_i32_0, %c0_i32_1 : i32, i32, i32
  }
  func.func @transform_2(%arg0: i32) -> (i32, i32, i32) {
    %c0_i32 = arith.constant 0 : i32
    %c0_i32_0 = arith.constant 0 : i32
    %c0_i32_1 = arith.constant 0 : i32
    %c0_i32_2 = arith.constant 0 : i32
    return %c0_i32, %c0_i32_0, %c0_i32_1 : i32, i32, i32
  }
  func.func @transform_3(%arg0: i32) -> (i32, i32) {
    %c0_i32 = arith.constant 0 : i32
    %c0_i32_0 = arith.constant 0 : i32
    %c0_i32_1 = arith.constant 0 : i32
    return %c0_i32, %c0_i32_0 : i32, i32
  }
  func.func @transform_4(%arg0: i32) -> (i32, i32, i32) {
    %c0_i32 = arith.constant 0 : i32
    %c0_i32_0 = arith.constant 0 : i32
    %c0_i32_1 = arith.constant 0 : i32
    %c0_i32_2 = arith.constant 0 : i32
    return %c0_i32, %c0_i32_0, %c0_i32_1 : i32, i32, i32
  }
  func.func @transform_5(%arg0: i32) -> (i32, i32) {
    %c0_i32 = arith.constant 0 : i32
    %c0_i32_0 = arith.constant 0 : i32
    %c0_i32_1 = arith.constant 0 : i32
    return %c0_i32, %c0_i32_0 : i32, i32
  }
  func.func @transform_6(%arg0: i32) -> (i32, i32, i32) {
    %c0_i32 = arith.constant 0 : i32
    %c0_i32_0 = arith.constant 0 : i32
    %c0_i32_1 = arith.constant 0 : i32
    %c0_i32_2 = arith.constant 0 : i32
    return %c0_i32, %c0_i32_0, %c0_i32_1 : i32, i32, i32
  }
  func.func @transform_7(%arg0: i32) -> (i32, i32) {
    %c0_i32 = arith.constant 0 : i32
    %c0_i32_0 = arith.constant 0 : i32
    %c0_i32_1 = arith.constant 0 : i32
    return %c0_i32, %c0_i32_0 : i32, i32
  }
  func.func @transform_8(%arg0: i32) -> (i32, i32, i32) {
    %c0_i32 = arith.constant 0 : i32
    %c0_i32_0 = arith.constant 0 : i32
    %c0_i32_1 = arith.constant 0 : i32
    return %arg0, %c0_i32, %c0_i32_0 : i32, i32, i32
  }
}

</mosaic_0001>

<llo_original>
// kernel: tddft_cnn_forward.1
$region0: #{tddft_cnn_forward.1}
  #allocation0 [shape = 'u32[]', space=smem, size = 0x4, offset = 0x4, fixed_abs, tag = 'smem constant byte address 0x4 - core index']
  #allocation1 [shape = 'u32[144,128]{1,0:T(1,128)}', space=vmem, size = 0x12000, scoped, tag = 'internal scratch']
  #allocation2 [shape = 'f32[1,1]{1,0:T(1,128)S(1)}', space=vmem, size = 0x200, scoped, tag = 'scoped memory for tddft_cnn_forward.1']
  %s0 = inlined_call_operand.vmem [shape: f32[2,2,256], index: 0, kind: input, shape index: {}]
  %s1 = inlined_call_operand.hbm [shape: bf16[9,256,256], index: 1, kind: input, shape index: {}]
  %s2 = inlined_call_operand.vmem [shape: f32[9,8,2], index: 2, kind: input, shape index: {}]
  %s3 = inlined_call_operand.vmem [shape: f32[8,1], index: 3, kind: input, shape index: {}]
  %s4 = inlined_call_operand.hbm [shape: f32[9,8,8], index: 4, kind: input, shape index: {}]
  %s5 = inlined_call_operand.vmem [shape: f32[8,1], index: 5, kind: input, shape index: {}]
  %s6 = inlined_call_operand.hbm [shape: f32[9,1,8], index: 6, kind: input, shape index: {}]
  %s7 = inlined_call_operand.<no memory space> [shape: f32[1,1], index: 7, kind: input, shape index: {}]
  %s8 = inlined_call_operand.vmem [shape: f32[2,1,256], index: 8, kind: output, shape index: {}]
  %s9 = sld [smem:[#allocation0]]
  $region77: #{tddft_cnn_forward.1} parent=0
    _
  %s11 = ssub.s32 1, %s9
  %s12 = scalar_select 0, %s11, %s9
  %v13 = vstv %s7
  %14 = vst [vmem:[#allocation2] sm:$0x1] %v13
  $region1: #{tddft_cnn_forward.1} parent=0
    #allocation3 [shape = 'u8[1179648]{0}', space=vmem, size = 0x120000, scoped, tag = 'input window, operand 1, single buffered']
    #allocation4 [shape = 's32[2]{0}', space=sflag, size = 0x8, scoped, tag = 'scoped memory for tddft_cnn_forward.1']
    #allocation5 [shape = 'u8[36864]{0}', space=vmem, size = 0x9000, scoped, tag = 'input window, operand 4, single buffered']
    #allocation6 [shape = 's32[1]{0}', space=sflag, size = 0x4, scoped, tag = 'scoped memory for tddft_cnn_forward.1']
    #allocation7 [shape = 'u8[4608]{0}', space=vmem, size = 0x1400, scoped, tag = 'input window, operand 6, single buffered']
    %15 = vsyncpa [#allocation4], 0
    %16 = vsyncpa [#allocation6], 0
    loop: start=0, step=1, limit=4
    $region2: #{tddft_cnn_forward.1} parent=1 // loop_pre_header
      _
    $region3: #{tddft_cnn_forward.1} parent=1 // loop_header
      %s18 = sphi 0, %s22
      %p19 = scmp.ge.s32.totalorder %s18, 4
      %s28 = sphi 0, %s30
      %s31 = sphi 0, %s28
      %s32 = sphi 0, %s31
      %s48 = sphi 0, %s32
      %s52 = sphi 0, %s52
      %s54 = sphi 0, %s52
      %s55 = sphi 0, %s54
      %s69 = sphi 0, %s55
      %s73 = sphi 0, %s73
      %s75 = sphi 0, %s73
      %s76 = sphi 0, %s75
      %s90 = sphi 0, %s76
      %s94 = sphi 0, %s94
      %s96 = sphi 0, %s94
      %s97 = sphi 0, %s96
      %s111 = sphi 0, %s97
      %s115 = sphi 0, %s115
      %s117 = sphi 0, %s115
      %s118 = sphi 0, %s117
      %s132 = sphi 0, %s118
      %s136 = sphi 0, %s136
      %s138 = sphi 0, %s136
      %s139 = sphi 0, %s138
      %s153 = sphi 0, %s139
      %s157 = sphi 0, %s157
      %s159 = sphi 0, %s157
      %s160 = sphi 0, %s159
      %s174 = sphi 0, %s160
      %s178 = sphi 0, %s178
      %s180 = sphi 0, %s178
      %s181 = sphi 0, %s180
      %s195 = sphi 0, %s181
      %s201 = sphi 0, %s203
      %s204 = sphi 0, %s201
      %s205 = sphi 0, %s204
      %s221 = sphi 0, %s205
    $region4: #{tddft_cnn_forward.1} parent=1 // loop_header_branch
      %21 = sbr.rel (%p19) target = $region8
    $region5: #{tddft_cnn_forward.1} parent=1 // loop_body
      %s23 = ssub.s32 %s18, 1
      %s24 = ssub.s32 %s18, 2
      %s25 = sadd.s32 %s18, 1
      %s26 = ssub.s32 %s18, %s25
      %p27 = scmp.eq.s32.totalorder %s26, 0
      %s29 = sadd.s32 %s28, 1
      %s30 = scalar_select %p27, %s28, %s29
      %p33 = pneg %p27
      %p34 = scmp.eq.s32.totalorder %s18, 1
      %p35 = por %p33, %p34
      %p36 = scmp.ne.s32.totalorder %s28, %s31
      %p37 = scmp.eq.s32.totalorder %s18, 0
      %p38 = por %p36, %p37
      %p39 = scmp.ne.s32.totalorder %s28, %s31
      %p40 = scmp.eq.s32.totalorder %s23, 1
      %p41 = por %p39, %p40
      %p42 = scmp.ne.s32.totalorder %s31, %s32
      %p43 = scmp.eq.s32.totalorder %s23, 0
      %p44 = por %p42, %p43
      %p45 = scmp.ne.s32.totalorder %s31, %s32
      %p46 = scmp.eq.s32.totalorder %s24, 1
      %p47 = por %p45, %p46
      %p49 = scmp.ne.s32.totalorder %s32, %s48
      %p50 = scmp.eq.s32.totalorder %s24, 0
      %p51 = por %p49, %p50
      %s53 = sadd.s32 %s52, 1
      %p56 = scmp.eq.s32.totalorder %s18, 1
      %p57 = scmp.ne.s32.totalorder %s52, %s54
      %p58 = scmp.eq.s32.totalorder %s18, 0
      %p59 = por %p57, %p58
      %p60 = scmp.ne.s32.totalorder %s52, %s54
      %p61 = scmp.eq.s32.totalorder %s23, 1
      %p62 = por %p60, %p61
      %p63 = scmp.ne.s32.totalorder %s54, %s55
      %p64 = scmp.eq.s32.totalorder %s23, 0
      %p65 = por %p63, %p64
      %p66 = scmp.ne.s32.totalorder %s54, %s55
      %p67 = scmp.eq.s32.totalorder %s24, 1
      %p68 = por %p66, %p67
      %p70 = scmp.ne.s32.totalorder %s55, %s69
      %p71 = scmp.eq.s32.totalorder %s24, 0
      %p72 = por %p70, %p71
      %s74 = sadd.s32 %s73, 1
      %p77 = scmp.eq.s32.totalorder %s18, 1
      %p78 = scmp.ne.s32.totalorder %s73, %s75
      %p79 = scmp.eq.s32.totalorder %s18, 0
      %p80 = por %p78, %p79
      %p81 = scmp.ne.s32.totalorder %s73, %s75
      %p82 = scmp.eq.s32.totalorder %s23, 1
      %p83 = por %p81, %p82
      %p84 = scmp.ne.s32.totalorder %s75, %s76
      %p85 = scmp.eq.s32.totalorder %s23, 0
      %p86 = por %p84, %p85
      %p87 = scmp.ne.s32.totalorder %s75, %s76
      %p88 = scmp.eq.s32.totalorder %s24, 1
      %p89 = por %p87, %p88
      %p91 = scmp.ne.s32.totalorder %s76, %s90
      %p92 = scmp.eq.s32.totalorder %s24, 0
      %p93 = por %p91, %p92
      %s95 = sadd.s32 %s94, 1
      %p98 = scmp.eq.s32.totalorder %s18, 1
      %p99 = scmp.ne.s32.totalorder %s94, %s96
      %p100 = scmp.eq.s32.totalorder %s18, 0
      %p101 = por %p99, %p100
      %p102 = scmp.ne.s32.totalorder %s94, %s96
      %p103 = scmp.eq.s32.totalorder %s23, 1
      %p104 = por %p102, %p103
      %p105 = scmp.ne.s32.totalorder %s96, %s97
      %p106 = scmp.eq.s32.totalorder %s23, 0
      %p107 = por %p105, %p106
      %p108 = scmp.ne.s32.totalorder %s96, %s97
      %p109 = scmp.eq.s32.totalorder %s24, 1
      %p110 = por %p108, %p109
      %p112 = scmp.ne.s32.totalorder %s97, %s111
      %p113 = scmp.eq.s32.totalorder %s24, 0
      %p114 = por %p112, %p113
      %s116 = sadd.s32 %s115, 1
      %p119 = scmp.eq.s32.totalorder %s18, 1
      %p120 = scmp.ne.s32.totalorder %s115, %s117
      %p121 = scmp.eq.s32.totalorder %s18, 0
      %p122 = por %p120, %p121
      %p123 = scmp.ne.s32.totalorder %s115, %s117
      %p124 = scmp.eq.s32.totalorder %s23, 1
      %p125 = por %p123, %p124
      %p126 = scmp.ne.s32.totalorder %s117, %s118
      %p127 = scmp.eq.s32.totalorder %s23, 0
      %p128 = por %p126, %p127
      %p129 = scmp.ne.s32.totalorder %s117, %s118
      %p130 = scmp.eq.s32.totalorder %s24, 1
      %p131 = por %p129, %p130
      %p133 = scmp.ne.s32.totalorder %s118, %s132
      %p134 = scmp.eq.s32.totalorder %s24, 0
      %p135 = por %p133, %p134
      %s137 = sadd.s32 %s136, 1
      %p140 = scmp.eq.s32.totalorder %s18, 1
      %p141 = scmp.ne.s32.totalorder %s136, %s138
      %p142 = scmp.eq.s32.totalorder %s18, 0
      %p143 = por %p141, %p142
      %p144 = scmp.ne.s32.totalorder %s136, %s138
      %p145 = scmp.eq.s32.totalorder %s23, 1
      %p146 = por %p144, %p145
      %p147 = scmp.ne.s32.totalorder %s138, %s139
      %p148 = scmp.eq.s32.totalorder %s23, 0
      %p149 = por %p147, %p148
      %p150 = scmp.ne.s32.totalorder %s138, %s139
      %p151 = scmp.eq.s32.totalorder %s24, 1
      %p152 = por %p150, %p151
      %p154 = scmp.ne.s32.totalorder %s139, %s153
      %p155 = scmp.eq.s32.totalorder %s24, 0
      %p156 = por %p154, %p155
      %s158 = sadd.s32 %s157, 1
      %p161 = scmp.eq.s32.totalorder %s18, 1
      %p162 = scmp.ne.s32.totalorder %s157, %s159
      %p163 = scmp.eq.s32.totalorder %s18, 0
      %p164 = por %p162, %p163
      %p165 = scmp.ne.s32.totalorder %s157, %s159
      %p166 = scmp.eq.s32.totalorder %s23, 1
      %p167 = por %p165, %p166
      %p168 = scmp.ne.s32.totalorder %s159, %s160
      %p169 = scmp.eq.s32.totalorder %s23, 0
      %p170 = por %p168, %p169
      %p171 = scmp.ne.s32.totalorder %s159, %s160
      %p172 = scmp.eq.s32.totalorder %s24, 1
      %p173 = por %p171, %p172
      %p175 = scmp.ne.s32.totalorder %s160, %s174
      %p176 = scmp.eq.s32.totalorder %s24, 0
      %p177 = por %p175, %p176
      %s179 = sadd.s32 %s178, 1
      %p182 = scmp.eq.s32.totalorder %s18, 1
      %p183 = scmp.ne.s32.totalorder %s178, %s180
      %p184 = scmp.eq.s32.totalorder %s18, 0
      %p185 = por %p183, %p184
      %p186 = scmp.ne.s32.totalorder %s178, %s180
      %p187 = scmp.eq.s32.totalorder %s23, 1
      %p188 = por %p186, %p187
      %p189 = scmp.ne.s32.totalorder %s180, %s181
      %p190 = scmp.eq.s32.totalorder %s23, 0
      %p191 = por %p189, %p190
      %p192 = scmp.ne.s32.totalorder %s180, %s181
      %p193 = scmp.eq.s32.totalorder %s24, 1
      %p194 = por %p192, %p193
      %p196 = scmp.ne.s32.totalorder %s181, %s195
      %p197 = scmp.eq.s32.totalorder %s24, 0
      %p198 = por %p196, %p197
      %s199 = ssub.s32 %s18, %s25
      %p200 = scmp.eq.s32.totalorder %s199, 0
      %s202 = sadd.s32 %s201, 1
      %s203 = scalar_select %p200, %s201, %s202
      %p206 = pneg %p200
      %p207 = scmp.eq.s32.totalorder %s18, 1
      %p208 = por %p206, %p207
      %p209 = scmp.ne.s32.totalorder %s201, %s204
      %p210 = scmp.eq.s32.totalorder %s18, 0
      %p211 = por %p209, %p210
      %p212 = scmp.ne.s32.totalorder %s201, %s204
      %p213 = scmp.eq.s32.totalorder %s23, 1
      %p214 = por %p212, %p213
      %p215 = scmp.ne.s32.totalorder %s204, %s205
      %p216 = scmp.eq.s32.totalorder %s23, 0
      %p217 = por %p215, %p216
      %p218 = scmp.ne.s32.totalorder %s204, %s205
      %p219 = scmp.eq.s32.totalorder %s24, 1
      %p220 = por %p218, %p219
      %p222 = scmp.ne.s32.totalorder %s205, %s221
      %p223 = scmp.eq.s32.totalorder %s24, 0
      %p224 = por %p222, %p223
      %p225 = scmp.le.s32.totalorder 1, %s18
      %p226 = scmp.lt.s32.totalorder %s18, 3
      %p227 = pnand %p225, %p226
      %p228 = pneg %p227
      // Predicated region
      $region9: #{tddft_cnn_forward.1} parent=5 // pred_check
        _
      $region10: #{tddft_cnn_forward.1} parent=5 // pred_check_branch
        %230 = sbr.rel (%p227) target = $region12
      $region11: #{tddft_cnn_forward.1} parent=5 // pred_region
        %s231 = ssub.s32 %s18, 1
        // Predicated region
        $region13: #{tddft_cnn_forward.1} parent=11 // pred_check
          %p232 = pneg %p65
        $region14: #{tddft_cnn_forward.1} parent=11 // pred_check_branch
          %234 = sbr.rel (%p232) target = $region16
        $region15: #{tddft_cnn_forward.1} parent=11 // pred_region
          %s236 = ssub.s32 36864, 36864
          %237 = vsyncadd [#allocation4], %s236
          %s238 = sshll.u32 [#allocation3], 4
          %s239 = int_to_ptr.vmem [resolvable:$true] %s238
          %244 = dma.hbm_to_vmem [thread:$0]  %s1, 36864, %s239, [#allocation4], 128, 128, 8
        $region16: #{tddft_cnn_forward.1} parent=11 // pred_fallthru
          _
        // Predicated region
        $region17: #{tddft_cnn_forward.1} parent=11 // pred_check
          %p245 = pneg %p86
        $region18: #{tddft_cnn_forward.1} parent=11 // pred_check_branch
          %247 = sbr.rel (%p245) target = $region20
        $region19: #{tddft_cnn_forward.1} parent=11 // pred_region
          _
        $region20: #{tddft_cnn_forward.1} parent=11 // pred_fallthru
          _
        // Predicated region
        $region21: #{tddft_cnn_forward.1} parent=11 // pred_check
          %p248 = pneg %p107
        $region22: #{tddft_cnn_forward.1} parent=11 // pred_check_branch
          %250 = sbr.rel (%p248) target = $region24
        $region23: #{tddft_cnn_forward.1} parent=11 // pred_region
          _
        $region24: #{tddft_cnn_forward.1} parent=11 // pred_fallthru
          _
        // Predicated region
        $region25: #{tddft_cnn_forward.1} parent=11 // pred_check
          %p251 = pneg %p128
        $region26: #{tddft_cnn_forward.1} parent=11 // pred_check_branch
          %253 = sbr.rel (%p251) target = $region28
        $region27: #{tddft_cnn_forward.1} parent=11 // pred_region
          %s255 = ssub.s32 1152, 1152
          %256 = vsyncadd [#allocation6], %s255
          %s257 = sshll.u32 [#allocation5], 4
          %s258 = int_to_ptr.vmem [resolvable:$true] %s257
          %263 = dma.hbm_to_vmem [thread:$0]  %s4, 1152, %s258, [#allocation6], 128, 128, 8
        $region28: #{tddft_cnn_forward.1} parent=11 // pred_fallthru
          _
        // Predicated region
        $region29: #{tddft_cnn_forward.1} parent=11 // pred_check
          %p264 = pneg %p149
        $region30: #{tddft_cnn_forward.1} parent=11 // pred_check_branch
          %266 = sbr.rel (%p264) target = $region32
        $region31: #{tddft_cnn_forward.1} parent=11 // pred_region
          _
        $region32: #{tddft_cnn_forward.1} parent=11 // pred_fallthru
          _
        // Predicated region
        $region33: #{tddft_cnn_forward.1} parent=11 // pred_check
          %p267 = pneg %p170
        $region34: #{tddft_cnn_forward.1} parent=11 // pred_check_branch
          %269 = sbr.rel (%p267) target = $region36
        $region35: #{tddft_cnn_forward.1} parent=11 // pred_region
          %s271 = ssub.s32 144, 144
          %272 = vsyncadd [#allocation6], %s271
          %s273 = sshll.u32 [#allocation7], 4
          %s274 = int_to_ptr.vmem [resolvable:$true] %s273
          %279 = dma.hbm_to_vmem [thread:$0]  %s6, 144, %s274, [#allocation6], 16, 16, 1
        $region36: #{tddft_cnn_forward.1} parent=11 // pred_fallthru
          _
        // Predicated region
        $region37: #{tddft_cnn_forward.1} parent=11 // pred_check
          %p280 = pneg %p191
        $region38: #{tddft_cnn_forward.1} parent=11 // pred_check_branch
          %282 = sbr.rel (%p280) target = $region40
        $region39: #{tddft_cnn_forward.1} parent=11 // pred_region
          _
        $region40: #{tddft_cnn_forward.1} parent=11 // pred_fallthru
          _
      $region12: #{tddft_cnn_forward.1} parent=5 // pred_fallthru
        _
      %p283 = scmp.lt.s32.totalorder %s18, 2
      // Predicated region
      $region41: #{tddft_cnn_forward.1} parent=5 // pred_check
        %p284 = pneg %p283
      $region42: #{tddft_cnn_forward.1} parent=5 // pred_check_branch
        %286 = sbr.rel (%p284) target = $region44
      $region43: #{tddft_cnn_forward.1} parent=5 // pred_region
        // Predicated region
        $region45: #{tddft_cnn_forward.1} parent=43 // pred_check
          %p287 = pneg %p38
        $region46: #{tddft_cnn_forward.1} parent=43 // pred_check_branch
          %289 = sbr.rel (%p287) target = $region48
        $region47: #{tddft_cnn_forward.1} parent=43 // pred_region
          %p290 = scmp.lt.s32.totalorder %s18, 1
          %s291 = scalar_select %p290, %s18, 1
          %s292 = smul.addr %s291, 2
          %s293 = smul.addr %s292, 2
          %s294 = scalar_lea.vmem %s0, %s293
        $region48: #{tddft_cnn_forward.1} parent=43 // pred_fallthru
          _
      $region44: #{tddft_cnn_forward.1} parent=5 // pred_fallthru
        _
      %p295 = scmp.le.s32.totalorder 1, %s18
      %p296 = scmp.lt.s32.totalorder %s18, 3
      %p297 = pnand %p295, %p296
      %p298 = pneg %p297
      // Predicated region
      $region49: #{tddft_cnn_forward.1} parent=5 // pred_check
        _
      $region50: #{tddft_cnn_forward.1} parent=5 // pred_check_branch
        %300 = sbr.rel (%p297) target = $region52
      $region51: #{tddft_cnn_forward.1} parent=5 // pred_region
        %s301 = ssub.s32 %s18, 1
        // Predicated region
        $region53: #{tddft_cnn_forward.1} parent=51 // pred_check
          %p302 = pneg %p65
        $region54: #{tddft_cnn_forward.1} parent=51 // pred_check_branch
          %304 = sbr.rel (%p302) target = $region56
        $region55: #{tddft_cnn_forward.1} parent=51 // pred_region
          %305 = dma.done [#allocation4], 36864
        $region56: #{tddft_cnn_forward.1} parent=51 // pred_fallthru
          _
        // Predicated region
        $region57: #{tddft_cnn_forward.1} parent=51 // pred_check
          %p306 = pneg %p128
        $region58: #{tddft_cnn_forward.1} parent=51 // pred_check_branch
          %308 = sbr.rel (%p306) target = $region60
        $region59: #{tddft_cnn_forward.1} parent=51 // pred_region
          %309 = dma.done [#allocation6], 1152
        $region60: #{tddft_cnn_forward.1} parent=51 // pred_fallthru
          _
        // Predicated region
        $region61: #{tddft_cnn_forward.1} parent=51 // pred_check
          %p310 = pneg %p170
        $region62: #{tddft_cnn_forward.1} parent=51 // pred_check_branch
          %312 = sbr.rel (%p310) target = $region64
        $region63: #{tddft_cnn_forward.1} parent=51 // pred_region
          %313 = dma.done [#allocation6], 144
        $region64: #{tddft_cnn_forward.1} parent=51 // pred_fallthru
          _
        %p314 = scmp.lt.s32.totalorder %s23, 1
        %s315 = scalar_select %p314, %s23, 1
        %s316 = smul.addr %s315, 2
        %s317 = smul.addr %s316, 2
        %s318 = scalar_lea.vmem %s0, %s317
        %p319 = pneg %p44
        %p320 = pneg %p41
        %p321 = pneg %p65
        %p322 = pneg %p62
        %p323 = pneg %p86
        %p324 = pneg %p83
        %p325 = pneg %p107
        %p326 = pneg %p104
        %p327 = pneg %p128
        %p328 = pneg %p125
        %p329 = pneg %p149
        %p330 = pneg %p146
        %p331 = pneg %p170
        %p332 = pneg %p167
        %p333 = pneg %p191
        %p334 = pneg %p188
        %p335 = pneg %p217
        %p336 = pneg %p214
        %p337 = scmp.lt.s32.totalorder %s23, 1
        %s338 = scalar_select %p337, %s23, 1
        %s339 = smul.addr %s338, 2
        %s340 = scalar_lea.vmem %s8, %s339
        %p341 = scmp.lt.s32.totalorder %s23, 1
        %s342 = scalar_select %p341, %s23, 1
        %s343 = smul.addr %s342, 2
        %s344 = smul.addr %s343, 2
        %s345 = scalar_lea.vmem %s0, %s344
        %p346 = scmp.lt.s32.totalorder %s23, 1
        %s347 = scalar_select %p346, %s23, 1
        %s348 = smul.addr %s347, 2
        %s349 = scalar_lea.vmem %s8, %s348
        %v350 = vld [vmem:[#allocation3] sm:$0xff]
        %v351 = vld [vmem:[#allocation3 + $0x8] sm:$0xff]
        %v352 = vld [vmem:[#allocation3 + $0x10] sm:$0xff]
        %v353 = vld [vmem:[#allocation3 + $0x18] sm:$0xff]
        %v354 = vld [vmem:[#allocation3 + $0x20] sm:$0xff]
        %v355 = vld [vmem:[#allocation3 + $0x28] sm:$0xff]
        %v356 = vld [vmem:[#allocation3 + $0x30] sm:$0xff]
        %v357 = vld [vmem:[#allocation3 + $0x38] sm:$0xff]
        %v358 = vld [vmem:[#allocation3 + $0x40] sm:$0xff]
        %v359 = vld [vmem:[#allocation3 + $0x48] sm:$0xff]
        %v360 = vld [vmem:[#allocation3 + $0x50] sm:$0xff]
        %v361 = vld [vmem:[#allocation3 + $0x58] sm:$0xff]
        %v362 = vld [vmem:[#allocation3 + $0x60] sm:$0xff]
        %v363 = vld [vmem:[#allocation3 + $0x68] sm:$0xff]
        %v364 = vld [vmem:[#allocation3 + $0x70] sm:$0xff]
        %v365 = vld [vmem:[#allocation3 + $0x78] sm:$0xff]
        %v366 = vld [vmem:[#allocation3 + $0x80] sm:$0xff]
        %v367 = vld [vmem:[#allocation3 + $0x88] sm:$0xff]
        %v368 = vld [vmem:[#allocation3 + $0x90] sm:$0xff]
        %v369 = vld [vmem:[#allocation3 + $0x98] sm:$0xff]
        %v370 = vld [vmem:[#allocation3 + $0xa0] sm:$0xff]
        %v371 = vld [vmem:[#allocation3 + $0xa8] sm:$0xff]
        %v372 = vld [vmem:[#allocation3 + $0xb0] sm:$0xff]
        %v373 = vld [vmem:[#allocation3 + $0xb8] sm:$0xff]
        %v374 = vld [vmem:[#allocation3 + $0xc0] sm:$0xff]
        %v375 = vld [vmem:[#allocation3 + $0xc8] sm:$0xff]
        %v376 = vld [vmem:[#allocation3 + $0xd0] sm:$0xff]
        %v377 = vld [vmem:[#allocation3 + $0xd8] sm:$0xff]
        %v378 = vld [vmem:[#allocation3 + $0xe0] sm:$0xff]
        %v379 = vld [vmem:[#allocation3 + $0xe8] sm:$0xff]
        %v380 = vld [vmem:[#allocation3 + $0xf0] sm:$0xff]
        %v381 = vld [vmem:[#allocation3 + $0xf8] sm:$0xff]
        %v382 = vunpack.c.l.bf16 %v350
        %v383 = vunpack.c.h.bf16 %v350
        %v384 = vunpack.c.l.bf16 %v351
        %v385 = vunpack.c.h.bf16 %v351
        %v386 = vunpack.c.l.bf16 %v352
        %v387 = vunpack.c.h.bf16 %v352
        %v388 = vunpack.c.l.bf16 %v353
        %v389 = vunpack.c.h.bf16 %v353
        %v390 = vunpack.c.l.bf16 %v354
        %v391 = vunpack.c.h.bf16 %v354
        %v392 = vunpack.c.l.bf16 %v355
        %v393 = vunpack.c.h.bf16 %v355
        %v394 = vunpack.c.l.bf16 %v356
        %v395 = vunpack.c.h.bf16 %v356
        %v396 = vunpack.c.l.bf16 %v357
        %v397 = vunpack.c.h.bf16 %v357
        %v398 = vunpack.c.l.bf16 %v358
        %v399 = vunpack.c.h.bf16 %v358
        %v400 = vunpack.c.l.bf16 %v359
        %v401 = vunpack.c.h.bf16 %v359
        %v402 = vunpack.c.l.bf16 %v360
        %v403 = vunpack.c.h.bf16 %v360
        %v404 = vunpack.c.l.bf16 %v361
        %v405 = vunpack.c.h.bf16 %v361
        %v406 = vunpack.c.l.bf16 %v362
        %v407 = vunpack.c.h.bf16 %v362
        %v408 = vunpack.c.l.bf16 %v363
        %v409 = vunpack.c.h.bf16 %v363
        %v410 = vunpack.c.l.bf16 %v364
        %v411 = vunpack.c.h.bf16 %v364
        %v412 = vunpack.c.l.bf16 %v365
        %v413 = vunpack.c.h.bf16 %v365
        %v414 = vunpack.c.l.bf16 %v366
        %v415 = vunpack.c.h.bf16 %v366
        %v416 = vunpack.c.l.bf16 %v367
        %v417 = vunpack.c.h.bf16 %v367
        %v418 = vunpack.c.l.bf16 %v368
        %v419 = vunpack.c.h.bf16 %v368
        %v420 = vunpack.c.l.bf16 %v369
        %v421 = vunpack.c.h.bf16 %v369
        %v422 = vunpack.c.l.bf16 %v370
        %v423 = vunpack.c.h.bf16 %v370
        %v424 = vunpack.c.l.bf16 %v371
        %v425 = vunpack.c.h.bf16 %v371
        %v426 = vunpack.c.l.bf16 %v372
        %v427 = vunpack.c.h.bf16 %v372
        %v428 = vunpack.c.l.bf16 %v373
        %v429 = vunpack.c.h.bf16 %v373
        %v430 = vunpack.c.l.bf16 %v374
        %v431 = vunpack.c.h.bf16 %v374
        %v432 = vunpack.c.l.bf16 %v375
        %v433 = vunpack.c.h.bf16 %v375
        %v434 = vunpack.c.l.bf16 %v376
        %v435 = vunpack.c.h.bf16 %v376
        %v436 = vunpack.c.l.bf16 %v377
        %v437 = vunpack.c.h.bf16 %v377
        %v438 = vunpack.c.l.bf16 %v378
        %v439 = vunpack.c.h.bf16 %v378
        %v440 = vunpack.c.l.bf16 %v379
        %v441 = vunpack.c.h.bf16 %v379
        %v442 = vunpack.c.l.bf16 %v380
        %v443 = vunpack.c.h.bf16 %v380
        %v444 = vunpack.c.l.bf16 %v381
        %v445 = vunpack.c.h.bf16 %v381
        %s446 = scalar_lea.vmem [#allocation3], 256
        %v447 = vld [vmem:[%s446] sm:$0xff]
        %v448 = vld [vmem:[%s446 + $0x8] sm:$0xff]
        %v449 = vld [vmem:[%s446 + $0x10] sm:$0xff]
        %v450 = vld [vmem:[%s446 + $0x18] sm:$0xff]
        %v451 = vld [vmem:[%s446 + $0x20] sm:$0xff]
        %v452 = vld [vmem:[%s446 + $0x28] sm:$0xff]
        %v453 = vld [vmem:[%s446 + $0x30] sm:$0xff]
        %v454 = vld [vmem:[%s446 + $0x38] sm:$0xff]
        %v455 = vld [vmem:[%s446 + $0x40] sm:$0xff]
        %v456 = vld [vmem:[%s446 + $0x48] sm:$0xff]
        %v457 = vld [vmem:[%s446 + $0x50] sm:$0xff]
        %v458 = vld [vmem:[%s446 + $0x58] sm:$0xff]
        %v459 = vld [vmem:[%s446 + $0x60] sm:$0xff]
        %v460 = vld [vmem:[%s446 + $0x68] sm:$0xff]
        %v461 = vld [vmem:[%s446 + $0x70] sm:$0xff]
        %v462 = vld [vmem:[%s446 + $0x78] sm:$0xff]
        %v463 = vld [vmem:[%s446 + $0x80] sm:$0xff]
        %v464 = vld [vmem:[%s446 + $0x88] sm:$0xff]
        %v465 = vld [vmem:[%s446 + $0x90] sm:$0xff]
        %v466 = vld [vmem:[%s446 + $0x98] sm:$0xff]
        %v467 = vld [vmem:[%s446 + $0xa0] sm:$0xff]
        %v468 = vld [vmem:[%s446 + $0xa8] sm:$0xff]
        %v469 = vld [vmem:[%s446 + $0xb0] sm:$0xff]
        %v470 = vld [vmem:[%s446 + $0xb8] sm:$0xff]
        %v471 = vld [vmem:[%s446 + $0xc0] sm:$0xff]
        %v472 = vld [vmem:[%s446 + $0xc8] sm:$0xff]
        %v473 = vld [vmem:[%s446 + $0xd0] sm:$0xff]
        %v474 = vld [vmem:[%s446 + $0xd8] sm:$0xff]
        %v475 = vld [vmem:[%s446 + $0xe0] sm:$0xff]
        %v476 = vld [vmem:[%s446 + $0xe8] sm:$0xff]
        %v477 = vld [vmem:[%s446 + $0xf0] sm:$0xff]
        %v478 = vld [vmem:[%s446 + $0xf8] sm:$0xff]
        %v479 = vunpack.c.l.bf16 %v447
        %v480 = vunpack.c.h.bf16 %v447
        %v481 = vunpack.c.l.bf16 %v448
        %v482 = vunpack.c.h.bf16 %v448
        %v483 = vunpack.c.l.bf16 %v449
        %v484 = vunpack.c.h.bf16 %v449
        %v485 = vunpack.c.l.bf16 %v450
        %v486 = vunpack.c.h.bf16 %v450
        %v487 = vunpack.c.l.bf16 %v451
        %v488 = vunpack.c.h.bf16 %v451
        %v489 = vunpack.c.l.bf16 %v452
        %v490 = vunpack.c.h.bf16 %v452
        %v491 = vunpack.c.l.bf16 %v453
        %v492 = vunpack.c.h.bf16 %v453
        %v493 = vunpack.c.l.bf16 %v454
        %v494 = vunpack.c.h.bf16 %v454
        %v495 = vunpack.c.l.bf16 %v455
        %v496 = vunpack.c.h.bf16 %v455
        %v497 = vunpack.c.l.bf16 %v456
        %v498 = vunpack.c.h.bf16 %v456
        %v499 = vunpack.c.l.bf16 %v457
        %v500 = vunpack.c.h.bf16 %v457
        %v501 = vunpack.c.l.bf16 %v458
        %v502 = vunpack.c.h.bf16 %v458
        %v503 = vunpack.c.l.bf16 %v459
        %v504 = vunpack.c.h.bf16 %v459
        %v505 = vunpack.c.l.bf16 %v460
        %v506 = vunpack.c.h.bf16 %v460
        %v507 = vunpack.c.l.bf16 %v461
        %v508 = vunpack.c.h.bf16 %v461
        %v509 = vunpack.c.l.bf16 %v462
        %v510 = vunpack.c.h.bf16 %v462
        %v511 = vunpack.c.l.bf16 %v463
        %v512 = vunpack.c.h.bf16 %v463
        %v513 = vunpack.c.l.bf16 %v464
        %v514 = vunpack.c.h.bf16 %v464
        %v515 = vunpack.c.l.bf16 %v465
        %v516 = vunpack.c.h.bf16 %v465
        %v517 = vunpack.c.l.bf16 %v466
        %v518 = vunpack.c.h.bf16 %v466
        %v519 = vunpack.c.l.bf16 %v467
        %v520 = vunpack.c.h.bf16 %v467
        %v521 = vunpack.c.l.bf16 %v468
        %v522 = vunpack.c.h.bf16 %v468
        %v523 = vunpack.c.l.bf16 %v469
        %v524 = vunpack.c.h.bf16 %v469
        %v525 = vunpack.c.l.bf16 %v470
        %v526 = vunpack.c.h.bf16 %v470
        %v527 = vunpack.c.l.bf16 %v471
        %v528 = vunpack.c.h.bf16 %v471
        %v529 = vunpack.c.l.bf16 %v472
        %v530 = vunpack.c.h.bf16 %v472
        %v531 = vunpack.c.l.bf16 %v473
        %v532 = vunpack.c.h.bf16 %v473
        %v533 = vunpack.c.l.bf16 %v474
        %v534 = vunpack.c.h.bf16 %v474
        %v535 = vunpack.c.l.bf16 %v475
        %v536 = vunpack.c.h.bf16 %v475
        %v537 = vunpack.c.l.bf16 %v476
        %v538 = vunpack.c.h.bf16 %v476
        %v539 = vunpack.c.l.bf16 %v477
        %v540 = vunpack.c.h.bf16 %v477
        %v541 = vunpack.c.l.bf16 %v478
        %v542 = vunpack.c.h.bf16 %v478
        %s543 = scalar_lea.vmem [#allocation3], 512
        %v544 = vld [vmem:[%s543] sm:$0xff]
        %v545 = vld [vmem:[%s543 + $0x8] sm:$0xff]
        %v546 = vld [vmem:[%s543 + $0x10] sm:$0xff]
        %v547 = vld [vmem:[%s543 + $0x18] sm:$0xff]
        %v548 = vld [vmem:[%s543 + $0x20] sm:$0xff]
        %v549 = vld [vmem:[%s543 + $0x28] sm:$0xff]
        %v550 = vld [vmem:[%s543 + $0x30] sm:$0xff]
        %v551 = vld [vmem:[%s543 + $0x38] sm:$0xff]
        %v552 = vld [vmem:[%s543 + $0x40] sm:$0xff]
        %v553 = vld [vmem:[%s543 + $0x48] sm:$0xff]
        %v554 = vld [vmem:[%s543 + $0x50] sm:$0xff]
        %v555 = vld [vmem:[%s543 + $0x58] sm:$0xff]
        %v556 = vld [vmem:[%s543 + $0x60] sm:$0xff]
        %v557 = vld [vmem:[%s543 + $0x68] sm:$0xff]
        %v558 = vld [vmem:[%s543 + $0x70] sm:$0xff]
        %v559 = vld [vmem:[%s543 + $0x78] sm:$0xff]
        %v560 = vld [vmem:[%s543 + $0x80] sm:$0xff]
        %v561 = vld [vmem:[%s543 + $0x88] sm:$0xff]
        %v562 = vld [vmem:[%s543 + $0x90] sm:$0xff]
        %v563 = vld [vmem:[%s543 + $0x98] sm:$0xff]
        %v564 = vld [vmem:[%s543 + $0xa0] sm:$0xff]
        %v565 = vld [vmem:[%s543 + $0xa8] sm:$0xff]
        %v566 = vld [vmem:[%s543 + $0xb0] sm:$0xff]
        %v567 = vld [vmem:[%s543 + $0xb8] sm:$0xff]
        %v568 = vld [vmem:[%s543 + $0xc0] sm:$0xff]
        %v569 = vld [vmem:[%s543 + $0xc8] sm:$0xff]
        %v570 = vld [vmem:[%s543 + $0xd0] sm:$0xff]
        %v571 = vld [vmem:[%s543 + $0xd8] sm:$0xff]
        %v572 = vld [vmem:[%s543 + $0xe0] sm:$0xff]
        %v573 = vld [vmem:[%s543 + $0xe8] sm:$0xff]
        %v574 = vld [vmem:[%s543 + $0xf0] sm:$0xff]
        %v575 = vld [vmem:[%s543 + $0xf8] sm:$0xff]
        %v576 = vunpack.c.l.bf16 %v544
        %v577 = vunpack.c.h.bf16 %v544
        %v578 = vunpack.c.l.bf16 %v545
        %v579 = vunpack.c.h.bf16 %v545
        %v580 = vunpack.c.l.bf16 %v546
        %v581 = vunpack.c.h.bf16 %v546
        %v582 = vunpack.c.l.bf16 %v547
        %v583 = vunpack.c.h.bf16 %v547
        %v584 = vunpack.c.l.bf16 %v548
        %v585 = vunpack.c.h.bf16 %v548
        %v586 = vunpack.c.l.bf16 %v549
        %v587 = vunpack.c.h.bf16 %v549
        %v588 = vunpack.c.l.bf16 %v550
        %v589 = vunpack.c.h.bf16 %v550
        %v590 = vunpack.c.l.bf16 %v551
        %v591 = vunpack.c.h.bf16 %v551
        %v592 = vunpack.c.l.bf16 %v552
        %v593 = vunpack.c.h.bf16 %v552
        %v594 = vunpack.c.l.bf16 %v553
        %v595 = vunpack.c.h.bf16 %v553
        %v596 = vunpack.c.l.bf16 %v554
        %v597 = vunpack.c.h.bf16 %v554
        %v598 = vunpack.c.l.bf16 %v555
        %v599 = vunpack.c.h.bf16 %v555
        %v600 = vunpack.c.l.bf16 %v556
        %v601 = vunpack.c.h.bf16 %v556
        %v602 = vunpack.c.l.bf16 %v557
        %v603 = vunpack.c.h.bf16 %v557
        %v604 = vunpack.c.l.bf16 %v558
        %v605 = vunpack.c.h.bf16 %v558
        %v606 = vunpack.c.l.bf16 %v559
        %v607 = vunpack.c.h.bf16 %v559
        %v608 = vunpack.c.l.bf16 %v560
        %v609 = vunpack.c.h.bf16 %v560
        %v610 = vunpack.c.l.bf16 %v561
        %v611 = vunpack.c.h.bf16 %v561
        %v612 = vunpack.c.l.bf16 %v562
        %v613 = vunpack.c.h.bf16 %v562
        %v614 = vunpack.c.l.bf16 %v563
        %v615 = vunpack.c.h.bf16 %v563
        %v616 = vunpack.c.l.bf16 %v564
        %v617 = vunpack.c.h.bf16 %v564
        %v618 = vunpack.c.l.bf16 %v565
        %v619 = vunpack.c.h.bf16 %v565
        %v620 = vunpack.c.l.bf16 %v566
        %v621 = vunpack.c.h.bf16 %v566
        %v622 = vunpack.c.l.bf16 %v567
        %v623 = vunpack.c.h.bf16 %v567
        %v624 = vunpack.c.l.bf16 %v568
        %v625 = vunpack.c.h.bf16 %v568
        %v626 = vunpack.c.l.bf16 %v569
        %v627 = vunpack.c.h.bf16 %v569
        %v628 = vunpack.c.l.bf16 %v570
        %v629 = vunpack.c.h.bf16 %v570
        %v630 = vunpack.c.l.bf16 %v571
        %v631 = vunpack.c.h.bf16 %v571
        %v632 = vunpack.c.l.bf16 %v572
        %v633 = vunpack.c.h.bf16 %v572
        %v634 = vunpack.c.l.bf16 %v573
        %v635 = vunpack.c.h.bf16 %v573
        %v636 = vunpack.c.l.bf16 %v574
        %v637 = vunpack.c.h.bf16 %v574
        %v638 = vunpack.c.l.bf16 %v575
        %v639 = vunpack.c.h.bf16 %v575
        %s640 = scalar_lea.vmem [#allocation3], 768
        %v641 = vld [vmem:[%s640] sm:$0xff]
        %v642 = vld [vmem:[%s640 + $0x8] sm:$0xff]
        %v643 = vld [vmem:[%s640 + $0x10] sm:$0xff]
        %v644 = vld [vmem:[%s640 + $0x18] sm:$0xff]
        %v645 = vld [vmem:[%s640 + $0x20] sm:$0xff]
        %v646 = vld [vmem:[%s640 + $0x28] sm:$0xff]
        %v647 = vld [vmem:[%s640 + $0x30] sm:$0xff]
        %v648 = vld [vmem:[%s640 + $0x38] sm:$0xff]
        %v649 = vld [vmem:[%s640 + $0x40] sm:$0xff]
        %v650 = vld [vmem:[%s640 + $0x48] sm:$0xff]
        %v651 = vld [vmem:[%s640 + $0x50] sm:$0xff]
        %v652 = vld [vmem:[%s640 + $0x58] sm:$0xff]
        %v653 = vld [vmem:[%s640 + $0x60] sm:$0xff]
        %v654 = vld [vmem:[%s640 + $0x68] sm:$0xff]
        %v655 = vld [vmem:[%s640 + $0x70] sm:$0xff]
        %v656 = vld [vmem:[%s640 + $0x78] sm:$0xff]
        %v657 = vld [vmem:[%s640 + $0x80] sm:$0xff]
        %v658 = vld [vmem:[%s640 + $0x88] sm:$0xff]
        %v659 = vld [vmem:[%s640 + $0x90] sm:$0xff]
        %v660 = vld [vmem:[%s640 + $0x98] sm:$0xff]
        %v661 = vld [vmem:[%s640 + $0xa0] sm:$0xff]
        %v662 = vld [vmem:[%s640 + $0xa8] sm:$0xff]
        %v663 = vld [vmem:[%s640 + $0xb0] sm:$0xff]
        %v664 = vld [vmem:[%s640 + $0xb8] sm:$0xff]
        %v665 = vld [vmem:[%s640 + $0xc0] sm:$0xff]
        %v666 = vld [vmem:[%s640 + $0xc8] sm:$0xff]
        %v667 = vld [vmem:[%s640 + $0xd0] sm:$0xff]
        %v668 = vld [vmem:[%s640 + $0xd8] sm:$0xff]
        %v669 = vld [vmem:[%s640 + $0xe0] sm:$0xff]
        %v670 = vld [vmem:[%s640 + $0xe8] sm:$0xff]
        %v671 = vld [vmem:[%s640 + $0xf0] sm:$0xff]
        %v672 = vld [vmem:[%s640 + $0xf8] sm:$0xff]
        %v673 = vunpack.c.l.bf16 %v641
        %v674 = vunpack.c.h.bf16 %v641
        %v675 = vunpack.c.l.bf16 %v642
        %v676 = vunpack.c.h.bf16 %v642
        %v677 = vunpack.c.l.bf16 %v643
        %v678 = vunpack.c.h.bf16 %v643
        %v679 = vunpack.c.l.bf16 %v644
        %v680 = vunpack.c.h.bf16 %v644
        %v681 = vunpack.c.l.bf16 %v645
        %v682 = vunpack.c.h.bf16 %v645
        %v683 = vunpack.c.l.bf16 %v646
        %v684 = vunpack.c.h.bf16 %v646
        %v685 = vunpack.c.l.bf16 %v647
        %v686 = vunpack.c.h.bf16 %v647
        %v687 = vunpack.c.l.bf16 %v648
        %v688 = vunpack.c.h.bf16 %v648
        %v689 = vunpack.c.l.bf16 %v649
        %v690 = vunpack.c.h.bf16 %v649
        %v691 = vunpack.c.l.bf16 %v650
        %v692 = vunpack.c.h.bf16 %v650
        %v693 = vunpack.c.l.bf16 %v651
        %v694 = vunpack.c.h.bf16 %v651
        %v695 = vunpack.c.l.bf16 %v652
        %v696 = vunpack.c.h.bf16 %v652
        %v697 = vunpack.c.l.bf16 %v653
        %v698 = vunpack.c.h.bf16 %v653
        %v699 = vunpack.c.l.bf16 %v654
        %v700 = vunpack.c.h.bf16 %v654
        %v701 = vunpack.c.l.bf16 %v655
        %v702 = vunpack.c.h.bf16 %v655
        %v703 = vunpack.c.l.bf16 %v656
        %v704 = vunpack.c.h.bf16 %v656
        %v705 = vunpack.c.l.bf16 %v657
        %v706 = vunpack.c.h.bf16 %v657
        %v707 = vunpack.c.l.bf16 %v658
        %v708 = vunpack.c.h.bf16 %v658
        %v709 = vunpack.c.l.bf16 %v659
        %v710 = vunpack.c.h.bf16 %v659
        %v711 = vunpack.c.l.bf16 %v660
        %v712 = vunpack.c.h.bf16 %v660
        %v713 = vunpack.c.l.bf16 %v661
        %v714 = vunpack.c.h.bf16 %v661
        %v715 = vunpack.c.l.bf16 %v662
        %v716 = vunpack.c.h.bf16 %v662
        %v717 = vunpack.c.l.bf16 %v663
        %v718 = vunpack.c.h.bf16 %v663
        %v719 = vunpack.c.l.bf16 %v664
        %v720 = vunpack.c.h.bf16 %v664
        %v721 = vunpack.c.l.bf16 %v665
        %v722 = vunpack.c.h.bf16 %v665
        %v723 = vunpack.c.l.bf16 %v666
        %v724 = vunpack.c.h.bf16 %v666
        %v725 = vunpack.c.l.bf16 %v667
        %v726 = vunpack.c.h.bf16 %v667
        %v727 = vunpack.c.l.bf16 %v668
        %v728 = vunpack.c.h.bf16 %v668
        %v729 = vunpack.c.l.bf16 %v669
        %v730 = vunpack.c.h.bf16 %v669
        %v731 = vunpack.c.l.bf16 %v670
        %v732 = vunpack.c.h.bf16 %v670
        %v733 = vunpack.c.l.bf16 %v671
        %v734 = vunpack.c.h.bf16 %v671
        %v735 = vunpack.c.l.bf16 %v672
        %v736 = vunpack.c.h.bf16 %v672
        %s737 = scalar_lea.vmem [#allocation3], 1280
        %v738 = vld [vmem:[%s737] sm:$0xff]
        %v739 = vld [vmem:[%s737 + $0x8] sm:$0xff]
        %v740 = vld [vmem:[%s737 + $0x10] sm:$0xff]
        %v741 = vld [vmem:[%s737 + $0x18] sm:$0xff]
        %v742 = vld [vmem:[%s737 + $0x20] sm:$0xff]
        %v743 = vld [vmem:[%s737 + $0x28] sm:$0xff]
        %v744 = vld [vmem:[%s737 + $0x30] sm:$0xff]
        %v745 = vld [vmem:[%s737 + $0x38] sm:$0xff]
        %v746 = vld [vmem:[%s737 + $0x40] sm:$0xff]
        %v747 = vld [vmem:[%s737 + $0x48] sm:$0xff]
        %v748 = vld [vmem:[%s737 + $0x50] sm:$0xff]
        %v749 = vld [vmem:[%s737 + $0x58] sm:$0xff]
        %v750 = vld [vmem:[%s737 + $0x60] sm:$0xff]
        %v751 = vld [vmem:[%s737 + $0x68] sm:$0xff]
        %v752 = vld [vmem:[%s737 + $0x70] sm:$0xff]
        %v753 = vld [vmem:[%s737 + $0x78] sm:$0xff]
        %v754 = vld [vmem:[%s737 + $0x80] sm:$0xff]
        %v755 = vld [vmem:[%s737 + $0x88] sm:$0xff]
        %v756 = vld [vmem:[%s737 + $0x90] sm:$0xff]
        %v757 = vld [vmem:[%s737 + $0x98] sm:$0xff]
        %v758 = vld [vmem:[%s737 + $0xa0] sm:$0xff]
        %v759 = vld [vmem:[%s737 + $0xa8] sm:$0xff]
        %v760 = vld [vmem:[%s737 + $0xb0] sm:$0xff]
        %v761 = vld [vmem:[%s737 + $0xb8] sm:$0xff]
        %v762 = vld [vmem:[%s737 + $0xc0] sm:$0xff]
        %v763 = vld [vmem:[%s737 + $0xc8] sm:$0xff]
        %v764 = vld [vmem:[%s737 + $0xd0] sm:$0xff]
        %v765 = vld [vmem:[%s737 + $0xd8] sm:$0xff]
        %v766 = vld [vmem:[%s737 + $0xe0] sm:$0xff]
        %v767 = vld [vmem:[%s737 + $0xe8] sm:$0xff]
        %v768 = vld [vmem:[%s737 + $0xf0] sm:$0xff]
        %v769 = vld [vmem:[%s737 + $0xf8] sm:$0xff]
        %v770 = vunpack.c.l.bf16 %v738
        %v771 = vunpack.c.h.bf16 %v738
        %v772 = vunpack.c.l.bf16 %v739
        %v773 = vunpack.c.h.bf16 %v739
        %v774 = vunpack.c.l.bf16 %v740
        %v775 = vunpack.c.h.bf16 %v740
        %v776 = vunpack.c.l.bf16 %v741
        %v777 = vunpack.c.h.bf16 %v741
        %v778 = vunpack.c.l.bf16 %v742
        %v779 = vunpack.c.h.bf16 %v742
        %v780 = vunpack.c.l.bf16 %v743
        %v781 = vunpack.c.h.bf16 %v743
        %v782 = vunpack.c.l.bf16 %v744
        %v783 = vunpack.c.h.bf16 %v744
        %v784 = vunpack.c.l.bf16 %v745
        %v785 = vunpack.c.h.bf16 %v745
        %v786 = vunpack.c.l.bf16 %v746
        %v787 = vunpack.c.h.bf16 %v746
        %v788 = vunpack.c.l.bf16 %v747
        %v789 = vunpack.c.h.bf16 %v747
        %v790 = vunpack.c.l.bf16 %v748
        %v791 = vunpack.c.h.bf16 %v748
        %v792 = vunpack.c.l.bf16 %v749
        %v793 = vunpack.c.h.bf16 %v749
        %v794 = vunpack.c.l.bf16 %v750
        %v795 = vunpack.c.h.bf16 %v750
        %v796 = vunpack.c.l.bf16 %v751
        %v797 = vunpack.c.h.bf16 %v751
        %v798 = vunpack.c.l.bf16 %v752
        %v799 = vunpack.c.h.bf16 %v752
        %v800 = vunpack.c.l.bf16 %v753
        %v801 = vunpack.c.h.bf16 %v753
        %v802 = vunpack.c.l.bf16 %v754
        %v803 = vunpack.c.h.bf16 %v754
        %v804 = vunpack.c.l.bf16 %v755
        %v805 = vunpack.c.h.bf16 %v755
        %v806 = vunpack.c.l.bf16 %v756
        %v807 = vunpack.c.h.bf16 %v756
        %v808 = vunpack.c.l.bf16 %v757
        %v809 = vunpack.c.h.bf16 %v757
        %v810 = vunpack.c.l.bf16 %v758
        %v811 = vunpack.c.h.bf16 %v758
        %v812 = vunpack.c.l.bf16 %v759
        %v813 = vunpack.c.h.bf16 %v759
        %v814 = vunpack.c.l.bf16 %v760
        %v815 = vunpack.c.h.bf16 %v760
        %v816 = vunpack.c.l.bf16 %v761
        %v817 = vunpack.c.h.bf16 %v761
        %v818 = vunpack.c.l.bf16 %v762
        %v819 = vunpack.c.h.bf16 %v762
        %v820 = vunpack.c.l.bf16 %v763
        %v821 = vunpack.c.h.bf16 %v763
        %v822 = vunpack.c.l.bf16 %v764
        %v823 = vunpack.c.h.bf16 %v764
        %v824 = vunpack.c.l.bf16 %v765
        %v825 = vunpack.c.h.bf16 %v765
        %v826 = vunpack.c.l.bf16 %v766
        %v827 = vunpack.c.h.bf16 %v766
        %v828 = vunpack.c.l.bf16 %v767
        %v829 = vunpack.c.h.bf16 %v767
        %v830 = vunpack.c.l.bf16 %v768
        %v831 = vunpack.c.h.bf16 %v768
        %v832 = vunpack.c.l.bf16 %v769
        %v833 = vunpack.c.h.bf16 %v769
        %s834 = scalar_lea.vmem [#allocation3], 1536
        %v835 = vld [vmem:[%s834] sm:$0xff]
        %v836 = vld [vmem:[%s834 + $0x8] sm:$0xff]
        %v837 = vld [vmem:[%s834 + $0x10] sm:$0xff]
        %v838 = vld [vmem:[%s834 + $0x18] sm:$0xff]
        %v839 = vld [vmem:[%s834 + $0x20] sm:$0xff]
        %v840 = vld [vmem:[%s834 + $0x28] sm:$0xff]
        %v841 = vld [vmem:[%s834 + $0x30] sm:$0xff]
        %v842 = vld [vmem:[%s834 + $0x38] sm:$0xff]
        %v843 = vld [vmem:[%s834 + $0x40] sm:$0xff]
        %v844 = vld [vmem:[%s834 + $0x48] sm:$0xff]
        %v845 = vld [vmem:[%s834 + $0x50] sm:$0xff]
        %v846 = vld [vmem:[%s834 + $0x58] sm:$0xff]
        %v847 = vld [vmem:[%s834 + $0x60] sm:$0xff]
        %v848 = vld [vmem:[%s834 + $0x68] sm:$0xff]
        %v849 = vld [vmem:[%s834 + $0x70] sm:$0xff]
        %v850 = vld [vmem:[%s834 + $0x78] sm:$0xff]
        %v851 = vld [vmem:[%s834 + $0x80] sm:$0xff]
        %v852 = vld [vmem:[%s834 + $0x88] sm:$0xff]
        %v853 = vld [vmem:[%s834 + $0x90] sm:$0xff]
        %v854 = vld [vmem:[%s834 + $0x98] sm:$0xff]
        %v855 = vld [vmem:[%s834 + $0xa0] sm:$0xff]
        %v856 = vld [vmem:[%s834 + $0xa8] sm:$0xff]
        %v857 = vld [vmem:[%s834 + $0xb0] sm:$0xff]
        %v858 = vld [vmem:[%s834 + $0xb8] sm:$0xff]
        %v859 = vld [vmem:[%s834 + $0xc0] sm:$0xff]
        %v860 = vld [vmem:[%s834 + $0xc8] sm:$0xff]
        %v861 = vld [vmem:[%s834 + $0xd0] sm:$0xff]
        %v862 = vld [vmem:[%s834 + $0xd8] sm:$0xff]
        %v863 = vld [vmem:[%s834 + $0xe0] sm:$0xff]
        %v864 = vld [vmem:[%s834 + $0xe8] sm:$0xff]
        %v865 = vld [vmem:[%s834 + $0xf0] sm:$0xff]
        %v866 = vld [vmem:[%s834 + $0xf8] sm:$0xff]
        %v867 = vunpack.c.l.bf16 %v835
        %v868 = vunpack.c.h.bf16 %v835
        %v869 = vunpack.c.l.bf16 %v836
        %v870 = vunpack.c.h.bf16 %v836
        %v871 = vunpack.c.l.bf16 %v837
        %v872 = vunpack.c.h.bf16 %v837
        %v873 = vunpack.c.l.bf16 %v838
        %v874 = vunpack.c.h.bf16 %v838
        %v875 = vunpack.c.l.bf16 %v839
        %v876 = vunpack.c.h.bf16 %v839
        %v877 = vunpack.c.l.bf16 %v840
        %v878 = vunpack.c.h.bf16 %v840
        %v879 = vunpack.c.l.bf16 %v841
        %v880 = vunpack.c.h.bf16 %v841
        %v881 = vunpack.c.l.bf16 %v842
        %v882 = vunpack.c.h.bf16 %v842
        %v883 = vunpack.c.l.bf16 %v843
        %v884 = vunpack.c.h.bf16 %v843
        %v885 = vunpack.c.l.bf16 %v844
        %v886 = vunpack.c.h.bf16 %v844
        %v887 = vunpack.c.l.bf16 %v845
        %v888 = vunpack.c.h.bf16 %v845
        %v889 = vunpack.c.l.bf16 %v846
        %v890 = vunpack.c.h.bf16 %v846
        %v891 = vunpack.c.l.bf16 %v847
        %v892 = vunpack.c.h.bf16 %v847
        %v893 = vunpack.c.l.bf16 %v848
        %v894 = vunpack.c.h.bf16 %v848
        %v895 = vunpack.c.l.bf16 %v849
        %v896 = vunpack.c.h.bf16 %v849
        %v897 = vunpack.c.l.bf16 %v850
        %v898 = vunpack.c.h.bf16 %v850
        %v899 = vunpack.c.l.bf16 %v851
        %v900 = vunpack.c.h.bf16 %v851
        %v901 = vunpack.c.l.bf16 %v852
        %v902 = vunpack.c.h.bf16 %v852
        %v903 = vunpack.c.l.bf16 %v853
        %v904 = vunpack.c.h.bf16 %v853
        %v905 = vunpack.c.l.bf16 %v854
        %v906 = vunpack.c.h.bf16 %v854
        %v907 = vunpack.c.l.bf16 %v855
        %v908 = vunpack.c.h.bf16 %v855
        %v909 = vunpack.c.l.bf16 %v856
        %v910 = vunpack.c.h.bf16 %v856
        %v911 = vunpack.c.l.bf16 %v857
        %v912 = vunpack.c.h.bf16 %v857
        %v913 = vunpack.c.l.bf16 %v858
        %v914 = vunpack.c.h.bf16 %v858
        %v915 = vunpack.c.l.bf16 %v859
        %v916 = vunpack.c.h.bf16 %v859
        %v917 = vunpack.c.l.bf16 %v860
        %v918 = vunpack.c.h.bf16 %v860
        %v919 = vunpack.c.l.bf16 %v861
        %v920 = vunpack.c.h.bf16 %v861
        %v921 = vunpack.c.l.bf16 %v862
        %v922 = vunpack.c.h.bf16 %v862
        %v923 = vunpack.c.l.bf16 %v863
        %v924 = vunpack.c.h.bf16 %v863
        %v925 = vunpack.c.l.bf16 %v864
        %v926 = vunpack.c.h.bf16 %v864
        %v927 = vunpack.c.l.bf16 %v865
        %v928 = vunpack.c.h.bf16 %v865
        %v929 = vunpack.c.l.bf16 %v866
        %v930 = vunpack.c.h.bf16 %v866
        %s931 = scalar_lea.vmem [#allocation3], 1792
        %v932 = vld [vmem:[%s931] sm:$0xff]
        %v933 = vld [vmem:[%s931 + $0x8] sm:$0xff]
        %v934 = vld [vmem:[%s931 + $0x10] sm:$0xff]
        %v935 = vld [vmem:[%s931 + $0x18] sm:$0xff]
        %v936 = vld [vmem:[%s931 + $0x20] sm:$0xff]
        %v937 = vld [vmem:[%s931 + $0x28] sm:$0xff]
        %v938 = vld [vmem:[%s931 + $0x30] sm:$0xff]
        %v939 = vld [vmem:[%s931 + $0x38] sm:$0xff]
        %v940 = vld [vmem:[%s931 + $0x40] sm:$0xff]
        %v941 = vld [vmem:[%s931 + $0x48] sm:$0xff]
        %v942 = vld [vmem:[%s931 + $0x50] sm:$0xff]
        %v943 = vld [vmem:[%s931 + $0x58] sm:$0xff]
        %v944 = vld [vmem:[%s931 + $0x60] sm:$0xff]
        %v945 = vld [vmem:[%s931 + $0x68] sm:$0xff]
        %v946 = vld [vmem:[%s931 + $0x70] sm:$0xff]
        %v947 = vld [vmem:[%s931 + $0x78] sm:$0xff]
        %v948 = vld [vmem:[%s931 + $0x80] sm:$0xff]
        %v949 = vld [vmem:[%s931 + $0x88] sm:$0xff]
        %v950 = vld [vmem:[%s931 + $0x90] sm:$0xff]
        %v951 = vld [vmem:[%s931 + $0x98] sm:$0xff]
        %v952 = vld [vmem:[%s931 + $0xa0] sm:$0xff]
        %v953 = vld [vmem:[%s931 + $0xa8] sm:$0xff]
        %v954 = vld [vmem:[%s931 + $0xb0] sm:$0xff]
        %v955 = vld [vmem:[%s931 + $0xb8] sm:$0xff]
        %v956 = vld [vmem:[%s931 + $0xc0] sm:$0xff]
        %v957 = vld [vmem:[%s931 + $0xc8] sm:$0xff]
        %v958 = vld [vmem:[%s931 + $0xd0] sm:$0xff]
        %v959 = vld [vmem:[%s931 + $0xd8] sm:$0xff]
        %v960 = vld [vmem:[%s931 + $0xe0] sm:$0xff]
        %v961 = vld [vmem:[%s931 + $0xe8] sm:$0xff]
        %v962 = vld [vmem:[%s931 + $0xf0] sm:$0xff]
        %v963 = vld [vmem:[%s931 + $0xf8] sm:$0xff]
        %v964 = vunpack.c.l.bf16 %v932
        %v965 = vunpack.c.h.bf16 %v932
        %v966 = vunpack.c.l.bf16 %v933
        %v967 = vunpack.c.h.bf16 %v933
        %v968 = vunpack.c.l.bf16 %v934
        %v969 = vunpack.c.h.bf16 %v934
        %v970 = vunpack.c.l.bf16 %v935
        %v971 = vunpack.c.h.bf16 %v935
        %v972 = vunpack.c.l.bf16 %v936
        %v973 = vunpack.c.h.bf16 %v936
        %v974 = vunpack.c.l.bf16 %v937
        %v975 = vunpack.c.h.bf16 %v937
        %v976 = vunpack.c.l.bf16 %v938
        %v977 = vunpack.c.h.bf16 %v938
        %v978 = vunpack.c.l.bf16 %v939
        %v979 = vunpack.c.h.bf16 %v939
        %v980 = vunpack.c.l.bf16 %v940
        %v981 = vunpack.c.h.bf16 %v940
        %v982 = vunpack.c.l.bf16 %v941
        %v983 = vunpack.c.h.bf16 %v941
        %v984 = vunpack.c.l.bf16 %v942
        %v985 = vunpack.c.h.bf16 %v942
        %v986 = vunpack.c.l.bf16 %v943
        %v987 = vunpack.c.h.bf16 %v943
        %v988 = vunpack.c.l.bf16 %v944
        %v989 = vunpack.c.h.bf16 %v944
        %v990 = vunpack.c.l.bf16 %v945
        %v991 = vunpack.c.h.bf16 %v945
        %v992 = vunpack.c.l.bf16 %v946
        %v993 = vunpack.c.h.bf16 %v946
        %v994 = vunpack.c.l.bf16 %v947
        %v995 = vunpack.c.h.bf16 %v947
        %v996 = vunpack.c.l.bf16 %v948
        %v997 = vunpack.c.h.bf16 %v948
        %v998 = vunpack.c.l.bf16 %v949
        %v999 = vunpack.c.h.bf16 %v949
        %v1000 = vunpack.c.l.bf16 %v950
        %v1001 = vunpack.c.h.bf16 %v950
        %v1002 = vunpack.c.l.bf16 %v951
        %v1003 = vunpack.c.h.bf16 %v951
        %v1004 = vunpack.c.l.bf16 %v952
        %v1005 = vunpack.c.h.bf16 %v952
        %v1006 = vunpack.c.l.bf16 %v953
        %v1007 = vunpack.c.h.bf16 %v953
        %v1008 = vunpack.c.l.bf16 %v954
        %v1009 = vunpack.c.h.bf16 %v954
        %v1010 = vunpack.c.l.bf16 %v955
        %v1011 = vunpack.c.h.bf16 %v955
        %v1012 = vunpack.c.l.bf16 %v956
        %v1013 = vunpack.c.h.bf16 %v956
        %v1014 = vunpack.c.l.bf16 %v957
        %v1015 = vunpack.c.h.bf16 %v957
        %v1016 = vunpack.c.l.bf16 %v958
        %v1017 = vunpack.c.h.bf16 %v958
        %v1018 = vunpack.c.l.bf16 %v959
        %v1019 = vunpack.c.h.bf16 %v959
        %v1020 = vunpack.c.l.bf16 %v960
        %v1021 = vunpack.c.h.bf16 %v960
        %v1022 = vunpack.c.l.bf16 %v961
        %v1023 = vunpack.c.h.bf16 %v961
        %v1024 = vunpack.c.l.bf16 %v962
        %v1025 = vunpack.c.h.bf16 %v962
        %v1026 = vunpack.c.l.bf16 %v963
        %v1027 = vunpack.c.h.bf16 %v963
        %s1028 = scalar_lea.vmem [#allocation3], 2048
        %v1029 = vld [vmem:[%s1028] sm:$0xff]
        %v1030 = vld [vmem:[%s1028 + $0x8] sm:$0xff]
        %v1031 = vld [vmem:[%s1028 + $0x10] sm:$0xff]
        %v1032 = vld [vmem:[%s1028 + $0x18] sm:$0xff]
        %v1033 = vld [vmem:[%s1028 + $0x20] sm:$0xff]
        %v1034 = vld [vmem:[%s1028 + $0x28] sm:$0xff]
        %v1035 = vld [vmem:[%s1028 + $0x30] sm:$0xff]
        %v1036 = vld [vmem:[%s1028 + $0x38] sm:$0xff]
        %v1037 = vld [vmem:[%s1028 + $0x40] sm:$0xff]
        %v1038 = vld [vmem:[%s1028 + $0x48] sm:$0xff]
        %v1039 = vld [vmem:[%s1028 + $0x50] sm:$0xff]
        %v1040 = vld [vmem:[%s1028 + $0x58] sm:$0xff]
        %v1041 = vld [vmem:[%s1028 + $0x60] sm:$0xff]
        %v1042 = vld [vmem:[%s1028 + $0x68] sm:$0xff]
        %v1043 = vld [vmem:[%s1028 + $0x70] sm:$0xff]
        %v1044 = vld [vmem:[%s1028 + $0x78] sm:$0xff]
        %v1045 = vld [vmem:[%s1028 + $0x80] sm:$0xff]
        %v1046 = vld [vmem:[%s1028 + $0x88] sm:$0xff]
        %v1047 = vld [vmem:[%s1028 + $0x90] sm:$0xff]
        %v1048 = vld [vmem:[%s1028 + $0x98] sm:$0xff]
        %v1049 = vld [vmem:[%s1028 + $0xa0] sm:$0xff]
        %v1050 = vld [vmem:[%s1028 + $0xa8] sm:$0xff]
        %v1051 = vld [vmem:[%s1028 + $0xb0] sm:$0xff]
        %v1052 = vld [vmem:[%s1028 + $0xb8] sm:$0xff]
        %v1053 = vld [vmem:[%s1028 + $0xc0] sm:$0xff]
        %v1054 = vld [vmem:[%s1028 + $0xc8] sm:$0xff]
        %v1055 = vld [vmem:[%s1028 + $0xd0] sm:$0xff]
        %v1056 = vld [vmem:[%s1028 + $0xd8] sm:$0xff]
        %v1057 = vld [vmem:[%s1028 + $0xe0] sm:$0xff]
        %v1058 = vld [vmem:[%s1028 + $0xe8] sm:$0xff]
        %v1059 = vld [vmem:[%s1028 + $0xf0] sm:$0xff]
        %v1060 = vld [vmem:[%s1028 + $0xf8] sm:$0xff]
        %v1061 = vunpack.c.l.bf16 %v1029
        %v1062 = vunpack.c.h.bf16 %v1029
        %v1063 = vunpack.c.l.bf16 %v1030
        %v1064 = vunpack.c.h.bf16 %v1030
        %v1065 = vunpack.c.l.bf16 %v1031
        %v1066 = vunpack.c.h.bf16 %v1031
        %v1067 = vunpack.c.l.bf16 %v1032
        %v1068 = vunpack.c.h.bf16 %v1032
        %v1069 = vunpack.c.l.bf16 %v1033
        %v1070 = vunpack.c.h.bf16 %v1033
        %v1071 = vunpack.c.l.bf16 %v1034
        %v1072 = vunpack.c.h.bf16 %v1034
        %v1073 = vunpack.c.l.bf16 %v1035
        %v1074 = vunpack.c.h.bf16 %v1035
        %v1075 = vunpack.c.l.bf16 %v1036
        %v1076 = vunpack.c.h.bf16 %v1036
        %v1077 = vunpack.c.l.bf16 %v1037
        %v1078 = vunpack.c.h.bf16 %v1037
        %v1079 = vunpack.c.l.bf16 %v1038
        %v1080 = vunpack.c.h.bf16 %v1038
        %v1081 = vunpack.c.l.bf16 %v1039
        %v1082 = vunpack.c.h.bf16 %v1039
        %v1083 = vunpack.c.l.bf16 %v1040
        %v1084 = vunpack.c.h.bf16 %v1040
        %v1085 = vunpack.c.l.bf16 %v1041
        %v1086 = vunpack.c.h.bf16 %v1041
        %v1087 = vunpack.c.l.bf16 %v1042
        %v1088 = vunpack.c.h.bf16 %v1042
        %v1089 = vunpack.c.l.bf16 %v1043
        %v1090 = vunpack.c.h.bf16 %v1043
        %v1091 = vunpack.c.l.bf16 %v1044
        %v1092 = vunpack.c.h.bf16 %v1044
        %v1093 = vunpack.c.l.bf16 %v1045
        %v1094 = vunpack.c.h.bf16 %v1045
        %v1095 = vunpack.c.l.bf16 %v1046
        %v1096 = vunpack.c.h.bf16 %v1046
        %v1097 = vunpack.c.l.bf16 %v1047
        %v1098 = vunpack.c.h.bf16 %v1047
        %v1099 = vunpack.c.l.bf16 %v1048
        %v1100 = vunpack.c.h.bf16 %v1048
        %v1101 = vunpack.c.l.bf16 %v1049
        %v1102 = vunpack.c.h.bf16 %v1049
        %v1103 = vunpack.c.l.bf16 %v1050
        %v1104 = vunpack.c.h.bf16 %v1050
        %v1105 = vunpack.c.l.bf16 %v1051
        %v1106 = vunpack.c.h.bf16 %v1051
        %v1107 = vunpack.c.l.bf16 %v1052
        %v1108 = vunpack.c.h.bf16 %v1052
        %v1109 = vunpack.c.l.bf16 %v1053
        %v1110 = vunpack.c.h.bf16 %v1053
        %v1111 = vunpack.c.l.bf16 %v1054
        %v1112 = vunpack.c.h.bf16 %v1054
        %v1113 = vunpack.c.l.bf16 %v1055
        %v1114 = vunpack.c.h.bf16 %v1055
        %v1115 = vunpack.c.l.bf16 %v1056
        %v1116 = vunpack.c.h.bf16 %v1056
        %v1117 = vunpack.c.l.bf16 %v1057
        %v1118 = vunpack.c.h.bf16 %v1057
        %v1119 = vunpack.c.l.bf16 %v1058
        %v1120 = vunpack.c.h.bf16 %v1058
        %v1121 = vunpack.c.l.bf16 %v1059
        %v1122 = vunpack.c.h.bf16 %v1059
        %v1123 = vunpack.c.l.bf16 %v1060
        %v1124 = vunpack.c.h.bf16 %v1060
        %v1125 = vld [vmem:[%s345] sm:$0xf]
        %v1126 = vld [vmem:[%s3] sm:$0xff]
        %1128 = vset.pattern.permute.xlu0 0
        %1129 = vperm.xlu0 %1128, %v1126
        %v1130 = vpop.permute.xlu0 %1129
        %v1134 = vunpack.c.l.s4 1983009808
        %v1135 = vunpack.c.0.s8 %v1134
        %v1136 = vlaneseq
        %v1137 = vshrl.u32 %v1136, 7
        %v1138 = vsub.s32 %v1135, %v1137
        %v1139 = vrot.slane %v1125, %v1138
        %v1140 = vcombine.high %v1139, %v1139
        %1143 = vmatprep.subr.mxu0 %v413
        %1144 = vmatpush1.msra.mxu0 %v412
        %1145 = vmatprep.subr.mxu0 %v411
        %1146 = vmatpush1.msra.mxu0 %v410
        %1147 = vmatprep.subr.mxu0 %v409
        %1148 = vmatpush1.msra.mxu0 %v408
        %1149 = vmatprep.subr.mxu0 %v407
        %1150 = vmatpush1.msra.mxu0 %v406
        %1151 = vmatprep.subr.mxu0 %v405
        %1152 = vmatpush1.msra.mxu0 %v404
        %1153 = vmatprep.subr.mxu0 %v403
        %1154 = vmatpush1.msra.mxu0 %v402
        %1155 = vmatprep.subr.mxu0 %v401
        %1156 = vmatpush1.msra.mxu0 %v400
        %1157 = vmatprep.subr.mxu0 %v399
        %1158 = vmatpush1.msra.mxu0 %v398
        %1159 = vmatprep.subr.mxu0 %v397
        %1160 = vmatpush1.msra.mxu0 %v396
        %1161 = vmatprep.subr.mxu0 %v395
        %1162 = vmatpush1.msra.mxu0 %v394
        %1163 = vmatprep.subr.mxu0 %v393
        %1164 = vmatpush1.msra.mxu0 %v392
        %1165 = vmatprep.subr.mxu0 %v391
        %1166 = vmatpush1.msra.mxu0 %v390
        %1167 = vmatprep.subr.mxu0 %v389
        %1168 = vmatpush1.msra.mxu0 %v388
        %1169 = vmatprep.subr.mxu0 %v387
        %1170 = vmatpush1.msra.mxu0 %v386
        %1171 = vmatprep.subr.mxu0 %v385
        %1172 = vmatpush1.msra.mxu0 %v384
        %1173 = vmatprep.subr.mxu0 %v383
        %1174 = vmatpush1.msra.mxu0 %v382
        %1175 = vmatprep.subr.mxu0 %v445
        %1176 = vmatpush2.msra.mxu0 %v444
        %1177 = vmatprep.subr.mxu0 %v443
        %1178 = vmatpush2.msra.mxu0 %v442
        %1179 = vmatprep.subr.mxu0 %v441
        %1180 = vmatpush2.msra.mxu0 %v440
        %1181 = vmatprep.subr.mxu0 %v439
        %1182 = vmatpush2.msra.mxu0 %v438
        %1183 = vmatprep.subr.mxu0 %v437
        %1184 = vmatpush2.msra.mxu0 %v436
        %1185 = vmatprep.subr.mxu0 %v435
        %1186 = vmatpush2.msra.mxu0 %v434
        %1187 = vmatprep.subr.mxu0 %v433
        %1188 = vmatpush2.msra.mxu0 %v432
        %1189 = vmatprep.subr.mxu0 %v431
        %1190 = vmatpush2.msra.mxu0 %v430
        %1191 = vmatprep.subr.mxu0 %v429
        %1192 = vmatpush2.msra.mxu0 %v428
        %1193 = vmatprep.subr.mxu0 %v427
        %1194 = vmatpush2.msra.mxu0 %v426
        %1195 = vmatprep.subr.mxu0 %v425
        %1196 = vmatpush2.msra.mxu0 %v424
        %1197 = vmatprep.subr.mxu0 %v423
        %1198 = vmatpush2.msra.mxu0 %v422
        %1199 = vmatprep.subr.mxu0 %v421
        %1200 = vmatpush2.msra.mxu0 %v420
        %1201 = vmatprep.subr.mxu0 %v419
        %1202 = vmatpush2.msra.mxu0 %v418
        %1203 = vmatprep.subr.mxu0 %v417
        %1204 = vmatpush2.msra.mxu0 %v416
        %1205 = vmatprep.subr.mxu0 %v415
        %1206 = vmatpush2.msra.mxu0 %v414
        %1207 = vmatprep.mubr.f32.mxu0 %v1140
        %1208 = vmatmul.mubr.f32.gmra.mxu0 %v1139
        %v1209 = vpop.f32.mrf.mxu0
        %v1210 = vadd.f32 0.0, %v1209
        %v1211 = vpop.f32.mrf.mxu0
        %v1212 = vadd.f32 0.0, %v1211
        %1213 = vdwg.mxu0
        %v1214 = vld [vmem:[%s2] sm:$0xff]
        %vm1215 = vcmask 15360
        %v1217 = vsel %vm1215, %v1214, 0
        %vm1219 = vcmask 1041408
        %v1221 = vsel %vm1219, %v1210, 0
        %v1224 = vsel %vm1219, %v1212, 0
        %1226 = vmatprep.subr.mxu0 0.0
        %1227 = vmatpush1.msra.mxu0 0.0
        %1228 = vmatprep.subr.mxu0 0.0
        %1229 = vmatpush1.msra.mxu0 0.0
        %1230 = vmatprep.subr.mxu0 0.0
        %1231 = vmatpush1.msra.mxu0 0.0
        %1232 = vmatprep.subr.mxu0 0.0
        %1233 = vmatpush1.msra.mxu0 0.0
        %1234 = vmatprep.subr.mxu0 0.0
        %1235 = vmatpush1.msra.mxu0 0.0
        %1236 = vmatprep.subr.mxu0 0.0
        %1237 = vmatpush1.msra.mxu0 0.0
        %1238 = vmatprep.subr.mxu0 0.0
        %1239 = vmatpush1.msra.mxu0 0.0
        %1240 = vmatprep.subr.mxu0 0.0
        %1241 = vmatpush1.msra.mxu0 0.0
        %1242 = vmatprep.subr.mxu0 0.0
        %1243 = vmatpush1.msra.mxu0 0.0
        %1244 = vmatprep.subr.mxu0 0.0
        %1245 = vmatpush1.msra.mxu0 0.0
        %1246 = vmatprep.subr.mxu0 0.0
        %1247 = vmatpush1.msra.mxu0 0.0
        %1248 = vmatprep.subr.mxu0 0.0
        %1249 = vmatpush1.msra.mxu0 0.0
        %1250 = vmatprep.subr.mxu0 0.0
        %1251 = vmatpush1.msra.mxu0 0.0
        %1252 = vmatprep.subr.mxu0 0.0
        %1253 = vmatpush1.msra.mxu0 0.0
        %1254 = vmatprep.subr.mxu0 0.0
        %1255 = vmatpush1.msra.mxu0 0.0
        %1256 = vmatprep.subr.mxu0 %v1224
        %1257 = vmatpush1.msra.mxu0 %v1221
        %1258 = vmatprep.subr.mxu0 0.0
        %1259 = vmatpush2.msra.mxu0 0.0
        %1260 = vmatprep.subr.mxu0 0.0
        %1261 = vmatpush2.msra.mxu0 0.0
        %1262 = vmatprep.subr.mxu0 0.0
        %1263 = vmatpush2.msra.mxu0 0.0
        %1264 = vmatprep.subr.mxu0 0.0
        %1265 = vmatpush2.msra.mxu0 0.0
        %1266 = vmatprep.subr.mxu0 0.0
        %1267 = vmatpush2.msra.mxu0 0.0
        %1268 = vmatprep.subr.mxu0 0.0
        %1269 = vmatpush2.msra.mxu0 0.0
        %1270 = vmatprep.subr.mxu0 0.0
        %1271 = vmatpush2.msra.mxu0 0.0
        %1272 = vmatprep.subr.mxu0 0.0
        %1273 = vmatpush2.msra.mxu0 0.0
        %1274 = vmatprep.subr.mxu0 0.0
        %1275 = vmatpush2.msra.mxu0 0.0
        %1276 = vmatprep.subr.mxu0 0.0
        %1277 = vmatpush2.msra.mxu0 0.0
        %1278 = vmatprep.subr.mxu0 0.0
        %1279 = vmatpush2.msra.mxu0 0.0
        %1280 = vmatprep.subr.mxu0 0.0
        %1281 = vmatpush2.msra.mxu0 0.0
        %1282 = vmatprep.subr.mxu0 0.0
        %1283 = vmatpush2.msra.mxu0 0.0
        %1284 = vmatprep.subr.mxu0 0.0
        %1285 = vmatpush2.msra.mxu0 0.0
        %1286 = vmatprep.subr.mxu0 0.0
        %1287 = vmatpush2.msra.mxu0 0.0
        %1288 = vmatprep.subr.mxu0 0.0
        %1289 = vmatpush2.msra.mxu0 0.0
        %1290 = vmatprep.mubr.f32.mxu0 0.0
        %1291 = vmatmul.mubr.f32.gmra.mxu0 %v1217
        %v1292 = vpop.f32.mrf.mxu0
        %v1293 = vadd.f32 0.0, %v1292
        %v1294 = vpop.f32.mrf.mxu0
        %v1295 = vadd.f32 0.0, %v1294
        %1296 = vdwg.mxu0
        %v1297 = vadd.f32 %v1130, %v1293
        %v1298 = vadd.f32 %v1130, %v1295
        %1299 = vmatprep.subr.mxu0 %v510
        %1300 = vmatpush1.msra.mxu0 %v509
        %1301 = vmatprep.subr.mxu0 %v508
        %1302 = vmatpush1.msra.mxu0 %v507
        %1303 = vmatprep.subr.mxu0 %v506
        %1304 = vmatpush1.msra.mxu0 %v505
        %1305 = vmatprep.subr.mxu0 %v504
        %1306 = vmatpush1.msra.mxu0 %v503
        %1307 = vmatprep.subr.mxu0 %v502
        %1308 = vmatpush1.msra.mxu0 %v501
        %1309 = vmatprep.subr.mxu0 %v500
        %1310 = vmatpush1.msra.mxu0 %v499
        %1311 = vmatprep.subr.mxu0 %v498
        %1312 = vmatpush1.msra.mxu0 %v497
        %1313 = vmatprep.subr.mxu0 %v496
        %1314 = vmatpush1.msra.mxu0 %v495
        %1315 = vmatprep.subr.mxu0 %v494
        %1316 = vmatpush1.msra.mxu0 %v493
        %1317 = vmatprep.subr.mxu0 %v492
        %1318 = vmatpush1.msra.mxu0 %v491
        %1319 = vmatprep.subr.mxu0 %v490
        %1320 = vmatpush1.msra.mxu0 %v489
        %1321 = vmatprep.subr.mxu0 %v488
        %1322 = vmatpush1.msra.mxu0 %v487
        %1323 = vmatprep.subr.mxu0 %v486
        %1324 = vmatpush1.msra.mxu0 %v485
        %1325 = vmatprep.subr.mxu0 %v484
        %1326 = vmatpush1.msra.mxu0 %v483
        %1327 = vmatprep.subr.mxu0 %v482
        %1328 = vmatpush1.msra.mxu0 %v481
        %1329 = vmatprep.subr.mxu0 %v480
        %1330 = vmatpush1.msra.mxu0 %v479
        %1331 = vmatprep.subr.mxu0 %v542
        %1332 = vmatpush2.msra.mxu0 %v541
        %1333 = vmatprep.subr.mxu0 %v540
        %1334 = vmatpush2.msra.mxu0 %v539
        %1335 = vmatprep.subr.mxu0 %v538
        %1336 = vmatpush2.msra.mxu0 %v537
        %1337 = vmatprep.subr.mxu0 %v536
        %1338 = vmatpush2.msra.mxu0 %v535
        %1339 = vmatprep.subr.mxu0 %v534
        %1340 = vmatpush2.msra.mxu0 %v533
        %1341 = vmatprep.subr.mxu0 %v532
        %1342 = vmatpush2.msra.mxu0 %v531
        %1343 = vmatprep.subr.mxu0 %v530
        %1344 = vmatpush2.msra.mxu0 %v529
        %1345 = vmatprep.subr.mxu0 %v528
        %1346 = vmatpush2.msra.mxu0 %v527
        %1347 = vmatprep.subr.mxu0 %v526
        %1348 = vmatpush2.msra.mxu0 %v525
        %1349 = vmatprep.subr.mxu0 %v524
        %1350 = vmatpush2.msra.mxu0 %v523
        %1351 = vmatprep.subr.mxu0 %v522
        %1352 = vmatpush2.msra.mxu0 %v521
        %1353 = vmatprep.subr.mxu0 %v520
        %1354 = vmatpush2.msra.mxu0 %v519
        %1355 = vmatprep.subr.mxu0 %v518
        %1356 = vmatpush2.msra.mxu0 %v517
        %1357 = vmatprep.subr.mxu0 %v516
        %1358 = vmatpush2.msra.mxu0 %v515
        %1359 = vmatprep.subr.mxu0 %v514
        %1360 = vmatpush2.msra.mxu0 %v513
        %1361 = vmatprep.subr.mxu0 %v512
        %1362 = vmatpush2.msra.mxu0 %v511
        %1363 = vmatprep.mubr.f32.mxu0 %v1140
        %1364 = vmatmul.mubr.f32.gmra.mxu0 %v1139
        %v1365 = vpop.f32.mrf.mxu0
        %v1366 = vadd.f32 0.0, %v1365
        %v1367 = vpop.f32.mrf.mxu0
        %v1368 = vadd.f32 0.0, %v1367
        %1369 = vdwg.mxu0
        %s1370 = scalar_lea.vmem %s2, 8
        %v1371 = vld [vmem:[%s1370] sm:$0xff]
        %v1373 = vsel %vm1215, %v1371, 0
        %v1376 = vsel %vm1219, %v1366, 0
        %v1379 = vsel %vm1219, %v1368, 0
        %1381 = vmatprep.subr.mxu0 0.0
        %1382 = vmatpush1.msra.mxu0 0.0
        %1383 = vmatprep.subr.mxu0 0.0
        %1384 = vmatpush1.msra.mxu0 0.0
        %1385 = vmatprep.subr.mxu0 0.0
        %1386 = vmatpush1.msra.mxu0 0.0
        %1387 = vmatprep.subr.mxu0 0.0
        %1388 = vmatpush1.msra.mxu0 0.0
        %1389 = vmatprep.subr.mxu0 0.0
        %1390 = vmatpush1.msra.mxu0 0.0
        %1391 = vmatprep.subr.mxu0 0.0
        %1392 = vmatpush1.msra.mxu0 0.0
        %1393 = vmatprep.subr.mxu0 0.0
        %1394 = vmatpush1.msra.mxu0 0.0
        %1395 = vmatprep.subr.mxu0 0.0
        %1396 = vmatpush1.msra.mxu0 0.0
        %1397 = vmatprep.subr.mxu0 0.0
        %1398 = vmatpush1.msra.mxu0 0.0
        %1399 = vmatprep.subr.mxu0 0.0
        %1400 = vmatpush1.msra.mxu0 0.0
        %1401 = vmatprep.subr.mxu0 0.0
        %1402 = vmatpush1.msra.mxu0 0.0
        %1403 = vmatprep.subr.mxu0 0.0
        %1404 = vmatpush1.msra.mxu0 0.0
        %1405 = vmatprep.subr.mxu0 0.0
        %1406 = vmatpush1.msra.mxu0 0.0
        %1407 = vmatprep.subr.mxu0 0.0
        %1408 = vmatpush1.msra.mxu0 0.0
        %1409 = vmatprep.subr.mxu0 0.0
        %1410 = vmatpush1.msra.mxu0 0.0
        %1411 = vmatprep.subr.mxu0 %v1379
        %1412 = vmatpush1.msra.mxu0 %v1376
        %1413 = vmatprep.subr.mxu0 0.0
        %1414 = vmatpush2.msra.mxu0 0.0
        %1415 = vmatprep.subr.mxu0 0.0
        %1416 = vmatpush2.msra.mxu0 0.0
        %1417 = vmatprep.subr.mxu0 0.0
        %1418 = vmatpush2.msra.mxu0 0.0
        %1419 = vmatprep.subr.mxu0 0.0
        %1420 = vmatpush2.msra.mxu0 0.0
        %1421 = vmatprep.subr.mxu0 0.0
        %1422 = vmatpush2.msra.mxu0 0.0
        %1423 = vmatprep.subr.mxu0 0.0
        %1424 = vmatpush2.msra.mxu0 0.0
        %1425 = vmatprep.subr.mxu0 0.0
        %1426 = vmatpush2.msra.mxu0 0.0
        %1427 = vmatprep.subr.mxu0 0.0
        %1428 = vmatpush2.msra.mxu0 0.0
        %1429 = vmatprep.subr.mxu0 0.0
        %1430 = vmatpush2.msra.mxu0 0.0
        %1431 = vmatprep.subr.mxu0 0.0
        %1432 = vmatpush2.msra.mxu0 0.0
        %1433 = vmatprep.subr.mxu0 0.0
        %1434 = vmatpush2.msra.mxu0 0.0
        %1435 = vmatprep.subr.mxu0 0.0
        %1436 = vmatpush2.msra.mxu0 0.0
        %1437 = vmatprep.subr.mxu0 0.0
        %1438 = vmatpush2.msra.mxu0 0.0
        %1439 = vmatprep.subr.mxu0 0.0
        %1440 = vmatpush2.msra.mxu0 0.0
        %1441 = vmatprep.subr.mxu0 0.0
        %1442 = vmatpush2.msra.mxu0 0.0
        %1443 = vmatprep.subr.mxu0 0.0
        %1444 = vmatpush2.msra.mxu0 0.0
        %1445 = vmatprep.mubr.f32.mxu0 0.0
        %1446 = vmatmul.mubr.f32.gmra.mxu0 %v1373
        %v1447 = vpop.f32.mrf.mxu0
        %v1448 = vadd.f32 0.0, %v1447
        %v1449 = vpop.f32.mrf.mxu0
        %v1450 = vadd.f32 0.0, %v1449
        %1451 = vdwg.mxu0
        %v1452 = vadd.f32 %v1297, %v1448
        %v1453 = vadd.f32 %v1298, %v1450
        %1454 = vmatprep.subr.mxu0 %v607
        %1455 = vmatpush1.msra.mxu0 %v606
        %1456 = vmatprep.subr.mxu0 %v605
        %1457 = vmatpush1.msra.mxu0 %v604
        %1458 = vmatprep.subr.mxu0 %v603
        %1459 = vmatpush1.msra.mxu0 %v602
        %1460 = vmatprep.subr.mxu0 %v601
        %1461 = vmatpush1.msra.mxu0 %v600
        %1462 = vmatprep.subr.mxu0 %v599
        %1463 = vmatpush1.msra.mxu0 %v598
        %1464 = vmatprep.subr.mxu0 %v597
        %1465 = vmatpush1.msra.mxu0 %v596
        %1466 = vmatprep.subr.mxu0 %v595
        %1467 = vmatpush1.msra.mxu0 %v594
        %1468 = vmatprep.subr.mxu0 %v593
        %1469 = vmatpush1.msra.mxu0 %v592
        %1470 = vmatprep.subr.mxu0 %v591
        %1471 = vmatpush1.msra.mxu0 %v590
        %1472 = vmatprep.subr.mxu0 %v589
        %1473 = vmatpush1.msra.mxu0 %v588
        %1474 = vmatprep.subr.mxu0 %v587
        %1475 = vmatpush1.msra.mxu0 %v586
        %1476 = vmatprep.subr.mxu0 %v585
        %1477 = vmatpush1.msra.mxu0 %v584
        %1478 = vmatprep.subr.mxu0 %v583
        %1479 = vmatpush1.msra.mxu0 %v582
        %1480 = vmatprep.subr.mxu0 %v581
        %1481 = vmatpush1.msra.mxu0 %v580
        %1482 = vmatprep.subr.mxu0 %v579
        %1483 = vmatpush1.msra.mxu0 %v578
        %1484 = vmatprep.subr.mxu0 %v577
        %1485 = vmatpush1.msra.mxu0 %v576
        %1486 = vmatprep.subr.mxu0 %v639
        %1487 = vmatpush2.msra.mxu0 %v638
        %1488 = vmatprep.subr.mxu0 %v637
        %1489 = vmatpush2.msra.mxu0 %v636
        %1490 = vmatprep.subr.mxu0 %v635
        %1491 = vmatpush2.msra.mxu0 %v634
        %1492 = vmatprep.subr.mxu0 %v633
        %1493 = vmatpush2.msra.mxu0 %v632
        %1494 = vmatprep.subr.mxu0 %v631
        %1495 = vmatpush2.msra.mxu0 %v630
        %1496 = vmatprep.subr.mxu0 %v629
        %1497 = vmatpush2.msra.mxu0 %v628
        %1498 = vmatprep.subr.mxu0 %v627
        %1499 = vmatpush2.msra.mxu0 %v626
        %1500 = vmatprep.subr.mxu0 %v625
        %1501 = vmatpush2.msra.mxu0 %v624
        %1502 = vmatprep.subr.mxu0 %v623
        %1503 = vmatpush2.msra.mxu0 %v622
        %1504 = vmatprep.subr.mxu0 %v621
        %1505 = vmatpush2.msra.mxu0 %v620
        %1506 = vmatprep.subr.mxu0 %v619
        %1507 = vmatpush2.msra.mxu0 %v618
        %1508 = vmatprep.subr.mxu0 %v617
        %1509 = vmatpush2.msra.mxu0 %v616
        %1510 = vmatprep.subr.mxu0 %v615
        %1511 = vmatpush2.msra.mxu0 %v614
        %1512 = vmatprep.subr.mxu0 %v613
        %1513 = vmatpush2.msra.mxu0 %v612
        %1514 = vmatprep.subr.mxu0 %v611
        %1515 = vmatpush2.msra.mxu0 %v610
        %1516 = vmatprep.subr.mxu0 %v609
        %1517 = vmatpush2.msra.mxu0 %v608
        %1518 = vmatprep.mubr.f32.mxu0 %v1140
        %1519 = vmatmul.mubr.f32.gmra.mxu0 %v1139
        %v1520 = vpop.f32.mrf.mxu0
        %v1521 = vadd.f32 0.0, %v1520
        %v1522 = vpop.f32.mrf.mxu0
        %v1523 = vadd.f32 0.0, %v1522
        %1524 = vdwg.mxu0
        %s1525 = scalar_lea.vmem %s2, 16
        %v1526 = vld [vmem:[%s1525] sm:$0xff]
        %v1528 = vsel %vm1215, %v1526, 0
        %v1531 = vsel %vm1219, %v1521, 0
        %v1534 = vsel %vm1219, %v1523, 0
        %1536 = vmatprep.subr.mxu0 0.0
        %1537 = vmatpush1.msra.mxu0 0.0
        %1538 = vmatprep.subr.mxu0 0.0
        %1539 = vmatpush1.msra.mxu0 0.0
        %1540 = vmatprep.subr.mxu0 0.0
        %1541 = vmatpush1.msra.mxu0 0.0
        %1542 = vmatprep.subr.mxu0 0.0
        %1543 = vmatpush1.msra.mxu0 0.0
        %1544 = vmatprep.subr.mxu0 0.0
        %1545 = vmatpush1.msra.mxu0 0.0
        %1546 = vmatprep.subr.mxu0 0.0
        %1547 = vmatpush1.msra.mxu0 0.0
        %1548 = vmatprep.subr.mxu0 0.0
        %1549 = vmatpush1.msra.mxu0 0.0
        %1550 = vmatprep.subr.mxu0 0.0
        %1551 = vmatpush1.msra.mxu0 0.0
        %1552 = vmatprep.subr.mxu0 0.0
        %1553 = vmatpush1.msra.mxu0 0.0
        %1554 = vmatprep.subr.mxu0 0.0
        %1555 = vmatpush1.msra.mxu0 0.0
        %1556 = vmatprep.subr.mxu0 0.0
        %1557 = vmatpush1.msra.mxu0 0.0
        %1558 = vmatprep.subr.mxu0 0.0
        %1559 = vmatpush1.msra.mxu0 0.0
        %1560 = vmatprep.subr.mxu0 0.0
        %1561 = vmatpush1.msra.mxu0 0.0
        %1562 = vmatprep.subr.mxu0 0.0
        %1563 = vmatpush1.msra.mxu0 0.0
        %1564 = vmatprep.subr.mxu0 0.0
        %1565 = vmatpush1.msra.mxu0 0.0
        %1566 = vmatprep.subr.mxu0 %v1534
        %1567 = vmatpush1.msra.mxu0 %v1531
        %1568 = vmatprep.subr.mxu0 0.0
        %1569 = vmatpush2.msra.mxu0 0.0
        %1570 = vmatprep.subr.mxu0 0.0
        %1571 = vmatpush2.msra.mxu0 0.0
        %1572 = vmatprep.subr.mxu0 0.0
        %1573 = vmatpush2.msra.mxu0 0.0
        %1574 = vmatprep.subr.mxu0 0.0
        %1575 = vmatpush2.msra.mxu0 0.0
        %1576 = vmatprep.subr.mxu0 0.0
        %1577 = vmatpush2.msra.mxu0 0.0
        %1578 = vmatprep.subr.mxu0 0.0
        %1579 = vmatpush2.msra.mxu0 0.0
        %1580 = vmatprep.subr.mxu0 0.0
        %1581 = vmatpush2.msra.mxu0 0.0
        %1582 = vmatprep.subr.mxu0 0.0
        %1583 = vmatpush2.msra.mxu0 0.0
        %1584 = vmatprep.subr.mxu0 0.0
        %1585 = vmatpush2.msra.mxu0 0.0
        %1586 = vmatprep.subr.mxu0 0.0
        %1587 = vmatpush2.msra.mxu0 0.0
        %1588 = vmatprep.subr.mxu0 0.0
        %1589 = vmatpush2.msra.mxu0 0.0
        %1590 = vmatprep.subr.mxu0 0.0
        %1591 = vmatpush2.msra.mxu0 0.0
        %1592 = vmatprep.subr.mxu0 0.0
        %1593 = vmatpush2.msra.mxu0 0.0
        %1594 = vmatprep.subr.mxu0 0.0
        %1595 = vmatpush2.msra.mxu0 0.0
        %1596 = vmatprep.subr.mxu0 0.0
        %1597 = vmatpush2.msra.mxu0 0.0
        %1598 = vmatprep.subr.mxu0 0.0
        %1599 = vmatpush2.msra.mxu0 0.0
        %1600 = vmatprep.mubr.f32.mxu0 0.0
        %1601 = vmatmul.mubr.f32.gmra.mxu0 %v1528
        %v1602 = vpop.f32.mrf.mxu0
        %v1603 = vadd.f32 0.0, %v1602
        %v1604 = vpop.f32.mrf.mxu0
        %v1605 = vadd.f32 0.0, %v1604
        %1606 = vdwg.mxu0
        %v1607 = vadd.f32 %v1452, %v1603
        %v1608 = vadd.f32 %v1453, %v1605
        %1609 = vmatprep.subr.mxu0 %v704
        %1610 = vmatpush1.msra.mxu0 %v703
        %1611 = vmatprep.subr.mxu0 %v702
        %1612 = vmatpush1.msra.mxu0 %v701
        %1613 = vmatprep.subr.mxu0 %v700
        %1614 = vmatpush1.msra.mxu0 %v699
        %1615 = vmatprep.subr.mxu0 %v698
        %1616 = vmatpush1.msra.mxu0 %v697
        %1617 = vmatprep.subr.mxu0 %v696
        %1618 = vmatpush1.msra.mxu0 %v695
        %1619 = vmatprep.subr.mxu0 %v694
        %1620 = vmatpush1.msra.mxu0 %v693
        %1621 = vmatprep.subr.mxu0 %v692
        %1622 = vmatpush1.msra.mxu0 %v691
        %1623 = vmatprep.subr.mxu0 %v690
        %1624 = vmatpush1.msra.mxu0 %v689
        %1625 = vmatprep.subr.mxu0 %v688
        %1626 = vmatpush1.msra.mxu0 %v687
        %1627 = vmatprep.subr.mxu0 %v686
        %1628 = vmatpush1.msra.mxu0 %v685
        %1629 = vmatprep.subr.mxu0 %v684
        %1630 = vmatpush1.msra.mxu0 %v683
        %1631 = vmatprep.subr.mxu0 %v682
        %1632 = vmatpush1.msra.mxu0 %v681
        %1633 = vmatprep.subr.mxu0 %v680
        %1634 = vmatpush1.msra.mxu0 %v679
        %1635 = vmatprep.subr.mxu0 %v678
        %1636 = vmatpush1.msra.mxu0 %v677
        %1637 = vmatprep.subr.mxu0 %v676
        %1638 = vmatpush1.msra.mxu0 %v675
        %1639 = vmatprep.subr.mxu0 %v674
        %1640 = vmatpush1.msra.mxu0 %v673
        %1641 = vmatprep.subr.mxu0 %v736
        %1642 = vmatpush2.msra.mxu0 %v735
        %1643 = vmatprep.subr.mxu0 %v734
        %1644 = vmatpush2.msra.mxu0 %v733
        %1645 = vmatprep.subr.mxu0 %v732
        %1646 = vmatpush2.msra.mxu0 %v731
        %1647 = vmatprep.subr.mxu0 %v730
        %1648 = vmatpush2.msra.mxu0 %v729
        %1649 = vmatprep.subr.mxu0 %v728
        %1650 = vmatpush2.msra.mxu0 %v727
        %1651 = vmatprep.subr.mxu0 %v726
        %1652 = vmatpush2.msra.mxu0 %v725
        %1653 = vmatprep.subr.mxu0 %v724
        %1654 = vmatpush2.msra.mxu0 %v723
        %1655 = vmatprep.subr.mxu0 %v722
        %1656 = vmatpush2.msra.mxu0 %v721
        %1657 = vmatprep.subr.mxu0 %v720
        %1658 = vmatpush2.msra.mxu0 %v719
        %1659 = vmatprep.subr.mxu0 %v718
        %1660 = vmatpush2.msra.mxu0 %v717
        %1661 = vmatprep.subr.mxu0 %v716
        %1662 = vmatpush2.msra.mxu0 %v715
        %1663 = vmatprep.subr.mxu0 %v714
        %1664 = vmatpush2.msra.mxu0 %v713
        %1665 = vmatprep.subr.mxu0 %v712
        %1666 = vmatpush2.msra.mxu0 %v711
        %1667 = vmatprep.subr.mxu0 %v710
        %1668 = vmatpush2.msra.mxu0 %v709
        %1669 = vmatprep.subr.mxu0 %v708
        %1670 = vmatpush2.msra.mxu0 %v707
        %1671 = vmatprep.subr.mxu0 %v706
        %1672 = vmatpush2.msra.mxu0 %v705
        %1673 = vmatprep.mubr.f32.mxu0 %v1140
        %1674 = vmatmul.mubr.f32.gmra.mxu0 %v1139
        %v1675 = vpop.f32.mrf.mxu0
        %v1676 = vadd.f32 0.0, %v1675
        %v1677 = vpop.f32.mrf.mxu0
        %v1678 = vadd.f32 0.0, %v1677
        %1679 = vdwg.mxu0
        %s1680 = scalar_lea.vmem %s2, 24
        %v1681 = vld [vmem:[%s1680] sm:$0xff]
        %v1683 = vsel %vm1215, %v1681, 0
        %v1686 = vsel %vm1219, %v1676, 0
        %v1689 = vsel %vm1219, %v1678, 0
        %1691 = vmatprep.subr.mxu0 0.0
        %1692 = vmatpush1.msra.mxu0 0.0
        %1693 = vmatprep.subr.mxu0 0.0
        %1694 = vmatpush1.msra.mxu0 0.0
        %1695 = vmatprep.subr.mxu0 0.0
        %1696 = vmatpush1.msra.mxu0 0.0
        %1697 = vmatprep.subr.mxu0 0.0
        %1698 = vmatpush1.msra.mxu0 0.0
        %1699 = vmatprep.subr.mxu0 0.0
        %1700 = vmatpush1.msra.mxu0 0.0
        %1701 = vmatprep.subr.mxu0 0.0
        %1702 = vmatpush1.msra.mxu0 0.0
        %1703 = vmatprep.subr.mxu0 0.0
        %1704 = vmatpush1.msra.mxu0 0.0
        %1705 = vmatprep.subr.mxu0 0.0
        %1706 = vmatpush1.msra.mxu0 0.0
        %1707 = vmatprep.subr.mxu0 0.0
        %1708 = vmatpush1.msra.mxu0 0.0
        %1709 = vmatprep.subr.mxu0 0.0
        %1710 = vmatpush1.msra.mxu0 0.0
        %1711 = vmatprep.subr.mxu0 0.0
        %1712 = vmatpush1.msra.mxu0 0.0
        %1713 = vmatprep.subr.mxu0 0.0
        %1714 = vmatpush1.msra.mxu0 0.0
        %1715 = vmatprep.subr.mxu0 0.0
        %1716 = vmatpush1.msra.mxu0 0.0
        %1717 = vmatprep.subr.mxu0 0.0
        %1718 = vmatpush1.msra.mxu0 0.0
        %1719 = vmatprep.subr.mxu0 0.0
        %1720 = vmatpush1.msra.mxu0 0.0
        %1721 = vmatprep.subr.mxu0 %v1689
        %1722 = vmatpush1.msra.mxu0 %v1686
        %1723 = vmatprep.subr.mxu0 0.0
        %1724 = vmatpush2.msra.mxu0 0.0
        %1725 = vmatprep.subr.mxu0 0.0
        %1726 = vmatpush2.msra.mxu0 0.0
        %1727 = vmatprep.subr.mxu0 0.0
        %1728 = vmatpush2.msra.mxu0 0.0
        %1729 = vmatprep.subr.mxu0 0.0
        %1730 = vmatpush2.msra.mxu0 0.0
        %1731 = vmatprep.subr.mxu0 0.0
        %1732 = vmatpush2.msra.mxu0 0.0
        %1733 = vmatprep.subr.mxu0 0.0
        %1734 = vmatpush2.msra.mxu0 0.0
        %1735 = vmatprep.subr.mxu0 0.0
        %1736 = vmatpush2.msra.mxu0 0.0
        %1737 = vmatprep.subr.mxu0 0.0
        %1738 = vmatpush2.msra.mxu0 0.0
        %1739 = vmatprep.subr.mxu0 0.0
        %1740 = vmatpush2.msra.mxu0 0.0
        %1741 = vmatprep.subr.mxu0 0.0
        %1742 = vmatpush2.msra.mxu0 0.0
        %1743 = vmatprep.subr.mxu0 0.0
        %1744 = vmatpush2.msra.mxu0 0.0
        %1745 = vmatprep.subr.mxu0 0.0
        %1746 = vmatpush2.msra.mxu0 0.0
        %1747 = vmatprep.subr.mxu0 0.0
        %1748 = vmatpush2.msra.mxu0 0.0
        %1749 = vmatprep.subr.mxu0 0.0
        %1750 = vmatpush2.msra.mxu0 0.0
        %1751 = vmatprep.subr.mxu0 0.0
        %1752 = vmatpush2.msra.mxu0 0.0
        %1753 = vmatprep.subr.mxu0 0.0
        %1754 = vmatpush2.msra.mxu0 0.0
        %1755 = vmatprep.mubr.f32.mxu0 0.0
        %1756 = vmatmul.mubr.f32.gmra.mxu0 %v1683
        %v1757 = vpop.f32.mrf.mxu0
        %v1758 = vadd.f32 0.0, %v1757
        %v1759 = vpop.f32.mrf.mxu0
        %v1760 = vadd.f32 0.0, %v1759
        %1761 = vdwg.mxu0
        %v1762 = vadd.f32 %v1607, %v1758
        %v1763 = vadd.f32 %v1608, %v1760
        %s1764 = scalar_lea.vmem %s2, 32
        %v1765 = vld [vmem:[%s1764] sm:$0xff]
        %v1767 = vsel %vm1215, %v1765, 0
        %v1769 = vsel %vm1219, %v1139, 0
        %v1771 = vsel %vm1219, %v1140, 0
        %1773 = vmatprep.subr.mxu0 0.0
        %1774 = vmatpush1.msra.mxu0 0.0
        %1775 = vmatprep.subr.mxu0 0.0
        %1776 = vmatpush1.msra.mxu0 0.0
        %1777 = vmatprep.subr.mxu0 0.0
        %1778 = vmatpush1.msra.mxu0 0.0
        %1779 = vmatprep.subr.mxu0 0.0
        %1780 = vmatpush1.msra.mxu0 0.0
        %1781 = vmatprep.subr.mxu0 0.0
        %1782 = vmatpush1.msra.mxu0 0.0
        %1783 = vmatprep.subr.mxu0 0.0
        %1784 = vmatpush1.msra.mxu0 0.0
        %1785 = vmatprep.subr.mxu0 0.0
        %1786 = vmatpush1.msra.mxu0 0.0
        %1787 = vmatprep.subr.mxu0 0.0
        %1788 = vmatpush1.msra.mxu0 0.0
        %1789 = vmatprep.subr.mxu0 0.0
        %1790 = vmatpush1.msra.mxu0 0.0
        %1791 = vmatprep.subr.mxu0 0.0
        %1792 = vmatpush1.msra.mxu0 0.0
        %1793 = vmatprep.subr.mxu0 0.0
        %1794 = vmatpush1.msra.mxu0 0.0
        %1795 = vmatprep.subr.mxu0 0.0
        %1796 = vmatpush1.msra.mxu0 0.0
        %1797 = vmatprep.subr.mxu0 0.0
        %1798 = vmatpush1.msra.mxu0 0.0
        %1799 = vmatprep.subr.mxu0 0.0
        %1800 = vmatpush1.msra.mxu0 0.0
        %1801 = vmatprep.subr.mxu0 0.0
        %1802 = vmatpush1.msra.mxu0 0.0
        %1803 = vmatprep.subr.mxu0 %v1771
        %1804 = vmatpush1.msra.mxu0 %v1769
        %1805 = vmatprep.subr.mxu0 0.0
        %1806 = vmatpush2.msra.mxu0 0.0
        %1807 = vmatprep.subr.mxu0 0.0
        %1808 = vmatpush2.msra.mxu0 0.0
        %1809 = vmatprep.subr.mxu0 0.0
        %1810 = vmatpush2.msra.mxu0 0.0
        %1811 = vmatprep.subr.mxu0 0.0
        %1812 = vmatpush2.msra.mxu0 0.0
        %1813 = vmatprep.subr.mxu0 0.0
        %1814 = vmatpush2.msra.mxu0 0.0
        %1815 = vmatprep.subr.mxu0 0.0
        %1816 = vmatpush2.msra.mxu0 0.0
        %1817 = vmatprep.subr.mxu0 0.0
        %1818 = vmatpush2.msra.mxu0 0.0
        %1819 = vmatprep.subr.mxu0 0.0
        %1820 = vmatpush2.msra.mxu0 0.0
        %1821 = vmatprep.subr.mxu0 0.0
        %1822 = vmatpush2.msra.mxu0 0.0
        %1823 = vmatprep.subr.mxu0 0.0
        %1824 = vmatpush2.msra.mxu0 0.0
        %1825 = vmatprep.subr.mxu0 0.0
        %1826 = vmatpush2.msra.mxu0 0.0
        %1827 = vmatprep.subr.mxu0 0.0
        %1828 = vmatpush2.msra.mxu0 0.0
        %1829 = vmatprep.subr.mxu0 0.0
        %1830 = vmatpush2.msra.mxu0 0.0
        %1831 = vmatprep.subr.mxu0 0.0
        %1832 = vmatpush2.msra.mxu0 0.0
        %1833 = vmatprep.subr.mxu0 0.0
        %1834 = vmatpush2.msra.mxu0 0.0
        %1835 = vmatprep.subr.mxu0 0.0
        %1836 = vmatpush2.msra.mxu0 0.0
        %1837 = vmatprep.mubr.f32.mxu0 0.0
        %1838 = vmatmul.mubr.f32.gmra.mxu0 %v1767
        %v1839 = vpop.f32.mrf.mxu0
        %v1840 = vadd.f32 0.0, %v1839
        %v1841 = vpop.f32.mrf.mxu0
        %v1842 = vadd.f32 0.0, %v1841
        %1843 = vdwg.mxu0
        %v1844 = vadd.f32 %v1762, %v1840
        %v1845 = vadd.f32 %v1763, %v1842
        %1846 = vmatprep.subr.mxu0 %v801
        %1847 = vmatpush1.msra.mxu0 %v800
        %1848 = vmatprep.subr.mxu0 %v799
        %1849 = vmatpush1.msra.mxu0 %v798
        %1850 = vmatprep.subr.mxu0 %v797
        %1851 = vmatpush1.msra.mxu0 %v796
        %1852 = vmatprep.subr.mxu0 %v795
        %1853 = vmatpush1.msra.mxu0 %v794
        %1854 = vmatprep.subr.mxu0 %v793
        %1855 = vmatpush1.msra.mxu0 %v792
        %1856 = vmatprep.subr.mxu0 %v791
        %1857 = vmatpush1.msra.mxu0 %v790
        %1858 = vmatprep.subr.mxu0 %v789
        %1859 = vmatpush1.msra.mxu0 %v788
        %1860 = vmatprep.subr.mxu0 %v787
        %1861 = vmatpush1.msra.mxu0 %v786
        %1862 = vmatprep.subr.mxu0 %v785
        %1863 = vmatpush1.msra.mxu0 %v784
        %1864 = vmatprep.subr.mxu0 %v783
        %1865 = vmatpush1.msra.mxu0 %v782
        %1866 = vmatprep.subr.mxu0 %v781
        %1867 = vmatpush1.msra.mxu0 %v780
        %1868 = vmatprep.subr.mxu0 %v779
        %1869 = vmatpush1.msra.mxu0 %v778
        %1870 = vmatprep.subr.mxu0 %v777
        %1871 = vmatpush1.msra.mxu0 %v776
        %1872 = vmatprep.subr.mxu0 %v775
        %1873 = vmatpush1.msra.mxu0 %v774
        %1874 = vmatprep.subr.mxu0 %v773
        %1875 = vmatpush1.msra.mxu0 %v772
        %1876 = vmatprep.subr.mxu0 %v771
        %1877 = vmatpush1.msra.mxu0 %v770
        %1878 = vmatprep.subr.mxu0 %v833
        %1879 = vmatpush2.msra.mxu0 %v832
        %1880 = vmatprep.subr.mxu0 %v831
        %1881 = vmatpush2.msra.mxu0 %v830
        %1882 = vmatprep.subr.mxu0 %v829
        %1883 = vmatpush2.msra.mxu0 %v828
        %1884 = vmatprep.subr.mxu0 %v827
        %1885 = vmatpush2.msra.mxu0 %v826
        %1886 = vmatprep.subr.mxu0 %v825
        %1887 = vmatpush2.msra.mxu0 %v824
        %1888 = vmatprep.subr.mxu0 %v823
        %1889 = vmatpush2.msra.mxu0 %v822
        %1890 = vmatprep.subr.mxu0 %v821
        %1891 = vmatpush2.msra.mxu0 %v820
        %1892 = vmatprep.subr.mxu0 %v819
        %1893 = vmatpush2.msra.mxu0 %v818
        %1894 = vmatprep.subr.mxu0 %v817
        %1895 = vmatpush2.msra.mxu0 %v816
        %1896 = vmatprep.subr.mxu0 %v815
        %1897 = vmatpush2.msra.mxu0 %v814
        %1898 = vmatprep.subr.mxu0 %v813
        %1899 = vmatpush2.msra.mxu0 %v812
        %1900 = vmatprep.subr.mxu0 %v811
        %1901 = vmatpush2.msra.mxu0 %v810
        %1902 = vmatprep.subr.mxu0 %v809
        %1903 = vmatpush2.msra.mxu0 %v808
        %1904 = vmatprep.subr.mxu0 %v807
        %1905 = vmatpush2.msra.mxu0 %v806
        %1906 = vmatprep.subr.mxu0 %v805
        %1907 = vmatpush2.msra.mxu0 %v804
        %1908 = vmatprep.subr.mxu0 %v803
        %1909 = vmatpush2.msra.mxu0 %v802
        %1910 = vmatprep.mubr.f32.mxu0 %v1140
        %1911 = vmatmul.mubr.f32.gmra.mxu0 %v1139
        %v1912 = vpop.f32.mrf.mxu0
        %v1913 = vadd.f32 0.0, %v1912
        %v1914 = vpop.f32.mrf.mxu0
        %v1915 = vadd.f32 0.0, %v1914
        %1916 = vdwg.mxu0
        %s1917 = scalar_lea.vmem %s2, 40
        %v1918 = vld [vmem:[%s1917] sm:$0xff]
        %v1920 = vsel %vm1215, %v1918, 0
        %v1923 = vsel %vm1219, %v1913, 0
        %v1926 = vsel %vm1219, %v1915, 0
        %1928 = vmatprep.subr.mxu0 0.0
        %1929 = vmatpush1.msra.mxu0 0.0
        %1930 = vmatprep.subr.mxu0 0.0
        %1931 = vmatpush1.msra.mxu0 0.0
        %1932 = vmatprep.subr.mxu0 0.0
        %1933 = vmatpush1.msra.mxu0 0.0
        %1934 = vmatprep.subr.mxu0 0.0
        %1935 = vmatpush1.msra.mxu0 0.0
        %1936 = vmatprep.subr.mxu0 0.0
        %1937 = vmatpush1.msra.mxu0 0.0
        %1938 = vmatprep.subr.mxu0 0.0
        %1939 = vmatpush1.msra.mxu0 0.0
        %1940 = vmatprep.subr.mxu0 0.0
        %1941 = vmatpush1.msra.mxu0 0.0
        %1942 = vmatprep.subr.mxu0 0.0
        %1943 = vmatpush1.msra.mxu0 0.0
        %1944 = vmatprep.subr.mxu0 0.0
        %1945 = vmatpush1.msra.mxu0 0.0
        %1946 = vmatprep.subr.mxu0 0.0
        %1947 = vmatpush1.msra.mxu0 0.0
        %1948 = vmatprep.subr.mxu0 0.0
        %1949 = vmatpush1.msra.mxu0 0.0
        %1950 = vmatprep.subr.mxu0 0.0
        %1951 = vmatpush1.msra.mxu0 0.0
        %1952 = vmatprep.subr.mxu0 0.0
        %1953 = vmatpush1.msra.mxu0 0.0
        %1954 = vmatprep.subr.mxu0 0.0
        %1955 = vmatpush1.msra.mxu0 0.0
        %1956 = vmatprep.subr.mxu0 0.0
        %1957 = vmatpush1.msra.mxu0 0.0
        %1958 = vmatprep.subr.mxu0 %v1926
        %1959 = vmatpush1.msra.mxu0 %v1923
        %1960 = vmatprep.subr.mxu0 0.0
        %1961 = vmatpush2.msra.mxu0 0.0
        %1962 = vmatprep.subr.mxu0 0.0
        %1963 = vmatpush2.msra.mxu0 0.0
        %1964 = vmatprep.subr.mxu0 0.0
        %1965 = vmatpush2.msra.mxu0 0.0
        %1966 = vmatprep.subr.mxu0 0.0
        %1967 = vmatpush2.msra.mxu0 0.0
        %1968 = vmatprep.subr.mxu0 0.0
        %1969 = vmatpush2.msra.mxu0 0.0
        %1970 = vmatprep.subr.mxu0 0.0
        %1971 = vmatpush2.msra.mxu0 0.0
        %1972 = vmatprep.subr.mxu0 0.0
        %1973 = vmatpush2.msra.mxu0 0.0
        %1974 = vmatprep.subr.mxu0 0.0
        %1975 = vmatpush2.msra.mxu0 0.0
        %1976 = vmatprep.subr.mxu0 0.0
        %1977 = vmatpush2.msra.mxu0 0.0
        %1978 = vmatprep.subr.mxu0 0.0
        %1979 = vmatpush2.msra.mxu0 0.0
        %1980 = vmatprep.subr.mxu0 0.0
        %1981 = vmatpush2.msra.mxu0 0.0
        %1982 = vmatprep.subr.mxu0 0.0
        %1983 = vmatpush2.msra.mxu0 0.0
        %1984 = vmatprep.subr.mxu0 0.0
        %1985 = vmatpush2.msra.mxu0 0.0
        %1986 = vmatprep.subr.mxu0 0.0
        %1987 = vmatpush2.msra.mxu0 0.0
        %1988 = vmatprep.subr.mxu0 0.0
        %1989 = vmatpush2.msra.mxu0 0.0
        %1990 = vmatprep.subr.mxu0 0.0
        %1991 = vmatpush2.msra.mxu0 0.0
        %1992 = vmatprep.mubr.f32.mxu0 0.0
        %1993 = vmatmul.mubr.f32.gmra.mxu0 %v1920
        %v1994 = vpop.f32.mrf.mxu0
        %v1995 = vadd.f32 0.0, %v1994
        %v1996 = vpop.f32.mrf.mxu0
        %v1997 = vadd.f32 0.0, %v1996
        %1998 = vdwg.mxu0
        %v1999 = vadd.f32 %v1844, %v1995
        %v2000 = vadd.f32 %v1845, %v1997
        %2001 = vmatprep.subr.mxu0 %v898
        %2002 = vmatpush1.msra.mxu0 %v897
        %2003 = vmatprep.subr.mxu0 %v896
        %2004 = vmatpush1.msra.mxu0 %v895
        %2005 = vmatprep.subr.mxu0 %v894
        %2006 = vmatpush1.msra.mxu0 %v893
        %2007 = vmatprep.subr.mxu0 %v892
        %2008 = vmatpush1.msra.mxu0 %v891
        %2009 = vmatprep.subr.mxu0 %v890
        %2010 = vmatpush1.msra.mxu0 %v889
        %2011 = vmatprep.subr.mxu0 %v888
        %2012 = vmatpush1.msra.mxu0 %v887
        %2013 = vmatprep.subr.mxu0 %v886
        %2014 = vmatpush1.msra.mxu0 %v885
        %2015 = vmatprep.subr.mxu0 %v884
        %2016 = vmatpush1.msra.mxu0 %v883
        %2017 = vmatprep.subr.mxu0 %v882
        %2018 = vmatpush1.msra.mxu0 %v881
        %2019 = vmatprep.subr.mxu0 %v880
        %2020 = vmatpush1.msra.mxu0 %v879
        %2021 = vmatprep.subr.mxu0 %v878
        %2022 = vmatpush1.msra.mxu0 %v877
        %2023 = vmatprep.subr.mxu0 %v876
        %2024 = vmatpush1.msra.mxu0 %v875
        %2025 = vmatprep.subr.mxu0 %v874
        %2026 = vmatpush1.msra.mxu0 %v873
        %2027 = vmatprep.subr.mxu0 %v872
        %2028 = vmatpush1.msra.mxu0 %v871
        %2029 = vmatprep.subr.mxu0 %v870
        %2030 = vmatpush1.msra.mxu0 %v869
        %2031 = vmatprep.subr.mxu0 %v868
        %2032 = vmatpush1.msra.mxu0 %v867
        %2033 = vmatprep.subr.mxu0 %v930
        %2034 = vmatpush2.msra.mxu0 %v929
        %2035 = vmatprep.subr.mxu0 %v928
        %2036 = vmatpush2.msra.mxu0 %v927
        %2037 = vmatprep.subr.mxu0 %v926
        %2038 = vmatpush2.msra.mxu0 %v925
        %2039 = vmatprep.subr.mxu0 %v924
        %2040 = vmatpush2.msra.mxu0 %v923
        %2041 = vmatprep.subr.mxu0 %v922
        %2042 = vmatpush2.msra.mxu0 %v921
        %2043 = vmatprep.subr.mxu0 %v920
        %2044 = vmatpush2.msra.mxu0 %v919
        %2045 = vmatprep.subr.mxu0 %v918
        %2046 = vmatpush2.msra.mxu0 %v917
        %2047 = vmatprep.subr.mxu0 %v916
        %2048 = vmatpush2.msra.mxu0 %v915
        %2049 = vmatprep.subr.mxu0 %v914
        %2050 = vmatpush2.msra.mxu0 %v913
        %2051 = vmatprep.subr.mxu0 %v912
        %2052 = vmatpush2.msra.mxu0 %v911
        %2053 = vmatprep.subr.mxu0 %v910
        %2054 = vmatpush2.msra.mxu0 %v909
        %2055 = vmatprep.subr.mxu0 %v908
        %2056 = vmatpush2.msra.mxu0 %v907
        %2057 = vmatprep.subr.mxu0 %v906
        %2058 = vmatpush2.msra.mxu0 %v905
        %2059 = vmatprep.subr.mxu0 %v904
        %2060 = vmatpush2.msra.mxu0 %v903
        %2061 = vmatprep.subr.mxu0 %v902
        %2062 = vmatpush2.msra.mxu0 %v901
        %2063 = vmatprep.subr.mxu0 %v900
        %2064 = vmatpush2.msra.mxu0 %v899
        %2065 = vmatprep.mubr.f32.mxu0 %v1140
        %2066 = vmatmul.mubr.f32.gmra.mxu0 %v1139
        %v2067 = vpop.f32.mrf.mxu0
        %v2068 = vadd.f32 0.0, %v2067
        %v2069 = vpop.f32.mrf.mxu0
        %v2070 = vadd.f32 0.0, %v2069
        %2071 = vdwg.mxu0
        %s2072 = scalar_lea.vmem %s2, 48
        %v2073 = vld [vmem:[%s2072] sm:$0xff]
        %v2075 = vsel %vm1215, %v2073, 0
        %v2078 = vsel %vm1219, %v2068, 0
        %v2081 = vsel %vm1219, %v2070, 0
        %2083 = vmatprep.subr.mxu0 0.0
        %2084 = vmatpush1.msra.mxu0 0.0
        %2085 = vmatprep.subr.mxu0 0.0
        %2086 = vmatpush1.msra.mxu0 0.0
        %2087 = vmatprep.subr.mxu0 0.0
        %2088 = vmatpush1.msra.mxu0 0.0
        %2089 = vmatprep.subr.mxu0 0.0
        %2090 = vmatpush1.msra.mxu0 0.0
        %2091 = vmatprep.subr.mxu0 0.0
        %2092 = vmatpush1.msra.mxu0 0.0
        %2093 = vmatprep.subr.mxu0 0.0
        %2094 = vmatpush1.msra.mxu0 0.0
        %2095 = vmatprep.subr.mxu0 0.0
        %2096 = vmatpush1.msra.mxu0 0.0
        %2097 = vmatprep.subr.mxu0 0.0
        %2098 = vmatpush1.msra.mxu0 0.0
        %2099 = vmatprep.subr.mxu0 0.0
        %2100 = vmatpush1.msra.mxu0 0.0
        %2101 = vmatprep.subr.mxu0 0.0
        %2102 = vmatpush1.msra.mxu0 0.0
        %2103 = vmatprep.subr.mxu0 0.0
        %2104 = vmatpush1.msra.mxu0 0.0
        %2105 = vmatprep.subr.mxu0 0.0
        %2106 = vmatpush1.msra.mxu0 0.0
        %2107 = vmatprep.subr.mxu0 0.0
        %2108 = vmatpush1.msra.mxu0 0.0
        %2109 = vmatprep.subr.mxu0 0.0
        %2110 = vmatpush1.msra.mxu0 0.0
        %2111 = vmatprep.subr.mxu0 0.0
        %2112 = vmatpush1.msra.mxu0 0.0
        %2113 = vmatprep.subr.mxu0 %v2081
        %2114 = vmatpush1.msra.mxu0 %v2078
        %2115 = vmatprep.subr.mxu0 0.0
        %2116 = vmatpush2.msra.mxu0 0.0
        %2117 = vmatprep.subr.mxu0 0.0
        %2118 = vmatpush2.msra.mxu0 0.0
        %2119 = vmatprep.subr.mxu0 0.0
        %2120 = vmatpush2.msra.mxu0 0.0
        %2121 = vmatprep.subr.mxu0 0.0
        %2122 = vmatpush2.msra.mxu0 0.0
        %2123 = vmatprep.subr.mxu0 0.0
        %2124 = vmatpush2.msra.mxu0 0.0
        %2125 = vmatprep.subr.mxu0 0.0
        %2126 = vmatpush2.msra.mxu0 0.0
        %2127 = vmatprep.subr.mxu0 0.0
        %2128 = vmatpush2.msra.mxu0 0.0
        %2129 = vmatprep.subr.mxu0 0.0
        %2130 = vmatpush2.msra.mxu0 0.0
        %2131 = vmatprep.subr.mxu0 0.0
        %2132 = vmatpush2.msra.mxu0 0.0
        %2133 = vmatprep.subr.mxu0 0.0
        %2134 = vmatpush2.msra.mxu0 0.0
        %2135 = vmatprep.subr.mxu0 0.0
        %2136 = vmatpush2.msra.mxu0 0.0
        %2137 = vmatprep.subr.mxu0 0.0
        %2138 = vmatpush2.msra.mxu0 0.0
        %2139 = vmatprep.subr.mxu0 0.0
        %2140 = vmatpush2.msra.mxu0 0.0
        %2141 = vmatprep.subr.mxu0 0.0
        %2142 = vmatpush2.msra.mxu0 0.0
        %2143 = vmatprep.subr.mxu0 0.0
        %2144 = vmatpush2.msra.mxu0 0.0
        %2145 = vmatprep.subr.mxu0 0.0
        %2146 = vmatpush2.msra.mxu0 0.0
        %2147 = vmatprep.mubr.f32.mxu0 0.0
        %2148 = vmatmul.mubr.f32.gmra.mxu0 %v2075
        %v2149 = vpop.f32.mrf.mxu0
        %v2150 = vadd.f32 0.0, %v2149
        %v2151 = vpop.f32.mrf.mxu0
        %v2152 = vadd.f32 0.0, %v2151
        %2153 = vdwg.mxu0
        %v2154 = vadd.f32 %v1999, %v2150
        %v2155 = vadd.f32 %v2000, %v2152
        %2156 = vmatprep.subr.mxu0 %v995
        %2157 = vmatpush1.msra.mxu0 %v994
        %2158 = vmatprep.subr.mxu0 %v993
        %2159 = vmatpush1.msra.mxu0 %v992
        %2160 = vmatprep.subr.mxu0 %v991
        %2161 = vmatpush1.msra.mxu0 %v990
        %2162 = vmatprep.subr.mxu0 %v989
        %2163 = vmatpush1.msra.mxu0 %v988
        %2164 = vmatprep.subr.mxu0 %v987
        %2165 = vmatpush1.msra.mxu0 %v986
        %2166 = vmatprep.subr.mxu0 %v985
        %2167 = vmatpush1.msra.mxu0 %v984
        %2168 = vmatprep.subr.mxu0 %v983
        %2169 = vmatpush1.msra.mxu0 %v982
        %2170 = vmatprep.subr.mxu0 %v981
        %2171 = vmatpush1.msra.mxu0 %v980
        %2172 = vmatprep.subr.mxu0 %v979
        %2173 = vmatpush1.msra.mxu0 %v978
        %2174 = vmatprep.subr.mxu0 %v977
        %2175 = vmatpush1.msra.mxu0 %v976
        %2176 = vmatprep.subr.mxu0 %v975
        %2177 = vmatpush1.msra.mxu0 %v974
        %2178 = vmatprep.subr.mxu0 %v973
        %2179 = vmatpush1.msra.mxu0 %v972
        %2180 = vmatprep.subr.mxu0 %v971
        %2181 = vmatpush1.msra.mxu0 %v970
        %2182 = vmatprep.subr.mxu0 %v969
        %2183 = vmatpush1.msra.mxu0 %v968
        %2184 = vmatprep.subr.mxu0 %v967
        %2185 = vmatpush1.msra.mxu0 %v966
        %2186 = vmatprep.subr.mxu0 %v965
        %2187 = vmatpush1.msra.mxu0 %v964
        %2188 = vmatprep.subr.mxu0 %v1027
        %2189 = vmatpush2.msra.mxu0 %v1026
        %2190 = vmatprep.subr.mxu0 %v1025
        %2191 = vmatpush2.msra.mxu0 %v1024
        %2192 = vmatprep.subr.mxu0 %v1023
        %2193 = vmatpush2.msra.mxu0 %v1022
        %2194 = vmatprep.subr.mxu0 %v1021
        %2195 = vmatpush2.msra.mxu0 %v1020
        %2196 = vmatprep.subr.mxu0 %v1019
        %2197 = vmatpush2.msra.mxu0 %v1018
        %2198 = vmatprep.subr.mxu0 %v1017
        %2199 = vmatpush2.msra.mxu0 %v1016
        %2200 = vmatprep.subr.mxu0 %v1015
        %2201 = vmatpush2.msra.mxu0 %v1014
        %2202 = vmatprep.subr.mxu0 %v1013
        %2203 = vmatpush2.msra.mxu0 %v1012
        %2204 = vmatprep.subr.mxu0 %v1011
        %2205 = vmatpush2.msra.mxu0 %v1010
        %2206 = vmatprep.subr.mxu0 %v1009
        %2207 = vmatpush2.msra.mxu0 %v1008
        %2208 = vmatprep.subr.mxu0 %v1007
        %2209 = vmatpush2.msra.mxu0 %v1006
        %2210 = vmatprep.subr.mxu0 %v1005
        %2211 = vmatpush2.msra.mxu0 %v1004
        %2212 = vmatprep.subr.mxu0 %v1003
        %2213 = vmatpush2.msra.mxu0 %v1002
        %2214 = vmatprep.subr.mxu0 %v1001
        %2215 = vmatpush2.msra.mxu0 %v1000
        %2216 = vmatprep.subr.mxu0 %v999
        %2217 = vmatpush2.msra.mxu0 %v998
        %2218 = vmatprep.subr.mxu0 %v997
        %2219 = vmatpush2.msra.mxu0 %v996
        %2220 = vmatprep.mubr.f32.mxu0 %v1140
        %2221 = vmatmul.mubr.f32.gmra.mxu0 %v1139
        %v2222 = vpop.f32.mrf.mxu0
        %v2223 = vadd.f32 0.0, %v2222
        %v2224 = vpop.f32.mrf.mxu0
        %v2225 = vadd.f32 0.0, %v2224
        %2226 = vdwg.mxu0
        %s2227 = scalar_lea.vmem %s2, 56
        %v2228 = vld [vmem:[%s2227] sm:$0xff]
        %v2230 = vsel %vm1215, %v2228, 0
        %v2233 = vsel %vm1219, %v2223, 0
        %v2236 = vsel %vm1219, %v2225, 0
        %2238 = vmatprep.subr.mxu0 0.0
        %2239 = vmatpush1.msra.mxu0 0.0
        %2240 = vmatprep.subr.mxu0 0.0
        %2241 = vmatpush1.msra.mxu0 0.0
        %2242 = vmatprep.subr.mxu0 0.0
        %2243 = vmatpush1.msra.mxu0 0.0
        %2244 = vmatprep.subr.mxu0 0.0
        %2245 = vmatpush1.msra.mxu0 0.0
        %2246 = vmatprep.subr.mxu0 0.0
        %2247 = vmatpush1.msra.mxu0 0.0
        %2248 = vmatprep.subr.mxu0 0.0
        %2249 = vmatpush1.msra.mxu0 0.0
        %2250 = vmatprep.subr.mxu0 0.0
        %2251 = vmatpush1.msra.mxu0 0.0
        %2252 = vmatprep.subr.mxu0 0.0
        %2253 = vmatpush1.msra.mxu0 0.0
        %2254 = vmatprep.subr.mxu0 0.0
        %2255 = vmatpush1.msra.mxu0 0.0
        %2256 = vmatprep.subr.mxu0 0.0
        %2257 = vmatpush1.msra.mxu0 0.0
        %2258 = vmatprep.subr.mxu0 0.0
        %2259 = vmatpush1.msra.mxu0 0.0
        %2260 = vmatprep.subr.mxu0 0.0
        %2261 = vmatpush1.msra.mxu0 0.0
        %2262 = vmatprep.subr.mxu0 0.0
        %2263 = vmatpush1.msra.mxu0 0.0
        %2264 = vmatprep.subr.mxu0 0.0
        %2265 = vmatpush1.msra.mxu0 0.0
        %2266 = vmatprep.subr.mxu0 0.0
        %2267 = vmatpush1.msra.mxu0 0.0
        %2268 = vmatprep.subr.mxu0 %v2236
        %2269 = vmatpush1.msra.mxu0 %v2233
        %2270 = vmatprep.subr.mxu0 0.0
        %2271 = vmatpush2.msra.mxu0 0.0
        %2272 = vmatprep.subr.mxu0 0.0
        %2273 = vmatpush2.msra.mxu0 0.0
        %2274 = vmatprep.subr.mxu0 0.0
        %2275 = vmatpush2.msra.mxu0 0.0
        %2276 = vmatprep.subr.mxu0 0.0
        %2277 = vmatpush2.msra.mxu0 0.0
        %2278 = vmatprep.subr.mxu0 0.0
        %2279 = vmatpush2.msra.mxu0 0.0
        %2280 = vmatprep.subr.mxu0 0.0
        %2281 = vmatpush2.msra.mxu0 0.0
        %2282 = vmatprep.subr.mxu0 0.0
        %2283 = vmatpush2.msra.mxu0 0.0
        %2284 = vmatprep.subr.mxu0 0.0
        %2285 = vmatpush2.msra.mxu0 0.0
        %2286 = vmatprep.subr.mxu0 0.0
        %2287 = vmatpush2.msra.mxu0 0.0
        %2288 = vmatprep.subr.mxu0 0.0
        %2289 = vmatpush2.msra.mxu0 0.0
        %2290 = vmatprep.subr.mxu0 0.0
        %2291 = vmatpush2.msra.mxu0 0.0
        %2292 = vmatprep.subr.mxu0 0.0
        %2293 = vmatpush2.msra.mxu0 0.0
        %2294 = vmatprep.subr.mxu0 0.0
        %2295 = vmatpush2.msra.mxu0 0.0
        %2296 = vmatprep.subr.mxu0 0.0
        %2297 = vmatpush2.msra.mxu0 0.0
        %2298 = vmatprep.subr.mxu0 0.0
        %2299 = vmatpush2.msra.mxu0 0.0
        %2300 = vmatprep.subr.mxu0 0.0
        %2301 = vmatpush2.msra.mxu0 0.0
        %2302 = vmatprep.mubr.f32.mxu0 0.0
        %2303 = vmatmul.mubr.f32.gmra.mxu0 %v2230
        %v2304 = vpop.f32.mrf.mxu0
        %v2305 = vadd.f32 0.0, %v2304
        %v2306 = vpop.f32.mrf.mxu0
        %v2307 = vadd.f32 0.0, %v2306
        %2308 = vdwg.mxu0
        %v2309 = vadd.f32 %v2154, %v2305
        %v2310 = vadd.f32 %v2155, %v2307
        %2311 = vmatprep.subr.mxu0 %v1092
        %2312 = vmatpush1.msra.mxu0 %v1091
        %2313 = vmatprep.subr.mxu0 %v1090
        %2314 = vmatpush1.msra.mxu0 %v1089
        %2315 = vmatprep.subr.mxu0 %v1088
        %2316 = vmatpush1.msra.mxu0 %v1087
        %2317 = vmatprep.subr.mxu0 %v1086
        %2318 = vmatpush1.msra.mxu0 %v1085
        %2319 = vmatprep.subr.mxu0 %v1084
        %2320 = vmatpush1.msra.mxu0 %v1083
        %2321 = vmatprep.subr.mxu0 %v1082
        %2322 = vmatpush1.msra.mxu0 %v1081
        %2323 = vmatprep.subr.mxu0 %v1080
        %2324 = vmatpush1.msra.mxu0 %v1079
        %2325 = vmatprep.subr.mxu0 %v1078
        %2326 = vmatpush1.msra.mxu0 %v1077
        %2327 = vmatprep.subr.mxu0 %v1076
        %2328 = vmatpush1.msra.mxu0 %v1075
        %2329 = vmatprep.subr.mxu0 %v1074
        %2330 = vmatpush1.msra.mxu0 %v1073
        %2331 = vmatprep.subr.mxu0 %v1072
        %2332 = vmatpush1.msra.mxu0 %v1071
        %2333 = vmatprep.subr.mxu0 %v1070
        %2334 = vmatpush1.msra.mxu0 %v1069
        %2335 = vmatprep.subr.mxu0 %v1068
        %2336 = vmatpush1.msra.mxu0 %v1067
        %2337 = vmatprep.subr.mxu0 %v1066
        %2338 = vmatpush1.msra.mxu0 %v1065
        %2339 = vmatprep.subr.mxu0 %v1064
        %2340 = vmatpush1.msra.mxu0 %v1063
        %2341 = vmatprep.subr.mxu0 %v1062
        %2342 = vmatpush1.msra.mxu0 %v1061
        %2343 = vmatprep.subr.mxu0 %v1124
        %2344 = vmatpush2.msra.mxu0 %v1123
        %2345 = vmatprep.subr.mxu0 %v1122
        %2346 = vmatpush2.msra.mxu0 %v1121
        %2347 = vmatprep.subr.mxu0 %v1120
        %2348 = vmatpush2.msra.mxu0 %v1119
        %2349 = vmatprep.subr.mxu0 %v1118
        %2350 = vmatpush2.msra.mxu0 %v1117
        %2351 = vmatprep.subr.mxu0 %v1116
        %2352 = vmatpush2.msra.mxu0 %v1115
        %2353 = vmatprep.subr.mxu0 %v1114
        %2354 = vmatpush2.msra.mxu0 %v1113
        %2355 = vmatprep.subr.mxu0 %v1112
        %2356 = vmatpush2.msra.mxu0 %v1111
        %2357 = vmatprep.subr.mxu0 %v1110
        %2358 = vmatpush2.msra.mxu0 %v1109
        %2359 = vmatprep.subr.mxu0 %v1108
        %2360 = vmatpush2.msra.mxu0 %v1107
        %2361 = vmatprep.subr.mxu0 %v1106
        %2362 = vmatpush2.msra.mxu0 %v1105
        %2363 = vmatprep.subr.mxu0 %v1104
        %2364 = vmatpush2.msra.mxu0 %v1103
        %2365 = vmatprep.subr.mxu0 %v1102
        %2366 = vmatpush2.msra.mxu0 %v1101
        %2367 = vmatprep.subr.mxu0 %v1100
        %2368 = vmatpush2.msra.mxu0 %v1099
        %2369 = vmatprep.subr.mxu0 %v1098
        %2370 = vmatpush2.msra.mxu0 %v1097
        %2371 = vmatprep.subr.mxu0 %v1096
        %2372 = vmatpush2.msra.mxu0 %v1095
        %2373 = vmatprep.subr.mxu0 %v1094
        %2374 = vmatpush2.msra.mxu0 %v1093
        %2375 = vmatprep.mubr.f32.mxu0 %v1140
        %2376 = vmatmul.mubr.f32.gmra.mxu0 %v1139
        %v2377 = vpop.f32.mrf.mxu0
        %v2378 = vadd.f32 0.0, %v2377
        %v2379 = vpop.f32.mrf.mxu0
        %v2380 = vadd.f32 0.0, %v2379
        %2381 = vdwg.mxu0
        %s2382 = scalar_lea.vmem %s2, 64
        %v2383 = vld [vmem:[%s2382] sm:$0xff]
        %v2385 = vsel %vm1215, %v2383, 0
        %v2388 = vsel %vm1219, %v2378, 0
        %v2391 = vsel %vm1219, %v2380, 0
        %2393 = vmatprep.subr.mxu0 0.0
        %2394 = vmatpush1.msra.mxu0 0.0
        %2395 = vmatprep.subr.mxu0 0.0
        %2396 = vmatpush1.msra.mxu0 0.0
        %2397 = vmatprep.subr.mxu0 0.0
        %2398 = vmatpush1.msra.mxu0 0.0
        %2399 = vmatprep.subr.mxu0 0.0
        %2400 = vmatpush1.msra.mxu0 0.0
        %2401 = vmatprep.subr.mxu0 0.0
        %2402 = vmatpush1.msra.mxu0 0.0
        %2403 = vmatprep.subr.mxu0 0.0
        %2404 = vmatpush1.msra.mxu0 0.0
        %2405 = vmatprep.subr.mxu0 0.0
        %2406 = vmatpush1.msra.mxu0 0.0
        %2407 = vmatprep.subr.mxu0 0.0
        %2408 = vmatpush1.msra.mxu0 0.0
        %2409 = vmatprep.subr.mxu0 0.0
        %2410 = vmatpush1.msra.mxu0 0.0
        %2411 = vmatprep.subr.mxu0 0.0
        %2412 = vmatpush1.msra.mxu0 0.0
        %2413 = vmatprep.subr.mxu0 0.0
        %2414 = vmatpush1.msra.mxu0 0.0
        %2415 = vmatprep.subr.mxu0 0.0
        %2416 = vmatpush1.msra.mxu0 0.0
        %2417 = vmatprep.subr.mxu0 0.0
        %2418 = vmatpush1.msra.mxu0 0.0
        %2419 = vmatprep.subr.mxu0 0.0
        %2420 = vmatpush1.msra.mxu0 0.0
        %2421 = vmatprep.subr.mxu0 0.0
        %2422 = vmatpush1.msra.mxu0 0.0
        %2423 = vmatprep.subr.mxu0 %v2391
        %2424 = vmatpush1.msra.mxu0 %v2388
        %2425 = vmatprep.subr.mxu0 0.0
        %2426 = vmatpush2.msra.mxu0 0.0
        %2427 = vmatprep.subr.mxu0 0.0
        %2428 = vmatpush2.msra.mxu0 0.0
        %2429 = vmatprep.subr.mxu0 0.0
        %2430 = vmatpush2.msra.mxu0 0.0
        %2431 = vmatprep.subr.mxu0 0.0
        %2432 = vmatpush2.msra.mxu0 0.0
        %2433 = vmatprep.subr.mxu0 0.0
        %2434 = vmatpush2.msra.mxu0 0.0
        %2435 = vmatprep.subr.mxu0 0.0
        %2436 = vmatpush2.msra.mxu0 0.0
        %2437 = vmatprep.subr.mxu0 0.0
        %2438 = vmatpush2.msra.mxu0 0.0
        %2439 = vmatprep.subr.mxu0 0.0
        %2440 = vmatpush2.msra.mxu0 0.0
        %2441 = vmatprep.subr.mxu0 0.0
        %2442 = vmatpush2.msra.mxu0 0.0
        %2443 = vmatprep.subr.mxu0 0.0
        %2444 = vmatpush2.msra.mxu0 0.0
        %2445 = vmatprep.subr.mxu0 0.0
        %2446 = vmatpush2.msra.mxu0 0.0
        %2447 = vmatprep.subr.mxu0 0.0
        %2448 = vmatpush2.msra.mxu0 0.0
        %2449 = vmatprep.subr.mxu0 0.0
        %2450 = vmatpush2.msra.mxu0 0.0
        %2451 = vmatprep.subr.mxu0 0.0
        %2452 = vmatpush2.msra.mxu0 0.0
        %2453 = vmatprep.subr.mxu0 0.0
        %2454 = vmatpush2.msra.mxu0 0.0
        %2455 = vmatprep.subr.mxu0 0.0
        %2456 = vmatpush2.msra.mxu0 0.0
        %2457 = vmatprep.mubr.f32.mxu0 0.0
        %2458 = vmatmul.mubr.f32.gmra.mxu0 %v2385
        %v2459 = vpop.f32.mrf.mxu0
        %v2460 = vadd.f32 0.0, %v2459
        %v2461 = vpop.f32.mrf.mxu0
        %v2462 = vadd.f32 0.0, %v2461
        %2463 = vdwg.mxu0
        %v2464 = vadd.f32 %v2309, %v2460
        %v2465 = vadd.f32 %v2310, %v2462
        %v2466 = vmax.f32 %v2464, 0.0
        %v2467 = vmax.f32 %v2465, 0.0
        %v2468 = vld [vmem:[%s5] sm:$0xff]
        %2470 = vset.pattern.permute.xlu0 0
        %2471 = vperm.xlu0 %2470, %v2468
        %v2472 = vpop.permute.xlu0 %2471
        %2474 = vmatprep.subr.mxu0 %v413
        %2475 = vmatpush1.msra.mxu0 %v412
        %2476 = vmatprep.subr.mxu0 %v411
        %2477 = vmatpush1.msra.mxu0 %v410
        %2478 = vmatprep.subr.mxu0 %v409
        %2479 = vmatpush1.msra.mxu0 %v408
        %2480 = vmatprep.subr.mxu0 %v407
        %2481 = vmatpush1.msra.mxu0 %v406
        %2482 = vmatprep.subr.mxu0 %v405
        %2483 = vmatpush1.msra.mxu0 %v404
        %2484 = vmatprep.subr.mxu0 %v403
        %2485 = vmatpush1.msra.mxu0 %v402
        %2486 = vmatprep.subr.mxu0 %v401
        %2487 = vmatpush1.msra.mxu0 %v400
        %2488 = vmatprep.subr.mxu0 %v399
        %2489 = vmatpush1.msra.mxu0 %v398
        %2490 = vmatprep.subr.mxu0 %v397
        %2491 = vmatpush1.msra.mxu0 %v396
        %2492 = vmatprep.subr.mxu0 %v395
        %2493 = vmatpush1.msra.mxu0 %v394
        %2494 = vmatprep.subr.mxu0 %v393
        %2495 = vmatpush1.msra.mxu0 %v392
        %2496 = vmatprep.subr.mxu0 %v391
        %2497 = vmatpush1.msra.mxu0 %v390
        %2498 = vmatprep.subr.mxu0 %v389
        %2499 = vmatpush1.msra.mxu0 %v388
        %2500 = vmatprep.subr.mxu0 %v387
        %2501 = vmatpush1.msra.mxu0 %v386
        %2502 = vmatprep.subr.mxu0 %v385
        %2503 = vmatpush1.msra.mxu0 %v384
        %2504 = vmatprep.subr.mxu0 %v383
        %2505 = vmatpush1.msra.mxu0 %v382
        %2506 = vmatprep.subr.mxu0 %v445
        %2507 = vmatpush2.msra.mxu0 %v444
        %2508 = vmatprep.subr.mxu0 %v443
        %2509 = vmatpush2.msra.mxu0 %v442
        %2510 = vmatprep.subr.mxu0 %v441
        %2511 = vmatpush2.msra.mxu0 %v440
        %2512 = vmatprep.subr.mxu0 %v439
        %2513 = vmatpush2.msra.mxu0 %v438
        %2514 = vmatprep.subr.mxu0 %v437
        %2515 = vmatpush2.msra.mxu0 %v436
        %2516 = vmatprep.subr.mxu0 %v435
        %2517 = vmatpush2.msra.mxu0 %v434
        %2518 = vmatprep.subr.mxu0 %v433
        %2519 = vmatpush2.msra.mxu0 %v432
        %2520 = vmatprep.subr.mxu0 %v431
        %2521 = vmatpush2.msra.mxu0 %v430
        %2522 = vmatprep.subr.mxu0 %v429
        %2523 = vmatpush2.msra.mxu0 %v428
        %2524 = vmatprep.subr.mxu0 %v427
        %2525 = vmatpush2.msra.mxu0 %v426
        %2526 = vmatprep.subr.mxu0 %v425
        %2527 = vmatpush2.msra.mxu0 %v424
        %2528 = vmatprep.subr.mxu0 %v423
        %2529 = vmatpush2.msra.mxu0 %v422
        %2530 = vmatprep.subr.mxu0 %v421
        %2531 = vmatpush2.msra.mxu0 %v420
        %2532 = vmatprep.subr.mxu0 %v419
        %2533 = vmatpush2.msra.mxu0 %v418
        %2534 = vmatprep.subr.mxu0 %v417
        %2535 = vmatpush2.msra.mxu0 %v416
        %2536 = vmatprep.subr.mxu0 %v415
        %2537 = vmatpush2.msra.mxu0 %v414
        %2538 = vmatprep.mubr.f32.mxu0 %v2467
        %2539 = vmatmul.mubr.f32.gmra.mxu0 %v2466
        %v2540 = vpop.f32.mrf.mxu0
        %v2541 = vadd.f32 0.0, %v2540
        %v2542 = vpop.f32.mrf.mxu0
        %v2543 = vadd.f32 0.0, %v2542
        %2544 = vdwg.mxu0
        %v2545 = vld [vmem:[#allocation5] sm:$0xff]
        %vm2546 = vcmask 64512
        %v2548 = vsel %vm2546, %v2545, 0
        %2550 = vmatprep.subr.mxu0 0.0
        %2551 = vmatpush1.msra.mxu0 0.0
        %2552 = vmatprep.subr.mxu0 0.0
        %2553 = vmatpush1.msra.mxu0 0.0
        %2554 = vmatprep.subr.mxu0 0.0
        %2555 = vmatpush1.msra.mxu0 0.0
        %2556 = vmatprep.subr.mxu0 0.0
        %2557 = vmatpush1.msra.mxu0 0.0
        %2558 = vmatprep.subr.mxu0 0.0
        %2559 = vmatpush1.msra.mxu0 0.0
        %2560 = vmatprep.subr.mxu0 0.0
        %2561 = vmatpush1.msra.mxu0 0.0
        %2562 = vmatprep.subr.mxu0 0.0
        %2563 = vmatpush1.msra.mxu0 0.0
        %2564 = vmatprep.subr.mxu0 0.0
        %2565 = vmatpush1.msra.mxu0 0.0
        %2566 = vmatprep.subr.mxu0 0.0
        %2567 = vmatpush1.msra.mxu0 0.0
        %2568 = vmatprep.subr.mxu0 0.0
        %2569 = vmatpush1.msra.mxu0 0.0
        %2570 = vmatprep.subr.mxu0 0.0
        %2571 = vmatpush1.msra.mxu0 0.0
        %2572 = vmatprep.subr.mxu0 0.0
        %2573 = vmatpush1.msra.mxu0 0.0
        %2574 = vmatprep.subr.mxu0 0.0
        %2575 = vmatpush1.msra.mxu0 0.0
        %2576 = vmatprep.subr.mxu0 0.0
        %2577 = vmatpush1.msra.mxu0 0.0
        %2578 = vmatprep.subr.mxu0 0.0
        %2579 = vmatpush1.msra.mxu0 0.0
        %2580 = vmatprep.subr.mxu0 %v2543
        %2581 = vmatpush1.msra.mxu0 %v2541
        %2582 = vmatprep.subr.mxu0 0.0
        %2583 = vmatpush2.msra.mxu0 0.0
        %2584 = vmatprep.subr.mxu0 0.0
        %2585 = vmatpush2.msra.mxu0 0.0
        %2586 = vmatprep.subr.mxu0 0.0
        %2587 = vmatpush2.msra.mxu0 0.0
        %2588 = vmatprep.subr.mxu0 0.0
        %2589 = vmatpush2.msra.mxu0 0.0
        %2590 = vmatprep.subr.mxu0 0.0
        %2591 = vmatpush2.msra.mxu0 0.0
        %2592 = vmatprep.subr.mxu0 0.0
        %2593 = vmatpush2.msra.mxu0 0.0
        %2594 = vmatprep.subr.mxu0 0.0
        %2595 = vmatpush2.msra.mxu0 0.0
        %2596 = vmatprep.subr.mxu0 0.0
        %2597 = vmatpush2.msra.mxu0 0.0
        %2598 = vmatprep.subr.mxu0 0.0
        %2599 = vmatpush2.msra.mxu0 0.0
        %2600 = vmatprep.subr.mxu0 0.0
        %2601 = vmatpush2.msra.mxu0 0.0
        %2602 = vmatprep.subr.mxu0 0.0
        %2603 = vmatpush2.msra.mxu0 0.0
        %2604 = vmatprep.subr.mxu0 0.0
        %2605 = vmatpush2.msra.mxu0 0.0
        %2606 = vmatprep.subr.mxu0 0.0
        %2607 = vmatpush2.msra.mxu0 0.0
        %2608 = vmatprep.subr.mxu0 0.0
        %2609 = vmatpush2.msra.mxu0 0.0
        %2610 = vmatprep.subr.mxu0 0.0
        %2611 = vmatpush2.msra.mxu0 0.0
        %2612 = vmatprep.subr.mxu0 0.0
        %2613 = vmatpush2.msra.mxu0 0.0
        %2614 = vmatprep.mubr.f32.mxu0 0.0
        %2615 = vmatmul.mubr.f32.gmra.mxu0 %v2548
        %v2616 = vpop.f32.mrf.mxu0
        %v2617 = vadd.f32 0.0, %v2616
        %v2618 = vpop.f32.mrf.mxu0
        %v2619 = vadd.f32 0.0, %v2618
        %2620 = vdwg.mxu0
        %v2621 = vadd.f32 %v2472, %v2617
        %v2622 = vadd.f32 %v2472, %v2619
        %2623 = vmatprep.subr.mxu0 %v510
        %2624 = vmatpush1.msra.mxu0 %v509
        %2625 = vmatprep.subr.mxu0 %v508
        %2626 = vmatpush1.msra.mxu0 %v507
        %2627 = vmatprep.subr.mxu0 %v506
        %2628 = vmatpush1.msra.mxu0 %v505
        %2629 = vmatprep.subr.mxu0 %v504
        %2630 = vmatpush1.msra.mxu0 %v503
        %2631 = vmatprep.subr.mxu0 %v502
        %2632 = vmatpush1.msra.mxu0 %v501
        %2633 = vmatprep.subr.mxu0 %v500
        %2634 = vmatpush1.msra.mxu0 %v499
        %2635 = vmatprep.subr.mxu0 %v498
        %2636 = vmatpush1.msra.mxu0 %v497
        %2637 = vmatprep.subr.mxu0 %v496
        %2638 = vmatpush1.msra.mxu0 %v495
        %2639 = vmatprep.subr.mxu0 %v494
        %2640 = vmatpush1.msra.mxu0 %v493
        %2641 = vmatprep.subr.mxu0 %v492
        %2642 = vmatpush1.msra.mxu0 %v491
        %2643 = vmatprep.subr.mxu0 %v490
        %2644 = vmatpush1.msra.mxu0 %v489
        %2645 = vmatprep.subr.mxu0 %v488
        %2646 = vmatpush1.msra.mxu0 %v487
        %2647 = vmatprep.subr.mxu0 %v486
        %2648 = vmatpush1.msra.mxu0 %v485
        %2649 = vmatprep.subr.mxu0 %v484
        %2650 = vmatpush1.msra.mxu0 %v483
        %2651 = vmatprep.subr.mxu0 %v482
        %2652 = vmatpush1.msra.mxu0 %v481
        %2653 = vmatprep.subr.mxu0 %v480
        %2654 = vmatpush1.msra.mxu0 %v479
        %2655 = vmatprep.subr.mxu0 %v542
        %2656 = vmatpush2.msra.mxu0 %v541
        %2657 = vmatprep.subr.mxu0 %v540
        %2658 = vmatpush2.msra.mxu0 %v539
        %2659 = vmatprep.subr.mxu0 %v538
        %2660 = vmatpush2.msra.mxu0 %v537
        %2661 = vmatprep.subr.mxu0 %v536
        %2662 = vmatpush2.msra.mxu0 %v535
        %2663 = vmatprep.subr.mxu0 %v534
        %2664 = vmatpush2.msra.mxu0 %v533
        %2665 = vmatprep.subr.mxu0 %v532
        %2666 = vmatpush2.msra.mxu0 %v531
        %2667 = vmatprep.subr.mxu0 %v530
        %2668 = vmatpush2.msra.mxu0 %v529
        %2669 = vmatprep.subr.mxu0 %v528
        %2670 = vmatpush2.msra.mxu0 %v527
        %2671 = vmatprep.subr.mxu0 %v526
        %2672 = vmatpush2.msra.mxu0 %v525
        %2673 = vmatprep.subr.mxu0 %v524
        %2674 = vmatpush2.msra.mxu0 %v523
        %2675 = vmatprep.subr.mxu0 %v522
        %2676 = vmatpush2.msra.mxu0 %v521
        %2677 = vmatprep.subr.mxu0 %v520
        %2678 = vmatpush2.msra.mxu0 %v519
        %2679 = vmatprep.subr.mxu0 %v518
        %2680 = vmatpush2.msra.mxu0 %v517
        %2681 = vmatprep.subr.mxu0 %v516
        %2682 = vmatpush2.msra.mxu0 %v515
        %2683 = vmatprep.subr.mxu0 %v514
        %2684 = vmatpush2.msra.mxu0 %v513
        %2685 = vmatprep.subr.mxu0 %v512
        %2686 = vmatpush2.msra.mxu0 %v511
        %2687 = vmatprep.mubr.f32.mxu0 %v2467
        %2688 = vmatmul.mubr.f32.gmra.mxu0 %v2466
        %v2689 = vpop.f32.mrf.mxu0
        %v2690 = vadd.f32 0.0, %v2689
        %v2691 = vpop.f32.mrf.mxu0
        %v2692 = vadd.f32 0.0, %v2691
        %2693 = vdwg.mxu0
        %s2694 = scalar_lea.vmem [#allocation5], 8
        %v2695 = vld [vmem:[%s2694] sm:$0xff]
        %v2697 = vsel %vm2546, %v2695, 0
        %2699 = vmatprep.subr.mxu0 0.0
        %2700 = vmatpush1.msra.mxu0 0.0
        %2701 = vmatprep.subr.mxu0 0.0
        %2702 = vmatpush1.msra.mxu0 0.0
        %2703 = vmatprep.subr.mxu0 0.0
        %2704 = vmatpush1.msra.mxu0 0.0
        %2705 = vmatprep.subr.mxu0 0.0
        %2706 = vmatpush1.msra.mxu0 0.0
        %2707 = vmatprep.subr.mxu0 0.0
        %2708 = vmatpush1.msra.mxu0 0.0
        %2709 = vmatprep.subr.mxu0 0.0
        %2710 = vmatpush1.msra.mxu0 0.0
        %2711 = vmatprep.subr.mxu0 0.0
        %2712 = vmatpush1.msra.mxu0 0.0
        %2713 = vmatprep.subr.mxu0 0.0
        %2714 = vmatpush1.msra.mxu0 0.0
        %2715 = vmatprep.subr.mxu0 0.0
        %2716 = vmatpush1.msra.mxu0 0.0
        %2717 = vmatprep.subr.mxu0 0.0
        %2718 = vmatpush1.msra.mxu0 0.0
        %2719 = vmatprep.subr.mxu0 0.0
        %2720 = vmatpush1.msra.mxu0 0.0
        %2721 = vmatprep.subr.mxu0 0.0
        %2722 = vmatpush1.msra.mxu0 0.0
        %2723 = vmatprep.subr.mxu0 0.0
        %2724 = vmatpush1.msra.mxu0 0.0
        %2725 = vmatprep.subr.mxu0 0.0
        %2726 = vmatpush1.msra.mxu0 0.0
        %2727 = vmatprep.subr.mxu0 0.0
        %2728 = vmatpush1.msra.mxu0 0.0
        %2729 = vmatprep.subr.mxu0 %v2692
        %2730 = vmatpush1.msra.mxu0 %v2690
        %2731 = vmatprep.subr.mxu0 0.0
        %2732 = vmatpush2.msra.mxu0 0.0
        %2733 = vmatprep.subr.mxu0 0.0
        %2734 = vmatpush2.msra.mxu0 0.0
        %2735 = vmatprep.subr.mxu0 0.0
        %2736 = vmatpush2.msra.mxu0 0.0
        %2737 = vmatprep.subr.mxu0 0.0
        %2738 = vmatpush2.msra.mxu0 0.0
        %2739 = vmatprep.subr.mxu0 0.0
        %2740 = vmatpush2.msra.mxu0 0.0
        %2741 = vmatprep.subr.mxu0 0.0
        %2742 = vmatpush2.msra.mxu0 0.0
        %2743 = vmatprep.subr.mxu0 0.0
        %2744 = vmatpush2.msra.mxu0 0.0
        %2745 = vmatprep.subr.mxu0 0.0
        %2746 = vmatpush2.msra.mxu0 0.0
        %2747 = vmatprep.subr.mxu0 0.0
        %2748 = vmatpush2.msra.mxu0 0.0
        %2749 = vmatprep.subr.mxu0 0.0
        %2750 = vmatpush2.msra.mxu0 0.0
        %2751 = vmatprep.subr.mxu0 0.0
        %2752 = vmatpush2.msra.mxu0 0.0
        %2753 = vmatprep.subr.mxu0 0.0
        %2754 = vmatpush2.msra.mxu0 0.0
        %2755 = vmatprep.subr.mxu0 0.0
        %2756 = vmatpush2.msra.mxu0 0.0
        %2757 = vmatprep.subr.mxu0 0.0
        %2758 = vmatpush2.msra.mxu0 0.0
        %2759 = vmatprep.subr.mxu0 0.0
        %2760 = vmatpush2.msra.mxu0 0.0
        %2761 = vmatprep.subr.mxu0 0.0
        %2762 = vmatpush2.msra.mxu0 0.0
        %2763 = vmatprep.mubr.f32.mxu0 0.0
        %2764 = vmatmul.mubr.f32.gmra.mxu0 %v2697
        %v2765 = vpop.f32.mrf.mxu0
        %v2766 = vadd.f32 0.0, %v2765
        %v2767 = vpop.f32.mrf.mxu0
        %v2768 = vadd.f32 0.0, %v2767
        %2769 = vdwg.mxu0
        %v2770 = vadd.f32 %v2621, %v2766
        %v2771 = vadd.f32 %v2622, %v2768
        %2772 = vmatprep.subr.mxu0 %v607
        %2773 = vmatpush1.msra.mxu0 %v606
        %2774 = vmatprep.subr.mxu0 %v605
        %2775 = vmatpush1.msra.mxu0 %v604
        %2776 = vmatprep.subr.mxu0 %v603
        %2777 = vmatpush1.msra.mxu0 %v602
        %2778 = vmatprep.subr.mxu0 %v601
        %2779 = vmatpush1.msra.mxu0 %v600
        %2780 = vmatprep.subr.mxu0 %v599
        %2781 = vmatpush1.msra.mxu0 %v598
        %2782 = vmatprep.subr.mxu0 %v597
        %2783 = vmatpush1.msra.mxu0 %v596
        %2784 = vmatprep.subr.mxu0 %v595
        %2785 = vmatpush1.msra.mxu0 %v594
        %2786 = vmatprep.subr.mxu0 %v593
        %2787 = vmatpush1.msra.mxu0 %v592
        %2788 = vmatprep.subr.mxu0 %v591
        %2789 = vmatpush1.msra.mxu0 %v590
        %2790 = vmatprep.subr.mxu0 %v589
        %2791 = vmatpush1.msra.mxu0 %v588
        %2792 = vmatprep.subr.mxu0 %v587
        %2793 = vmatpush1.msra.mxu0 %v586
        %2794 = vmatprep.subr.mxu0 %v585
        %2795 = vmatpush1.msra.mxu0 %v584
        %2796 = vmatprep.subr.mxu0 %v583
        %2797 = vmatpush1.msra.mxu0 %v582
        %2798 = vmatprep.subr.mxu0 %v581
        %2799 = vmatpush1.msra.mxu0 %v580
        %2800 = vmatprep.subr.mxu0 %v579
        %2801 = vmatpush1.msra.mxu0 %v578
        %2802 = vmatprep.subr.mxu0 %v577
        %2803 = vmatpush1.msra.mxu0 %v576
        %2804 = vmatprep.subr.mxu0 %v639
        %2805 = vmatpush2.msra.mxu0 %v638
        %2806 = vmatprep.subr.mxu0 %v637
        %2807 = vmatpush2.msra.mxu0 %v636
        %2808 = vmatprep.subr.mxu0 %v635
        %2809 = vmatpush2.msra.mxu0 %v634
        %2810 = vmatprep.subr.mxu0 %v633
        %2811 = vmatpush2.msra.mxu0 %v632
        %2812 = vmatprep.subr.mxu0 %v631
        %2813 = vmatpush2.msra.mxu0 %v630
        %2814 = vmatprep.subr.mxu0 %v629
        %2815 = vmatpush2.msra.mxu0 %v628
        %2816 = vmatprep.subr.mxu0 %v627
        %2817 = vmatpush2.msra.mxu0 %v626
        %2818 = vmatprep.subr.mxu0 %v625
        %2819 = vmatpush2.msra.mxu0 %v624
        %2820 = vmatprep.subr.mxu0 %v623
        %2821 = vmatpush2.msra.mxu0 %v622
        %2822 = vmatprep.subr.mxu0 %v621
        %2823 = vmatpush2.msra.mxu0 %v620
        %2824 = vmatprep.subr.mxu0 %v619
        %2825 = vmatpush2.msra.mxu0 %v618
        %2826 = vmatprep.subr.mxu0 %v617
        %2827 = vmatpush2.msra.mxu0 %v616
        %2828 = vmatprep.subr.mxu0 %v615
        %2829 = vmatpush2.msra.mxu0 %v614
        %2830 = vmatprep.subr.mxu0 %v613
        %2831 = vmatpush2.msra.mxu0 %v612
        %2832 = vmatprep.subr.mxu0 %v611
        %2833 = vmatpush2.msra.mxu0 %v610
        %2834 = vmatprep.subr.mxu0 %v609
        %2835 = vmatpush2.msra.mxu0 %v608
        %2836 = vmatprep.mubr.f32.mxu0 %v2467
        %2837 = vmatmul.mubr.f32.gmra.mxu0 %v2466
        %v2838 = vpop.f32.mrf.mxu0
        %v2839 = vadd.f32 0.0, %v2838
        %v2840 = vpop.f32.mrf.mxu0
        %v2841 = vadd.f32 0.0, %v2840
        %2842 = vdwg.mxu0
        %s2843 = scalar_lea.vmem [#allocation5], 16
        %v2844 = vld [vmem:[%s2843] sm:$0xff]
        %v2846 = vsel %vm2546, %v2844, 0
        %2848 = vmatprep.subr.mxu0 0.0
        %2849 = vmatpush1.msra.mxu0 0.0
        %2850 = vmatprep.subr.mxu0 0.0
        %2851 = vmatpush1.msra.mxu0 0.0
        %2852 = vmatprep.subr.mxu0 0.0
        %2853 = vmatpush1.msra.mxu0 0.0
        %2854 = vmatprep.subr.mxu0 0.0
        %2855 = vmatpush1.msra.mxu0 0.0
        %2856 = vmatprep.subr.mxu0 0.0
        %2857 = vmatpush1.msra.mxu0 0.0
        %2858 = vmatprep.subr.mxu0 0.0
        %2859 = vmatpush1.msra.mxu0 0.0
        %2860 = vmatprep.subr.mxu0 0.0
        %2861 = vmatpush1.msra.mxu0 0.0
        %2862 = vmatprep.subr.mxu0 0.0
        %2863 = vmatpush1.msra.mxu0 0.0
        %2864 = vmatprep.subr.mxu0 0.0
        %2865 = vmatpush1.msra.mxu0 0.0
        %2866 = vmatprep.subr.mxu0 0.0
        %2867 = vmatpush1.msra.mxu0 0.0
        %2868 = vmatprep.subr.mxu0 0.0
        %2869 = vmatpush1.msra.mxu0 0.0
        %2870 = vmatprep.subr.mxu0 0.0
        %2871 = vmatpush1.msra.mxu0 0.0
        %2872 = vmatprep.subr.mxu0 0.0
        %2873 = vmatpush1.msra.mxu0 0.0
        %2874 = vmatprep.subr.mxu0 0.0
        %2875 = vmatpush1.msra.mxu0 0.0
        %2876 = vmatprep.subr.mxu0 0.0
        %2877 = vmatpush1.msra.mxu0 0.0
        %2878 = vmatprep.subr.mxu0 %v2841
        %2879 = vmatpush1.msra.mxu0 %v2839
        %2880 = vmatprep.subr.mxu0 0.0
        %2881 = vmatpush2.msra.mxu0 0.0
        %2882 = vmatprep.subr.mxu0 0.0
        %2883 = vmatpush2.msra.mxu0 0.0
        %2884 = vmatprep.subr.mxu0 0.0
        %2885 = vmatpush2.msra.mxu0 0.0
        %2886 = vmatprep.subr.mxu0 0.0
        %2887 = vmatpush2.msra.mxu0 0.0
        %2888 = vmatprep.subr.mxu0 0.0
        %2889 = vmatpush2.msra.mxu0 0.0
        %2890 = vmatprep.subr.mxu0 0.0
        %2891 = vmatpush2.msra.mxu0 0.0
        %2892 = vmatprep.subr.mxu0 0.0
        %2893 = vmatpush2.msra.mxu0 0.0
        %2894 = vmatprep.subr.mxu0 0.0
        %2895 = vmatpush2.msra.mxu0 0.0
        %2896 = vmatprep.subr.mxu0 0.0
        %2897 = vmatpush2.msra.mxu0 0.0
        %2898 = vmatprep.subr.mxu0 0.0
        %2899 = vmatpush2.msra.mxu0 0.0
        %2900 = vmatprep.subr.mxu0 0.0
        %2901 = vmatpush2.msra.mxu0 0.0
        %2902 = vmatprep.subr.mxu0 0.0
        %2903 = vmatpush2.msra.mxu0 0.0
        %2904 = vmatprep.subr.mxu0 0.0
        %2905 = vmatpush2.msra.mxu0 0.0
        %2906 = vmatprep.subr.mxu0 0.0
        %2907 = vmatpush2.msra.mxu0 0.0
        %2908 = vmatprep.subr.mxu0 0.0
        %2909 = vmatpush2.msra.mxu0 0.0
        %2910 = vmatprep.subr.mxu0 0.0
        %2911 = vmatpush2.msra.mxu0 0.0
        %2912 = vmatprep.mubr.f32.mxu0 0.0
        %2913 = vmatmul.mubr.f32.gmra.mxu0 %v2846
        %v2914 = vpop.f32.mrf.mxu0
        %v2915 = vadd.f32 0.0, %v2914
        %v2916 = vpop.f32.mrf.mxu0
        %v2917 = vadd.f32 0.0, %v2916
        %2918 = vdwg.mxu0
        %v2919 = vadd.f32 %v2770, %v2915
        %v2920 = vadd.f32 %v2771, %v2917
        %2921 = vmatprep.subr.mxu0 %v704
        %2922 = vmatpush1.msra.mxu0 %v703
        %2923 = vmatprep.subr.mxu0 %v702
        %2924 = vmatpush1.msra.mxu0 %v701
        %2925 = vmatprep.subr.mxu0 %v700
        %2926 = vmatpush1.msra.mxu0 %v699
        %2927 = vmatprep.subr.mxu0 %v698
        %2928 = vmatpush1.msra.mxu0 %v697
        %2929 = vmatprep.subr.mxu0 %v696
        %2930 = vmatpush1.msra.mxu0 %v695
        %2931 = vmatprep.subr.mxu0 %v694
        %2932 = vmatpush1.msra.mxu0 %v693
        %2933 = vmatprep.subr.mxu0 %v692
        %2934 = vmatpush1.msra.mxu0 %v691
        %2935 = vmatprep.subr.mxu0 %v690
        %2936 = vmatpush1.msra.mxu0 %v689
        %2937 = vmatprep.subr.mxu0 %v688
        %2938 = vmatpush1.msra.mxu0 %v687
        %2939 = vmatprep.subr.mxu0 %v686
        %2940 = vmatpush1.msra.mxu0 %v685
        %2941 = vmatprep.subr.mxu0 %v684
        %2942 = vmatpush1.msra.mxu0 %v683
        %2943 = vmatprep.subr.mxu0 %v682
        %2944 = vmatpush1.msra.mxu0 %v681
        %2945 = vmatprep.subr.mxu0 %v680
        %2946 = vmatpush1.msra.mxu0 %v679
        %2947 = vmatprep.subr.mxu0 %v678
        %2948 = vmatpush1.msra.mxu0 %v677
        %2949 = vmatprep.subr.mxu0 %v676
        %2950 = vmatpush1.msra.mxu0 %v675
        %2951 = vmatprep.subr.mxu0 %v674
        %2952 = vmatpush1.msra.mxu0 %v673
        %2953 = vmatprep.subr.mxu0 %v736
        %2954 = vmatpush2.msra.mxu0 %v735
        %2955 = vmatprep.subr.mxu0 %v734
        %2956 = vmatpush2.msra.mxu0 %v733
        %2957 = vmatprep.subr.mxu0 %v732
        %2958 = vmatpush2.msra.mxu0 %v731
        %2959 = vmatprep.subr.mxu0 %v730
        %2960 = vmatpush2.msra.mxu0 %v729
        %2961 = vmatprep.subr.mxu0 %v728
        %2962 = vmatpush2.msra.mxu0 %v727
        %2963 = vmatprep.subr.mxu0 %v726
        %2964 = vmatpush2.msra.mxu0 %v725
        %2965 = vmatprep.subr.mxu0 %v724
        %2966 = vmatpush2.msra.mxu0 %v723
        %2967 = vmatprep.subr.mxu0 %v722
        %2968 = vmatpush2.msra.mxu0 %v721
        %2969 = vmatprep.subr.mxu0 %v720
        %2970 = vmatpush2.msra.mxu0 %v719
        %2971 = vmatprep.subr.mxu0 %v718
        %2972 = vmatpush2.msra.mxu0 %v717
        %2973 = vmatprep.subr.mxu0 %v716
        %2974 = vmatpush2.msra.mxu0 %v715
        %2975 = vmatprep.subr.mxu0 %v714
        %2976 = vmatpush2.msra.mxu0 %v713
        %2977 = vmatprep.subr.mxu0 %v712
        %2978 = vmatpush2.msra.mxu0 %v711
        %2979 = vmatprep.subr.mxu0 %v710
        %2980 = vmatpush2.msra.mxu0 %v709
        %2981 = vmatprep.subr.mxu0 %v708
        %2982 = vmatpush2.msra.mxu0 %v707
        %2983 = vmatprep.subr.mxu0 %v706
        %2984 = vmatpush2.msra.mxu0 %v705
        %2985 = vmatprep.mubr.f32.mxu0 %v2467
        %2986 = vmatmul.mubr.f32.gmra.mxu0 %v2466
        %v2987 = vpop.f32.mrf.mxu0
        %v2988 = vadd.f32 0.0, %v2987
        %v2989 = vpop.f32.mrf.mxu0
        %v2990 = vadd.f32 0.0, %v2989
        %2991 = vdwg.mxu0
        %s2992 = scalar_lea.vmem [#allocation5], 24
        %v2993 = vld [vmem:[%s2992] sm:$0xff]
        %v2995 = vsel %vm2546, %v2993, 0
        %2997 = vmatprep.subr.mxu0 0.0
        %2998 = vmatpush1.msra.mxu0 0.0
        %2999 = vmatprep.subr.mxu0 0.0
        %3000 = vmatpush1.msra.mxu0 0.0
        %3001 = vmatprep.subr.mxu0 0.0
        %3002 = vmatpush1.msra.mxu0 0.0
        %3003 = vmatprep.subr.mxu0 0.0
        %3004 = vmatpush1.msra.mxu0 0.0
        %3005 = vmatprep.subr.mxu0 0.0
        %3006 = vmatpush1.msra.mxu0 0.0
        %3007 = vmatprep.subr.mxu0 0.0
        %3008 = vmatpush1.msra.mxu0 0.0
        %3009 = vmatprep.subr.mxu0 0.0
        %3010 = vmatpush1.msra.mxu0 0.0
        %3011 = vmatprep.subr.mxu0 0.0
        %3012 = vmatpush1.msra.mxu0 0.0
        %3013 = vmatprep.subr.mxu0 0.0
        %3014 = vmatpush1.msra.mxu0 0.0
        %3015 = vmatprep.subr.mxu0 0.0
        %3016 = vmatpush1.msra.mxu0 0.0
        %3017 = vmatprep.subr.mxu0 0.0
        %3018 = vmatpush1.msra.mxu0 0.0
        %3019 = vmatprep.subr.mxu0 0.0
        %3020 = vmatpush1.msra.mxu0 0.0
        %3021 = vmatprep.subr.mxu0 0.0
        %3022 = vmatpush1.msra.mxu0 0.0
        %3023 = vmatprep.subr.mxu0 0.0
        %3024 = vmatpush1.msra.mxu0 0.0
        %3025 = vmatprep.subr.mxu0 0.0
        %3026 = vmatpush1.msra.mxu0 0.0
        %3027 = vmatprep.subr.mxu0 %v2990
        %3028 = vmatpush1.msra.mxu0 %v2988
        %3029 = vmatprep.subr.mxu0 0.0
        %3030 = vmatpush2.msra.mxu0 0.0
        %3031 = vmatprep.subr.mxu0 0.0
        %3032 = vmatpush2.msra.mxu0 0.0
        %3033 = vmatprep.subr.mxu0 0.0
        %3034 = vmatpush2.msra.mxu0 0.0
        %3035 = vmatprep.subr.mxu0 0.0
        %3036 = vmatpush2.msra.mxu0 0.0
        %3037 = vmatprep.subr.mxu0 0.0
        %3038 = vmatpush2.msra.mxu0 0.0
        %3039 = vmatprep.subr.mxu0 0.0
        %3040 = vmatpush2.msra.mxu0 0.0
        %3041 = vmatprep.subr.mxu0 0.0
        %3042 = vmatpush2.msra.mxu0 0.0
        %3043 = vmatprep.subr.mxu0 0.0
        %3044 = vmatpush2.msra.mxu0 0.0
        %3045 = vmatprep.subr.mxu0 0.0
        %3046 = vmatpush2.msra.mxu0 0.0
        %3047 = vmatprep.subr.mxu0 0.0
        %3048 = vmatpush2.msra.mxu0 0.0
        %3049 = vmatprep.subr.mxu0 0.0
        %3050 = vmatpush2.msra.mxu0 0.0
        %3051 = vmatprep.subr.mxu0 0.0
        %3052 = vmatpush2.msra.mxu0 0.0
        %3053 = vmatprep.subr.mxu0 0.0
        %3054 = vmatpush2.msra.mxu0 0.0
        %3055 = vmatprep.subr.mxu0 0.0
        %3056 = vmatpush2.msra.mxu0 0.0
        %3057 = vmatprep.subr.mxu0 0.0
        %3058 = vmatpush2.msra.mxu0 0.0
        %3059 = vmatprep.subr.mxu0 0.0
        %3060 = vmatpush2.msra.mxu0 0.0
        %3061 = vmatprep.mubr.f32.mxu0 0.0
        %3062 = vmatmul.mubr.f32.gmra.mxu0 %v2995
        %v3063 = vpop.f32.mrf.mxu0
        %v3064 = vadd.f32 0.0, %v3063
        %v3065 = vpop.f32.mrf.mxu0
        %v3066 = vadd.f32 0.0, %v3065
        %3067 = vdwg.mxu0
        %v3068 = vadd.f32 %v2919, %v3064
        %v3069 = vadd.f32 %v2920, %v3066
        %s3070 = scalar_lea.vmem [#allocation5], 32
        %v3071 = vld [vmem:[%s3070] sm:$0xff]
        %v3073 = vsel %vm2546, %v3071, 0
        %3075 = vmatprep.subr.mxu0 0.0
        %3076 = vmatpush1.msra.mxu0 0.0
        %3077 = vmatprep.subr.mxu0 0.0
        %3078 = vmatpush1.msra.mxu0 0.0
        %3079 = vmatprep.subr.mxu0 0.0
        %3080 = vmatpush1.msra.mxu0 0.0
        %3081 = vmatprep.subr.mxu0 0.0
        %3082 = vmatpush1.msra.mxu0 0.0
        %3083 = vmatprep.subr.mxu0 0.0
        %3084 = vmatpush1.msra.mxu0 0.0
        %3085 = vmatprep.subr.mxu0 0.0
        %3086 = vmatpush1.msra.mxu0 0.0
        %3087 = vmatprep.subr.mxu0 0.0
        %3088 = vmatpush1.msra.mxu0 0.0
        %3089 = vmatprep.subr.mxu0 0.0
        %3090 = vmatpush1.msra.mxu0 0.0
        %3091 = vmatprep.subr.mxu0 0.0
        %3092 = vmatpush1.msra.mxu0 0.0
        %3093 = vmatprep.subr.mxu0 0.0
        %3094 = vmatpush1.msra.mxu0 0.0
        %3095 = vmatprep.subr.mxu0 0.0
        %3096 = vmatpush1.msra.mxu0 0.0
        %3097 = vmatprep.subr.mxu0 0.0
        %3098 = vmatpush1.msra.mxu0 0.0
        %3099 = vmatprep.subr.mxu0 0.0
        %3100 = vmatpush1.msra.mxu0 0.0
        %3101 = vmatprep.subr.mxu0 0.0
        %3102 = vmatpush1.msra.mxu0 0.0
        %3103 = vmatprep.subr.mxu0 0.0
        %3104 = vmatpush1.msra.mxu0 0.0
        %3105 = vmatprep.subr.mxu0 %v2467
        %3106 = vmatpush1.msra.mxu0 %v2466
        %3107 = vmatprep.subr.mxu0 0.0
        %3108 = vmatpush2.msra.mxu0 0.0
        %3109 = vmatprep.subr.mxu0 0.0
        %3110 = vmatpush2.msra.mxu0 0.0
        %3111 = vmatprep.subr.mxu0 0.0
        %3112 = vmatpush2.msra.mxu0 0.0
        %3113 = vmatprep.subr.mxu0 0.0
        %3114 = vmatpush2.msra.mxu0 0.0
        %3115 = vmatprep.subr.mxu0 0.0
        %3116 = vmatpush2.msra.mxu0 0.0
        %3117 = vmatprep.subr.mxu0 0.0
        %3118 = vmatpush2.msra.mxu0 0.0
        %3119 = vmatprep.subr.mxu0 0.0
        %3120 = vmatpush2.msra.mxu0 0.0
        %3121 = vmatprep.subr.mxu0 0.0
        %3122 = vmatpush2.msra.mxu0 0.0
        %3123 = vmatprep.subr.mxu0 0.0
        %3124 = vmatpush2.msra.mxu0 0.0
        %3125 = vmatprep.subr.mxu0 0.0
        %3126 = vmatpush2.msra.mxu0 0.0
        %3127 = vmatprep.subr.mxu0 0.0
        %3128 = vmatpush2.msra.mxu0 0.0
        %3129 = vmatprep.subr.mxu0 0.0
        %3130 = vmatpush2.msra.mxu0 0.0
        %3131 = vmatprep.subr.mxu0 0.0
        %3132 = vmatpush2.msra.mxu0 0.0
        %3133 = vmatprep.subr.mxu0 0.0
        %3134 = vmatpush2.msra.mxu0 0.0
        %3135 = vmatprep.subr.mxu0 0.0
        %3136 = vmatpush2.msra.mxu0 0.0
        %3137 = vmatprep.subr.mxu0 0.0
        %3138 = vmatpush2.msra.mxu0 0.0
        %3139 = vmatprep.mubr.f32.mxu0 0.0
        %3140 = vmatmul.mubr.f32.gmra.mxu0 %v3073
        %v3141 = vpop.f32.mrf.mxu0
        %v3142 = vadd.f32 0.0, %v3141
        %v3143 = vpop.f32.mrf.mxu0
        %v3144 = vadd.f32 0.0, %v3143
        %3145 = vdwg.mxu0
        %v3146 = vadd.f32 %v3068, %v3142
        %v3147 = vadd.f32 %v3069, %v3144
        %3148 = vmatprep.subr.mxu0 %v801
        %3149 = vmatpush1.msra.mxu0 %v800
        %3150 = vmatprep.subr.mxu0 %v799
        %3151 = vmatpush1.msra.mxu0 %v798
        %3152 = vmatprep.subr.mxu0 %v797
        %3153 = vmatpush1.msra.mxu0 %v796
        %3154 = vmatprep.subr.mxu0 %v795
        %3155 = vmatpush1.msra.mxu0 %v794
        %3156 = vmatprep.subr.mxu0 %v793
        %3157 = vmatpush1.msra.mxu0 %v792
        %3158 = vmatprep.subr.mxu0 %v791
        %3159 = vmatpush1.msra.mxu0 %v790
        %3160 = vmatprep.subr.mxu0 %v789
        %3161 = vmatpush1.msra.mxu0 %v788
        %3162 = vmatprep.subr.mxu0 %v787
        %3163 = vmatpush1.msra.mxu0 %v786
        %3164 = vmatprep.subr.mxu0 %v785
        %3165 = vmatpush1.msra.mxu0 %v784
        %3166 = vmatprep.subr.mxu0 %v783
        %3167 = vmatpush1.msra.mxu0 %v782
        %3168 = vmatprep.subr.mxu0 %v781
        %3169 = vmatpush1.msra.mxu0 %v780
        %3170 = vmatprep.subr.mxu0 %v779
        %3171 = vmatpush1.msra.mxu0 %v778
        %3172 = vmatprep.subr.mxu0 %v777
        %3173 = vmatpush1.msra.mxu0 %v776
        %3174 = vmatprep.subr.mxu0 %v775
        %3175 = vmatpush1.msra.mxu0 %v774
        %3176 = vmatprep.subr.mxu0 %v773
        %3177 = vmatpush1.msra.mxu0 %v772
        %3178 = vmatprep.subr.mxu0 %v771
        %3179 = vmatpush1.msra.mxu0 %v770
        %3180 = vmatprep.subr.mxu0 %v833
        %3181 = vmatpush2.msra.mxu0 %v832
        %3182 = vmatprep.subr.mxu0 %v831
        %3183 = vmatpush2.msra.mxu0 %v830
        %3184 = vmatprep.subr.mxu0 %v829
        %3185 = vmatpush2.msra.mxu0 %v828
        %3186 = vmatprep.subr.mxu0 %v827
        %3187 = vmatpush2.msra.mxu0 %v826
        %3188 = vmatprep.subr.mxu0 %v825
        %3189 = vmatpush2.msra.mxu0 %v824
        %3190 = vmatprep.subr.mxu0 %v823
        %3191 = vmatpush2.msra.mxu0 %v822
        %3192 = vmatprep.subr.mxu0 %v821
        %3193 = vmatpush2.msra.mxu0 %v820
        %3194 = vmatprep.subr.mxu0 %v819
        %3195 = vmatpush2.msra.mxu0 %v818
        %3196 = vmatprep.subr.mxu0 %v817
        %3197 = vmatpush2.msra.mxu0 %v816
        %3198 = vmatprep.subr.mxu0 %v815
        %3199 = vmatpush2.msra.mxu0 %v814
        %3200 = vmatprep.subr.mxu0 %v813
        %3201 = vmatpush2.msra.mxu0 %v812
        %3202 = vmatprep.subr.mxu0 %v811
        %3203 = vmatpush2.msra.mxu0 %v810
        %3204 = vmatprep.subr.mxu0 %v809
        %3205 = vmatpush2.msra.mxu0 %v808
        %3206 = vmatprep.subr.mxu0 %v807
        %3207 = vmatpush2.msra.mxu0 %v806
        %3208 = vmatprep.subr.mxu0 %v805
        %3209 = vmatpush2.msra.mxu0 %v804
        %3210 = vmatprep.subr.mxu0 %v803
        %3211 = vmatpush2.msra.mxu0 %v802
        %3212 = vmatprep.mubr.f32.mxu0 %v2467
        %3213 = vmatmul.mubr.f32.gmra.mxu0 %v2466
        %v3214 = vpop.f32.mrf.mxu0
        %v3215 = vadd.f32 0.0, %v3214
        %v3216 = vpop.f32.mrf.mxu0
        %v3217 = vadd.f32 0.0, %v3216
        %3218 = vdwg.mxu0
        %s3219 = scalar_lea.vmem [#allocation5], 40
        %v3220 = vld [vmem:[%s3219] sm:$0xff]
        %v3222 = vsel %vm2546, %v3220, 0
        %3224 = vmatprep.subr.mxu0 0.0
        %3225 = vmatpush1.msra.mxu0 0.0
        %3226 = vmatprep.subr.mxu0 0.0
        %3227 = vmatpush1.msra.mxu0 0.0
        %3228 = vmatprep.subr.mxu0 0.0
        %3229 = vmatpush1.msra.mxu0 0.0
        %3230 = vmatprep.subr.mxu0 0.0
        %3231 = vmatpush1.msra.mxu0 0.0
        %3232 = vmatprep.subr.mxu0 0.0
        %3233 = vmatpush1.msra.mxu0 0.0
        %3234 = vmatprep.subr.mxu0 0.0
        %3235 = vmatpush1.msra.mxu0 0.0
        %3236 = vmatprep.subr.mxu0 0.0
        %3237 = vmatpush1.msra.mxu0 0.0
        %3238 = vmatprep.subr.mxu0 0.0
        %3239 = vmatpush1.msra.mxu0 0.0
        %3240 = vmatprep.subr.mxu0 0.0
        %3241 = vmatpush1.msra.mxu0 0.0
        %3242 = vmatprep.subr.mxu0 0.0
        %3243 = vmatpush1.msra.mxu0 0.0
        %3244 = vmatprep.subr.mxu0 0.0
        %3245 = vmatpush1.msra.mxu0 0.0
        %3246 = vmatprep.subr.mxu0 0.0
        %3247 = vmatpush1.msra.mxu0 0.0
        %3248 = vmatprep.subr.mxu0 0.0
        %3249 = vmatpush1.msra.mxu0 0.0
        %3250 = vmatprep.subr.mxu0 0.0
        %3251 = vmatpush1.msra.mxu0 0.0
        %3252 = vmatprep.subr.mxu0 0.0
        %3253 = vmatpush1.msra.mxu0 0.0
        %3254 = vmatprep.subr.mxu0 %v3217
        %3255 = vmatpush1.msra.mxu0 %v3215
        %3256 = vmatprep.subr.mxu0 0.0
        %3257 = vmatpush2.msra.mxu0 0.0
        %3258 = vmatprep.subr.mxu0 0.0
        %3259 = vmatpush2.msra.mxu0 0.0
        %3260 = vmatprep.subr.mxu0 0.0
        %3261 = vmatpush2.msra.mxu0 0.0
        %3262 = vmatprep.subr.mxu0 0.0
        %3263 = vmatpush2.msra.mxu0 0.0
        %3264 = vmatprep.subr.mxu0 0.0
        %3265 = vmatpush2.msra.mxu0 0.0
        %3266 = vmatprep.subr.mxu0 0.0
        %3267 = vmatpush2.msra.mxu0 0.0
        %3268 = vmatprep.subr.mxu0 0.0
        %3269 = vmatpush2.msra.mxu0 0.0
        %3270 = vmatprep.subr.mxu0 0.0
        %3271 = vmatpush2.msra.mxu0 0.0
        %3272 = vmatprep.subr.mxu0 0.0
        %3273 = vmatpush2.msra.mxu0 0.0
        %3274 = vmatprep.subr.mxu0 0.0
        %3275 = vmatpush2.msra.mxu0 0.0
        %3276 = vmatprep.subr.mxu0 0.0
        %3277 = vmatpush2.msra.mxu0 0.0
        %3278 = vmatprep.subr.mxu0 0.0
        %3279 = vmatpush2.msra.mxu0 0.0
        %3280 = vmatprep.subr.mxu0 0.0
        %3281 = vmatpush2.msra.mxu0 0.0
        %3282 = vmatprep.subr.mxu0 0.0
        %3283 = vmatpush2.msra.mxu0 0.0
        %3284 = vmatprep.subr.mxu0 0.0
        %3285 = vmatpush2.msra.mxu0 0.0
        %3286 = vmatprep.subr.mxu0 0.0
        %3287 = vmatpush2.msra.mxu0 0.0
        %3288 = vmatprep.mubr.f32.mxu0 0.0
        %3289 = vmatmul.mubr.f32.gmra.mxu0 %v3222
        %v3290 = vpop.f32.mrf.mxu0
        %v3291 = vadd.f32 0.0, %v3290
        %v3292 = vpop.f32.mrf.mxu0
        %v3293 = vadd.f32 0.0, %v3292
        %3294 = vdwg.mxu0
        %v3295 = vadd.f32 %v3146, %v3291
        %v3296 = vadd.f32 %v3147, %v3293
        %3297 = vmatprep.subr.mxu0 %v898
        %3298 = vmatpush1.msra.mxu0 %v897
        %3299 = vmatprep.subr.mxu0 %v896
        %3300 = vmatpush1.msra.mxu0 %v895
        %3301 = vmatprep.subr.mxu0 %v894
        %3302 = vmatpush1.msra.mxu0 %v893
        %3303 = vmatprep.subr.mxu0 %v892
        %3304 = vmatpush1.msra.mxu0 %v891
        %3305 = vmatprep.subr.mxu0 %v890
        %3306 = vmatpush1.msra.mxu0 %v889
        %3307 = vmatprep.subr.mxu0 %v888
        %3308 = vmatpush1.msra.mxu0 %v887
        %3309 = vmatprep.subr.mxu0 %v886
        %3310 = vmatpush1.msra.mxu0 %v885
        %3311 = vmatprep.subr.mxu0 %v884
        %3312 = vmatpush1.msra.mxu0 %v883
        %3313 = vmatprep.subr.mxu0 %v882
        %3314 = vmatpush1.msra.mxu0 %v881
        %3315 = vmatprep.subr.mxu0 %v880
        %3316 = vmatpush1.msra.mxu0 %v879
        %3317 = vmatprep.subr.mxu0 %v878
        %3318 = vmatpush1.msra.mxu0 %v877
        %3319 = vmatprep.subr.mxu0 %v876
        %3320 = vmatpush1.msra.mxu0 %v875
        %3321 = vmatprep.subr.mxu0 %v874
        %3322 = vmatpush1.msra.mxu0 %v873
        %3323 = vmatprep.subr.mxu0 %v872
        %3324 = vmatpush1.msra.mxu0 %v871
        %3325 = vmatprep.subr.mxu0 %v870
        %3326 = vmatpush1.msra.mxu0 %v869
        %3327 = vmatprep.subr.mxu0 %v868
        %3328 = vmatpush1.msra.mxu0 %v867
        %3329 = vmatprep.subr.mxu0 %v930
        %3330 = vmatpush2.msra.mxu0 %v929
        %3331 = vmatprep.subr.mxu0 %v928
        %3332 = vmatpush2.msra.mxu0 %v927
        %3333 = vmatprep.subr.mxu0 %v926
        %3334 = vmatpush2.msra.mxu0 %v925
        %3335 = vmatprep.subr.mxu0 %v924
        %3336 = vmatpush2.msra.mxu0 %v923
        %3337 = vmatprep.subr.mxu0 %v922
        %3338 = vmatpush2.msra.mxu0 %v921
        %3339 = vmatprep.subr.mxu0 %v920
        %3340 = vmatpush2.msra.mxu0 %v919
        %3341 = vmatprep.subr.mxu0 %v918
        %3342 = vmatpush2.msra.mxu0 %v917
        %3343 = vmatprep.subr.mxu0 %v916
        %3344 = vmatpush2.msra.mxu0 %v915
        %3345 = vmatprep.subr.mxu0 %v914
        %3346 = vmatpush2.msra.mxu0 %v913
        %3347 = vmatprep.subr.mxu0 %v912
        %3348 = vmatpush2.msra.mxu0 %v911
        %3349 = vmatprep.subr.mxu0 %v910
        %3350 = vmatpush2.msra.mxu0 %v909
        %3351 = vmatprep.subr.mxu0 %v908
        %3352 = vmatpush2.msra.mxu0 %v907
        %3353 = vmatprep.subr.mxu0 %v906
        %3354 = vmatpush2.msra.mxu0 %v905
        %3355 = vmatprep.subr.mxu0 %v904
        %3356 = vmatpush2.msra.mxu0 %v903
        %3357 = vmatprep.subr.mxu0 %v902
        %3358 = vmatpush2.msra.mxu0 %v901
        %3359 = vmatprep.subr.mxu0 %v900
        %3360 = vmatpush2.msra.mxu0 %v899
        %3361 = vmatprep.mubr.f32.mxu0 %v2467
        %3362 = vmatmul.mubr.f32.gmra.mxu0 %v2466
        %v3363 = vpop.f32.mrf.mxu0
        %v3364 = vadd.f32 0.0, %v3363
        %v3365 = vpop.f32.mrf.mxu0
        %v3366 = vadd.f32 0.0, %v3365
        %3367 = vdwg.mxu0
        %s3368 = scalar_lea.vmem [#allocation5], 48
        %v3369 = vld [vmem:[%s3368] sm:$0xff]
        %v3371 = vsel %vm2546, %v3369, 0
        %3373 = vmatprep.subr.mxu0 0.0
        %3374 = vmatpush1.msra.mxu0 0.0
        %3375 = vmatprep.subr.mxu0 0.0
        %3376 = vmatpush1.msra.mxu0 0.0
        %3377 = vmatprep.subr.mxu0 0.0
        %3378 = vmatpush1.msra.mxu0 0.0
        %3379 = vmatprep.subr.mxu0 0.0
        %3380 = vmatpush1.msra.mxu0 0.0
        %3381 = vmatprep.subr.mxu0 0.0
        %3382 = vmatpush1.msra.mxu0 0.0
        %3383 = vmatprep.subr.mxu0 0.0
        %3384 = vmatpush1.msra.mxu0 0.0
        %3385 = vmatprep.subr.mxu0 0.0
        %3386 = vmatpush1.msra.mxu0 0.0
        %3387 = vmatprep.subr.mxu0 0.0
        %3388 = vmatpush1.msra.mxu0 0.0
        %3389 = vmatprep.subr.mxu0 0.0
        %3390 = vmatpush1.msra.mxu0 0.0
        %3391 = vmatprep.subr.mxu0 0.0
        %3392 = vmatpush1.msra.mxu0 0.0
        %3393 = vmatprep.subr.mxu0 0.0
        %3394 = vmatpush1.msra.mxu0 0.0
        %3395 = vmatprep.subr.mxu0 0.0
        %3396 = vmatpush1.msra.mxu0 0.0
        %3397 = vmatprep.subr.mxu0 0.0
        %3398 = vmatpush1.msra.mxu0 0.0
        %3399 = vmatprep.subr.mxu0 0.0
        %3400 = vmatpush1.msra.mxu0 0.0
        %3401 = vmatprep.subr.mxu0 0.0
        %3402 = vmatpush1.msra.mxu0 0.0
        %3403 = vmatprep.subr.mxu0 %v3366
        %3404 = vmatpush1.msra.mxu0 %v3364
        %3405 = vmatprep.subr.mxu0 0.0
        %3406 = vmatpush2.msra.mxu0 0.0
        %3407 = vmatprep.subr.mxu0 0.0
        %3408 = vmatpush2.msra.mxu0 0.0
        %3409 = vmatprep.subr.mxu0 0.0
        %3410 = vmatpush2.msra.mxu0 0.0
        %3411 = vmatprep.subr.mxu0 0.0
        %3412 = vmatpush2.msra.mxu0 0.0
        %3413 = vmatprep.subr.mxu0 0.0
        %3414 = vmatpush2.msra.mxu0 0.0
        %3415 = vmatprep.subr.mxu0 0.0
        %3416 = vmatpush2.msra.mxu0 0.0
        %3417 = vmatprep.subr.mxu0 0.0
        %3418 = vmatpush2.msra.mxu0 0.0
        %3419 = vmatprep.subr.mxu0 0.0
        %3420 = vmatpush2.msra.mxu0 0.0
        %3421 = vmatprep.subr.mxu0 0.0
        %3422 = vmatpush2.msra.mxu0 0.0
        %3423 = vmatprep.subr.mxu0 0.0
        %3424 = vmatpush2.msra.mxu0 0.0
        %3425 = vmatprep.subr.mxu0 0.0
        %3426 = vmatpush2.msra.mxu0 0.0
        %3427 = vmatprep.subr.mxu0 0.0
        %3428 = vmatpush2.msra.mxu0 0.0
        %3429 = vmatprep.subr.mxu0 0.0
        %3430 = vmatpush2.msra.mxu0 0.0
        %3431 = vmatprep.subr.mxu0 0.0
        %3432 = vmatpush2.msra.mxu0 0.0
        %3433 = vmatprep.subr.mxu0 0.0
        %3434 = vmatpush2.msra.mxu0 0.0
        %3435 = vmatprep.subr.mxu0 0.0
        %3436 = vmatpush2.msra.mxu0 0.0
        %3437 = vmatprep.mubr.f32.mxu0 0.0
        %3438 = vmatmul.mubr.f32.gmra.mxu0 %v3371
        %v3439 = vpop.f32.mrf.mxu0
        %v3440 = vadd.f32 0.0, %v3439
        %v3441 = vpop.f32.mrf.mxu0
        %v3442 = vadd.f32 0.0, %v3441
        %3443 = vdwg.mxu0
        %v3444 = vadd.f32 %v3295, %v3440
        %v3445 = vadd.f32 %v3296, %v3442
        %3446 = vmatprep.subr.mxu0 %v995
        %3447 = vmatpush1.msra.mxu0 %v994
        %3448 = vmatprep.subr.mxu0 %v993
        %3449 = vmatpush1.msra.mxu0 %v992
        %3450 = vmatprep.subr.mxu0 %v991
        %3451 = vmatpush1.msra.mxu0 %v990
        %3452 = vmatprep.subr.mxu0 %v989
        %3453 = vmatpush1.msra.mxu0 %v988
        %3454 = vmatprep.subr.mxu0 %v987
        %3455 = vmatpush1.msra.mxu0 %v986
        %3456 = vmatprep.subr.mxu0 %v985
        %3457 = vmatpush1.msra.mxu0 %v984
        %3458 = vmatprep.subr.mxu0 %v983
        %3459 = vmatpush1.msra.mxu0 %v982
        %3460 = vmatprep.subr.mxu0 %v981
        %3461 = vmatpush1.msra.mxu0 %v980
        %3462 = vmatprep.subr.mxu0 %v979
        %3463 = vmatpush1.msra.mxu0 %v978
        %3464 = vmatprep.subr.mxu0 %v977
        %3465 = vmatpush1.msra.mxu0 %v976
        %3466 = vmatprep.subr.mxu0 %v975
        %3467 = vmatpush1.msra.mxu0 %v974
        %3468 = vmatprep.subr.mxu0 %v973
        %3469 = vmatpush1.msra.mxu0 %v972
        %3470 = vmatprep.subr.mxu0 %v971
        %3471 = vmatpush1.msra.mxu0 %v970
        %3472 = vmatprep.subr.mxu0 %v969
        %3473 = vmatpush1.msra.mxu0 %v968
        %3474 = vmatprep.subr.mxu0 %v967
        %3475 = vmatpush1.msra.mxu0 %v966
        %3476 = vmatprep.subr.mxu0 %v965
        %3477 = vmatpush1.msra.mxu0 %v964
        %3478 = vmatprep.subr.mxu0 %v1027
        %3479 = vmatpush2.msra.mxu0 %v1026
        %3480 = vmatprep.subr.mxu0 %v1025
        %3481 = vmatpush2.msra.mxu0 %v1024
        %3482 = vmatprep.subr.mxu0 %v1023
        %3483 = vmatpush2.msra.mxu0 %v1022
        %3484 = vmatprep.subr.mxu0 %v1021
        %3485 = vmatpush2.msra.mxu0 %v1020
        %3486 = vmatprep.subr.mxu0 %v1019
        %3487 = vmatpush2.msra.mxu0 %v1018
        %3488 = vmatprep.subr.mxu0 %v1017
        %3489 = vmatpush2.msra.mxu0 %v1016
        %3490 = vmatprep.subr.mxu0 %v1015
        %3491 = vmatpush2.msra.mxu0 %v1014
        %3492 = vmatprep.subr.mxu0 %v1013
        %3493 = vmatpush2.msra.mxu0 %v1012
        %3494 = vmatprep.subr.mxu0 %v1011
        %3495 = vmatpush2.msra.mxu0 %v1010
        %3496 = vmatprep.subr.mxu0 %v1009
        %3497 = vmatpush2.msra.mxu0 %v1008
        %3498 = vmatprep.subr.mxu0 %v1007
        %3499 = vmatpush2.msra.mxu0 %v1006
        %3500 = vmatprep.subr.mxu0 %v1005
        %3501 = vmatpush2.msra.mxu0 %v1004
        %3502 = vmatprep.subr.mxu0 %v1003
        %3503 = vmatpush2.msra.mxu0 %v1002
        %3504 = vmatprep.subr.mxu0 %v1001
        %3505 = vmatpush2.msra.mxu0 %v1000
        %3506 = vmatprep.subr.mxu0 %v999
        %3507 = vmatpush2.msra.mxu0 %v998
        %3508 = vmatprep.subr.mxu0 %v997
        %3509 = vmatpush2.msra.mxu0 %v996
        %3510 = vmatprep.mubr.f32.mxu0 %v2467
        %3511 = vmatmul.mubr.f32.gmra.mxu0 %v2466
        %v3512 = vpop.f32.mrf.mxu0
        %v3513 = vadd.f32 0.0, %v3512
        %v3514 = vpop.f32.mrf.mxu0
        %v3515 = vadd.f32 0.0, %v3514
        %3516 = vdwg.mxu0
        %s3517 = scalar_lea.vmem [#allocation5], 56
        %v3518 = vld [vmem:[%s3517] sm:$0xff]
        %v3520 = vsel %vm2546, %v3518, 0
        %3522 = vmatprep.subr.mxu0 0.0
        %3523 = vmatpush1.msra.mxu0 0.0
        %3524 = vmatprep.subr.mxu0 0.0
        %3525 = vmatpush1.msra.mxu0 0.0
        %3526 = vmatprep.subr.mxu0 0.0
        %3527 = vmatpush1.msra.mxu0 0.0
        %3528 = vmatprep.subr.mxu0 0.0
        %3529 = vmatpush1.msra.mxu0 0.0
        %3530 = vmatprep.subr.mxu0 0.0
        %3531 = vmatpush1.msra.mxu0 0.0
        %3532 = vmatprep.subr.mxu0 0.0
        %3533 = vmatpush1.msra.mxu0 0.0
        %3534 = vmatprep.subr.mxu0 0.0
        %3535 = vmatpush1.msra.mxu0 0.0
        %3536 = vmatprep.subr.mxu0 0.0
        %3537 = vmatpush1.msra.mxu0 0.0
        %3538 = vmatprep.subr.mxu0 0.0
        %3539 = vmatpush1.msra.mxu0 0.0
        %3540 = vmatprep.subr.mxu0 0.0
        %3541 = vmatpush1.msra.mxu0 0.0
        %3542 = vmatprep.subr.mxu0 0.0
        %3543 = vmatpush1.msra.mxu0 0.0
        %3544 = vmatprep.subr.mxu0 0.0
        %3545 = vmatpush1.msra.mxu0 0.0
        %3546 = vmatprep.subr.mxu0 0.0
        %3547 = vmatpush1.msra.mxu0 0.0
        %3548 = vmatprep.subr.mxu0 0.0
        %3549 = vmatpush1.msra.mxu0 0.0
        %3550 = vmatprep.subr.mxu0 0.0
        %3551 = vmatpush1.msra.mxu0 0.0
        %3552 = vmatprep.subr.mxu0 %v3515
        %3553 = vmatpush1.msra.mxu0 %v3513
        %3554 = vmatprep.subr.mxu0 0.0
        %3555 = vmatpush2.msra.mxu0 0.0
        %3556 = vmatprep.subr.mxu0 0.0
        %3557 = vmatpush2.msra.mxu0 0.0
        %3558 = vmatprep.subr.mxu0 0.0
        %3559 = vmatpush2.msra.mxu0 0.0
        %3560 = vmatprep.subr.mxu0 0.0
        %3561 = vmatpush2.msra.mxu0 0.0
        %3562 = vmatprep.subr.mxu0 0.0
        %3563 = vmatpush2.msra.mxu0 0.0
        %3564 = vmatprep.subr.mxu0 0.0
        %3565 = vmatpush2.msra.mxu0 0.0
        %3566 = vmatprep.subr.mxu0 0.0
        %3567 = vmatpush2.msra.mxu0 0.0
        %3568 = vmatprep.subr.mxu0 0.0
        %3569 = vmatpush2.msra.mxu0 0.0
        %3570 = vmatprep.subr.mxu0 0.0
        %3571 = vmatpush2.msra.mxu0 0.0
        %3572 = vmatprep.subr.mxu0 0.0
        %3573 = vmatpush2.msra.mxu0 0.0
        %3574 = vmatprep.subr.mxu0 0.0
        %3575 = vmatpush2.msra.mxu0 0.0
        %3576 = vmatprep.subr.mxu0 0.0
        %3577 = vmatpush2.msra.mxu0 0.0
        %3578 = vmatprep.subr.mxu0 0.0
        %3579 = vmatpush2.msra.mxu0 0.0
        %3580 = vmatprep.subr.mxu0 0.0
        %3581 = vmatpush2.msra.mxu0 0.0
        %3582 = vmatprep.subr.mxu0 0.0
        %3583 = vmatpush2.msra.mxu0 0.0
        %3584 = vmatprep.subr.mxu0 0.0
        %3585 = vmatpush2.msra.mxu0 0.0
        %3586 = vmatprep.mubr.f32.mxu0 0.0
        %3587 = vmatmul.mubr.f32.gmra.mxu0 %v3520
        %v3588 = vpop.f32.mrf.mxu0
        %v3589 = vadd.f32 0.0, %v3588
        %v3590 = vpop.f32.mrf.mxu0
        %v3591 = vadd.f32 0.0, %v3590
        %3592 = vdwg.mxu0
        %v3593 = vadd.f32 %v3444, %v3589
        %v3594 = vadd.f32 %v3445, %v3591
        %3595 = vmatprep.subr.mxu0 %v1092
        %3596 = vmatpush1.msra.mxu0 %v1091
        %3597 = vmatprep.subr.mxu0 %v1090
        %3598 = vmatpush1.msra.mxu0 %v1089
        %3599 = vmatprep.subr.mxu0 %v1088
        %3600 = vmatpush1.msra.mxu0 %v1087
        %3601 = vmatprep.subr.mxu0 %v1086
        %3602 = vmatpush1.msra.mxu0 %v1085
        %3603 = vmatprep.subr.mxu0 %v1084
        %3604 = vmatpush1.msra.mxu0 %v1083
        %3605 = vmatprep.subr.mxu0 %v1082
        %3606 = vmatpush1.msra.mxu0 %v1081
        %3607 = vmatprep.subr.mxu0 %v1080
        %3608 = vmatpush1.msra.mxu0 %v1079
        %3609 = vmatprep.subr.mxu0 %v1078
        %3610 = vmatpush1.msra.mxu0 %v1077
        %3611 = vmatprep.subr.mxu0 %v1076
        %3612 = vmatpush1.msra.mxu0 %v1075
        %3613 = vmatprep.subr.mxu0 %v1074
        %3614 = vmatpush1.msra.mxu0 %v1073
        %3615 = vmatprep.subr.mxu0 %v1072
        %3616 = vmatpush1.msra.mxu0 %v1071
        %3617 = vmatprep.subr.mxu0 %v1070
        %3618 = vmatpush1.msra.mxu0 %v1069
        %3619 = vmatprep.subr.mxu0 %v1068
        %3620 = vmatpush1.msra.mxu0 %v1067
        %3621 = vmatprep.subr.mxu0 %v1066
        %3622 = vmatpush1.msra.mxu0 %v1065
        %3623 = vmatprep.subr.mxu0 %v1064
        %3624 = vmatpush1.msra.mxu0 %v1063
        %3625 = vmatprep.subr.mxu0 %v1062
        %3626 = vmatpush1.msra.mxu0 %v1061
        %3627 = vmatprep.subr.mxu0 %v1124
        %3628 = vmatpush2.msra.mxu0 %v1123
        %3629 = vmatprep.subr.mxu0 %v1122
        %3630 = vmatpush2.msra.mxu0 %v1121
        %3631 = vmatprep.subr.mxu0 %v1120
        %3632 = vmatpush2.msra.mxu0 %v1119
        %3633 = vmatprep.subr.mxu0 %v1118
        %3634 = vmatpush2.msra.mxu0 %v1117
        %3635 = vmatprep.subr.mxu0 %v1116
        %3636 = vmatpush2.msra.mxu0 %v1115
        %3637 = vmatprep.subr.mxu0 %v1114
        %3638 = vmatpush2.msra.mxu0 %v1113
        %3639 = vmatprep.subr.mxu0 %v1112
        %3640 = vmatpush2.msra.mxu0 %v1111
        %3641 = vmatprep.subr.mxu0 %v1110
        %3642 = vmatpush2.msra.mxu0 %v1109
        %3643 = vmatprep.subr.mxu0 %v1108
        %3644 = vmatpush2.msra.mxu0 %v1107
        %3645 = vmatprep.subr.mxu0 %v1106
        %3646 = vmatpush2.msra.mxu0 %v1105
        %3647 = vmatprep.subr.mxu0 %v1104
        %3648 = vmatpush2.msra.mxu0 %v1103
        %3649 = vmatprep.subr.mxu0 %v1102
        %3650 = vmatpush2.msra.mxu0 %v1101
        %3651 = vmatprep.subr.mxu0 %v1100
        %3652 = vmatpush2.msra.mxu0 %v1099
        %3653 = vmatprep.subr.mxu0 %v1098
        %3654 = vmatpush2.msra.mxu0 %v1097
        %3655 = vmatprep.subr.mxu0 %v1096
        %3656 = vmatpush2.msra.mxu0 %v1095
        %3657 = vmatprep.subr.mxu0 %v1094
        %3658 = vmatpush2.msra.mxu0 %v1093
        %3659 = vmatprep.mubr.f32.mxu0 %v2467
        %3660 = vmatmul.mubr.f32.gmra.mxu0 %v2466
        %v3661 = vpop.f32.mrf.mxu0
        %v3662 = vadd.f32 0.0, %v3661
        %v3663 = vpop.f32.mrf.mxu0
        %v3664 = vadd.f32 0.0, %v3663
        %3665 = vdwg.mxu0
        %s3666 = scalar_lea.vmem [#allocation5], 64
        %v3667 = vld [vmem:[%s3666] sm:$0xff]
        %v3669 = vsel %vm2546, %v3667, 0
        %3671 = vmatprep.subr.mxu0 0.0
        %3672 = vmatpush1.msra.mxu0 0.0
        %3673 = vmatprep.subr.mxu0 0.0
        %3674 = vmatpush1.msra.mxu0 0.0
        %3675 = vmatprep.subr.mxu0 0.0
        %3676 = vmatpush1.msra.mxu0 0.0
        %3677 = vmatprep.subr.mxu0 0.0
        %3678 = vmatpush1.msra.mxu0 0.0
        %3679 = vmatprep.subr.mxu0 0.0
        %3680 = vmatpush1.msra.mxu0 0.0
        %3681 = vmatprep.subr.mxu0 0.0
        %3682 = vmatpush1.msra.mxu0 0.0
        %3683 = vmatprep.subr.mxu0 0.0
        %3684 = vmatpush1.msra.mxu0 0.0
        %3685 = vmatprep.subr.mxu0 0.0
        %3686 = vmatpush1.msra.mxu0 0.0
        %3687 = vmatprep.subr.mxu0 0.0
        %3688 = vmatpush1.msra.mxu0 0.0
        %3689 = vmatprep.subr.mxu0 0.0
        %3690 = vmatpush1.msra.mxu0 0.0
        %3691 = vmatprep.subr.mxu0 0.0
        %3692 = vmatpush1.msra.mxu0 0.0
        %3693 = vmatprep.subr.mxu0 0.0
        %3694 = vmatpush1.msra.mxu0 0.0
        %3695 = vmatprep.subr.mxu0 0.0
        %3696 = vmatpush1.msra.mxu0 0.0
        %3697 = vmatprep.subr.mxu0 0.0
        %3698 = vmatpush1.msra.mxu0 0.0
        %3699 = vmatprep.subr.mxu0 0.0
        %3700 = vmatpush1.msra.mxu0 0.0
        %3701 = vmatprep.subr.mxu0 %v3664
        %3702 = vmatpush1.msra.mxu0 %v3662
        %3703 = vmatprep.subr.mxu0 0.0
        %3704 = vmatpush2.msra.mxu0 0.0
        %3705 = vmatprep.subr.mxu0 0.0
        %3706 = vmatpush2.msra.mxu0 0.0
        %3707 = vmatprep.subr.mxu0 0.0
        %3708 = vmatpush2.msra.mxu0 0.0
        %3709 = vmatprep.subr.mxu0 0.0
        %3710 = vmatpush2.msra.mxu0 0.0
        %3711 = vmatprep.subr.mxu0 0.0
        %3712 = vmatpush2.msra.mxu0 0.0
        %3713 = vmatprep.subr.mxu0 0.0
        %3714 = vmatpush2.msra.mxu0 0.0
        %3715 = vmatprep.subr.mxu0 0.0
        %3716 = vmatpush2.msra.mxu0 0.0
        %3717 = vmatprep.subr.mxu0 0.0
        %3718 = vmatpush2.msra.mxu0 0.0
        %3719 = vmatprep.subr.mxu0 0.0
        %3720 = vmatpush2.msra.mxu0 0.0
        %3721 = vmatprep.subr.mxu0 0.0
        %3722 = vmatpush2.msra.mxu0 0.0
        %3723 = vmatprep.subr.mxu0 0.0
        %3724 = vmatpush2.msra.mxu0 0.0
        %3725 = vmatprep.subr.mxu0 0.0
        %3726 = vmatpush2.msra.mxu0 0.0
        %3727 = vmatprep.subr.mxu0 0.0
        %3728 = vmatpush2.msra.mxu0 0.0
        %3729 = vmatprep.subr.mxu0 0.0
        %3730 = vmatpush2.msra.mxu0 0.0
        %3731 = vmatprep.subr.mxu0 0.0
        %3732 = vmatpush2.msra.mxu0 0.0
        %3733 = vmatprep.subr.mxu0 0.0
        %3734 = vmatpush2.msra.mxu0 0.0
        %3735 = vmatprep.mubr.f32.mxu0 0.0
        %3736 = vmatmul.mubr.f32.gmra.mxu0 %v3669
        %v3737 = vpop.f32.mrf.mxu0
        %v3738 = vadd.f32 0.0, %v3737
        %v3739 = vpop.f32.mrf.mxu0
        %v3740 = vadd.f32 0.0, %v3739
        %3741 = vdwg.mxu0
        %v3742 = vadd.f32 %v3593, %v3738
        %v3743 = vadd.f32 %v3594, %v3740
        %v3744 = vmax.f32 %v3742, 0.0
        %v3745 = vmax.f32 %v3743, 0.0
        %v3746 = vld [vmem:[#allocation2] sm:$0x1]
        %3748 = vset.pattern.permute.xlu0 0
        %3749 = vperm.xlu0 %3748, %v3746
        %v3750 = vpop.permute.xlu0 %3749
        %v3752 = vlaneseq
        %v3753 = vshrl.u32 %v3752, 7
        %v3754 = vsub.s32 0, %v3753
        %v3755 = vrot.slane %v3750, %v3754
        %3756 = vmatprep.subr.mxu0 %v413
        %3757 = vmatpush1.msra.mxu0 %v412
        %3758 = vmatprep.subr.mxu0 %v411
        %3759 = vmatpush1.msra.mxu0 %v410
        %3760 = vmatprep.subr.mxu0 %v409
        %3761 = vmatpush1.msra.mxu0 %v408
        %3762 = vmatprep.subr.mxu0 %v407
        %3763 = vmatpush1.msra.mxu0 %v406
        %3764 = vmatprep.subr.mxu0 %v405
        %3765 = vmatpush1.msra.mxu0 %v404
        %3766 = vmatprep.subr.mxu0 %v403
        %3767 = vmatpush1.msra.mxu0 %v402
        %3768 = vmatprep.subr.mxu0 %v401
        %3769 = vmatpush1.msra.mxu0 %v400
        %3770 = vmatprep.subr.mxu0 %v399
        %3771 = vmatpush1.msra.mxu0 %v398
        %3772 = vmatprep.subr.mxu0 %v397
        %3773 = vmatpush1.msra.mxu0 %v396
        %3774 = vmatprep.subr.mxu0 %v395
        %3775 = vmatpush1.msra.mxu0 %v394
        %3776 = vmatprep.subr.mxu0 %v393
        %3777 = vmatpush1.msra.mxu0 %v392
        %3778 = vmatprep.subr.mxu0 %v391
        %3779 = vmatpush1.msra.mxu0 %v390
        %3780 = vmatprep.subr.mxu0 %v389
        %3781 = vmatpush1.msra.mxu0 %v388
        %3782 = vmatprep.subr.mxu0 %v387
        %3783 = vmatpush1.msra.mxu0 %v386
        %3784 = vmatprep.subr.mxu0 %v385
        %3785 = vmatpush1.msra.mxu0 %v384
        %3786 = vmatprep.subr.mxu0 %v383
        %3787 = vmatpush1.msra.mxu0 %v382
        %3788 = vmatprep.subr.mxu0 %v445
        %3789 = vmatpush2.msra.mxu0 %v444
        %3790 = vmatprep.subr.mxu0 %v443
        %3791 = vmatpush2.msra.mxu0 %v442
        %3792 = vmatprep.subr.mxu0 %v441
        %3793 = vmatpush2.msra.mxu0 %v440
        %3794 = vmatprep.subr.mxu0 %v439
        %3795 = vmatpush2.msra.mxu0 %v438
        %3796 = vmatprep.subr.mxu0 %v437
        %3797 = vmatpush2.msra.mxu0 %v436
        %3798 = vmatprep.subr.mxu0 %v435
        %3799 = vmatpush2.msra.mxu0 %v434
        %3800 = vmatprep.subr.mxu0 %v433
        %3801 = vmatpush2.msra.mxu0 %v432
        %3802 = vmatprep.subr.mxu0 %v431
        %3803 = vmatpush2.msra.mxu0 %v430
        %3804 = vmatprep.subr.mxu0 %v429
        %3805 = vmatpush2.msra.mxu0 %v428
        %3806 = vmatprep.subr.mxu0 %v427
        %3807 = vmatpush2.msra.mxu0 %v426
        %3808 = vmatprep.subr.mxu0 %v425
        %3809 = vmatpush2.msra.mxu0 %v424
        %3810 = vmatprep.subr.mxu0 %v423
        %3811 = vmatpush2.msra.mxu0 %v422
        %3812 = vmatprep.subr.mxu0 %v421
        %3813 = vmatpush2.msra.mxu0 %v420
        %3814 = vmatprep.subr.mxu0 %v419
        %3815 = vmatpush2.msra.mxu0 %v418
        %3816 = vmatprep.subr.mxu0 %v417
        %3817 = vmatpush2.msra.mxu0 %v416
        %3818 = vmatprep.subr.mxu0 %v415
        %3819 = vmatpush2.msra.mxu0 %v414
        %3820 = vmatprep.mubr.f32.mxu0 %v3745
        %3821 = vmatmul.mubr.f32.gmra.mxu0 %v3744
        %v3822 = vpop.f32.mrf.mxu0
        %v3823 = vadd.f32 0.0, %v3822
        %v3824 = vpop.f32.mrf.mxu0
        %v3825 = vadd.f32 0.0, %v3824
        %3826 = vdwg.mxu0
        %v3827 = vld [vmem:[#allocation7] sm:$0x1]
        %v3829 = vsel %vm2546, %v3827, 0
        %3831 = vmatprep.subr.mxu0 0.0
        %3832 = vmatpush1.msra.mxu0 0.0
        %3833 = vmatprep.subr.mxu0 0.0
        %3834 = vmatpush1.msra.mxu0 0.0
        %3835 = vmatprep.subr.mxu0 0.0
        %3836 = vmatpush1.msra.mxu0 0.0
        %3837 = vmatprep.subr.mxu0 0.0
        %3838 = vmatpush1.msra.mxu0 0.0
        %3839 = vmatprep.subr.mxu0 0.0
        %3840 = vmatpush1.msra.mxu0 0.0
        %3841 = vmatprep.subr.mxu0 0.0
        %3842 = vmatpush1.msra.mxu0 0.0
        %3843 = vmatprep.subr.mxu0 0.0
        %3844 = vmatpush1.msra.mxu0 0.0
        %3845 = vmatprep.subr.mxu0 0.0
        %3846 = vmatpush1.msra.mxu0 0.0
        %3847 = vmatprep.subr.mxu0 0.0
        %3848 = vmatpush1.msra.mxu0 0.0
        %3849 = vmatprep.subr.mxu0 0.0
        %3850 = vmatpush1.msra.mxu0 0.0
        %3851 = vmatprep.subr.mxu0 0.0
        %3852 = vmatpush1.msra.mxu0 0.0
        %3853 = vmatprep.subr.mxu0 0.0
        %3854 = vmatpush1.msra.mxu0 0.0
        %3855 = vmatprep.subr.mxu0 0.0
        %3856 = vmatpush1.msra.mxu0 0.0
        %3857 = vmatprep.subr.mxu0 0.0
        %3858 = vmatpush1.msra.mxu0 0.0
        %3859 = vmatprep.subr.mxu0 0.0
        %3860 = vmatpush1.msra.mxu0 0.0
        %3861 = vmatprep.subr.mxu0 %v3825
        %3862 = vmatpush1.msra.mxu0 %v3823
        %3863 = vmatprep.subr.mxu0 0.0
        %3864 = vmatpush2.msra.mxu0 0.0
        %3865 = vmatprep.subr.mxu0 0.0
        %3866 = vmatpush2.msra.mxu0 0.0
        %3867 = vmatprep.subr.mxu0 0.0
        %3868 = vmatpush2.msra.mxu0 0.0
        %3869 = vmatprep.subr.mxu0 0.0
        %3870 = vmatpush2.msra.mxu0 0.0
        %3871 = vmatprep.subr.mxu0 0.0
        %3872 = vmatpush2.msra.mxu0 0.0
        %3873 = vmatprep.subr.mxu0 0.0
        %3874 = vmatpush2.msra.mxu0 0.0
        %3875 = vmatprep.subr.mxu0 0.0
        %3876 = vmatpush2.msra.mxu0 0.0
        %3877 = vmatprep.subr.mxu0 0.0
        %3878 = vmatpush2.msra.mxu0 0.0
        %3879 = vmatprep.subr.mxu0 0.0
        %3880 = vmatpush2.msra.mxu0 0.0
        %3881 = vmatprep.subr.mxu0 0.0
        %3882 = vmatpush2.msra.mxu0 0.0
        %3883 = vmatprep.subr.mxu0 0.0
        %3884 = vmatpush2.msra.mxu0 0.0
        %3885 = vmatprep.subr.mxu0 0.0
        %3886 = vmatpush2.msra.mxu0 0.0
        %3887 = vmatprep.subr.mxu0 0.0
        %3888 = vmatpush2.msra.mxu0 0.0
        %3889 = vmatprep.subr.mxu0 0.0
        %3890 = vmatpush2.msra.mxu0 0.0
        %3891 = vmatprep.subr.mxu0 0.0
        %3892 = vmatpush2.msra.mxu0 0.0
        %3893 = vmatprep.subr.mxu0 0.0
        %3894 = vmatpush2.msra.mxu0 0.0
        %3895 = vmatprep.mubr.f32.mxu0 0.0
        %3896 = vmatmul.mubr.f32.gmra.mxu0 %v3829
        %v3897 = vpop.f32.mrf.mxu0
        %v3898 = vadd.f32 0.0, %v3897
        %v3899 = vpop.f32.mrf.mxu0
        %v3900 = vadd.f32 0.0, %v3899
        %3901 = vdwg.mxu0
        %v3902 = vadd.f32 %v3755, %v3898
        %v3903 = vadd.f32 %v3755, %v3900
        %3904 = vmatprep.subr.mxu0 %v510
        %3905 = vmatpush1.msra.mxu0 %v509
        %3906 = vmatprep.subr.mxu0 %v508
        %3907 = vmatpush1.msra.mxu0 %v507
        %3908 = vmatprep.subr.mxu0 %v506
        %3909 = vmatpush1.msra.mxu0 %v505
        %3910 = vmatprep.subr.mxu0 %v504
        %3911 = vmatpush1.msra.mxu0 %v503
        %3912 = vmatprep.subr.mxu0 %v502
        %3913 = vmatpush1.msra.mxu0 %v501
        %3914 = vmatprep.subr.mxu0 %v500
        %3915 = vmatpush1.msra.mxu0 %v499
        %3916 = vmatprep.subr.mxu0 %v498
        %3917 = vmatpush1.msra.mxu0 %v497
        %3918 = vmatprep.subr.mxu0 %v496
        %3919 = vmatpush1.msra.mxu0 %v495
        %3920 = vmatprep.subr.mxu0 %v494
        %3921 = vmatpush1.msra.mxu0 %v493
        %3922 = vmatprep.subr.mxu0 %v492
        %3923 = vmatpush1.msra.mxu0 %v491
        %3924 = vmatprep.subr.mxu0 %v490
        %3925 = vmatpush1.msra.mxu0 %v489
        %3926 = vmatprep.subr.mxu0 %v488
        %3927 = vmatpush1.msra.mxu0 %v487
        %3928 = vmatprep.subr.mxu0 %v486
        %3929 = vmatpush1.msra.mxu0 %v485
        %3930 = vmatprep.subr.mxu0 %v484
        %3931 = vmatpush1.msra.mxu0 %v483
        %3932 = vmatprep.subr.mxu0 %v482
        %3933 = vmatpush1.msra.mxu0 %v481
        %3934 = vmatprep.subr.mxu0 %v480
        %3935 = vmatpush1.msra.mxu0 %v479
        %3936 = vmatprep.subr.mxu0 %v542
        %3937 = vmatpush2.msra.mxu0 %v541
        %3938 = vmatprep.subr.mxu0 %v540
        %3939 = vmatpush2.msra.mxu0 %v539
        %3940 = vmatprep.subr.mxu0 %v538
        %3941 = vmatpush2.msra.mxu0 %v537
        %3942 = vmatprep.subr.mxu0 %v536
        %3943 = vmatpush2.msra.mxu0 %v535
        %3944 = vmatprep.subr.mxu0 %v534
        %3945 = vmatpush2.msra.mxu0 %v533
        %3946 = vmatprep.subr.mxu0 %v532
        %3947 = vmatpush2.msra.mxu0 %v531
        %3948 = vmatprep.subr.mxu0 %v530
        %3949 = vmatpush2.msra.mxu0 %v529
        %3950 = vmatprep.subr.mxu0 %v528
        %3951 = vmatpush2.msra.mxu0 %v527
        %3952 = vmatprep.subr.mxu0 %v526
        %3953 = vmatpush2.msra.mxu0 %v525
        %3954 = vmatprep.subr.mxu0 %v524
        %3955 = vmatpush2.msra.mxu0 %v523
        %3956 = vmatprep.subr.mxu0 %v522
        %3957 = vmatpush2.msra.mxu0 %v521
        %3958 = vmatprep.subr.mxu0 %v520
        %3959 = vmatpush2.msra.mxu0 %v519
        %3960 = vmatprep.subr.mxu0 %v518
        %3961 = vmatpush2.msra.mxu0 %v517
        %3962 = vmatprep.subr.mxu0 %v516
        %3963 = vmatpush2.msra.mxu0 %v515
        %3964 = vmatprep.subr.mxu0 %v514
        %3965 = vmatpush2.msra.mxu0 %v513
        %3966 = vmatprep.subr.mxu0 %v512
        %3967 = vmatpush2.msra.mxu0 %v511
        %3968 = vmatprep.mubr.f32.mxu0 %v3745
        %3969 = vmatmul.mubr.f32.gmra.mxu0 %v3744
        %v3970 = vpop.f32.mrf.mxu0
        %v3971 = vadd.f32 0.0, %v3970
        %v3972 = vpop.f32.mrf.mxu0
        %v3973 = vadd.f32 0.0, %v3972
        %3974 = vdwg.mxu0
        %s3975 = scalar_lea.vmem [#allocation7], 1
        %v3976 = vld [vmem:[%s3975] sm:$0x1]
        %v3978 = vsel %vm2546, %v3976, 0
        %3980 = vmatprep.subr.mxu0 0.0
        %3981 = vmatpush1.msra.mxu0 0.0
        %3982 = vmatprep.subr.mxu0 0.0
        %3983 = vmatpush1.msra.mxu0 0.0
        %3984 = vmatprep.subr.mxu0 0.0
        %3985 = vmatpush1.msra.mxu0 0.0
        %3986 = vmatprep.subr.mxu0 0.0
        %3987 = vmatpush1.msra.mxu0 0.0
        %3988 = vmatprep.subr.mxu0 0.0
        %3989 = vmatpush1.msra.mxu0 0.0
        %3990 = vmatprep.subr.mxu0 0.0
        %3991 = vmatpush1.msra.mxu0 0.0
        %3992 = vmatprep.subr.mxu0 0.0
        %3993 = vmatpush1.msra.mxu0 0.0
        %3994 = vmatprep.subr.mxu0 0.0
        %3995 = vmatpush1.msra.mxu0 0.0
        %3996 = vmatprep.subr.mxu0 0.0
        %3997 = vmatpush1.msra.mxu0 0.0
        %3998 = vmatprep.subr.mxu0 0.0
        %3999 = vmatpush1.msra.mxu0 0.0
        %4000 = vmatprep.subr.mxu0 0.0
        %4001 = vmatpush1.msra.mxu0 0.0
        %4002 = vmatprep.subr.mxu0 0.0
        %4003 = vmatpush1.msra.mxu0 0.0
        %4004 = vmatprep.subr.mxu0 0.0
        %4005 = vmatpush1.msra.mxu0 0.0
        %4006 = vmatprep.subr.mxu0 0.0
        %4007 = vmatpush1.msra.mxu0 0.0
        %4008 = vmatprep.subr.mxu0 0.0
        %4009 = vmatpush1.msra.mxu0 0.0
        %4010 = vmatprep.subr.mxu0 %v3973
        %4011 = vmatpush1.msra.mxu0 %v3971
        %4012 = vmatprep.subr.mxu0 0.0
        %4013 = vmatpush2.msra.mxu0 0.0
        %4014 = vmatprep.subr.mxu0 0.0
        %4015 = vmatpush2.msra.mxu0 0.0
        %4016 = vmatprep.subr.mxu0 0.0
        %4017 = vmatpush2.msra.mxu0 0.0
        %4018 = vmatprep.subr.mxu0 0.0
        %4019 = vmatpush2.msra.mxu0 0.0
        %4020 = vmatprep.subr.mxu0 0.0
        %4021 = vmatpush2.msra.mxu0 0.0
        %4022 = vmatprep.subr.mxu0 0.0
        %4023 = vmatpush2.msra.mxu0 0.0
        %4024 = vmatprep.subr.mxu0 0.0
        %4025 = vmatpush2.msra.mxu0 0.0
        %4026 = vmatprep.subr.mxu0 0.0
        %4027 = vmatpush2.msra.mxu0 0.0
        %4028 = vmatprep.subr.mxu0 0.0
        %4029 = vmatpush2.msra.mxu0 0.0
        %4030 = vmatprep.subr.mxu0 0.0
        %4031 = vmatpush2.msra.mxu0 0.0
        %4032 = vmatprep.subr.mxu0 0.0
        %4033 = vmatpush2.msra.mxu0 0.0
        %4034 = vmatprep.subr.mxu0 0.0
        %4035 = vmatpush2.msra.mxu0 0.0
        %4036 = vmatprep.subr.mxu0 0.0
        %4037 = vmatpush2.msra.mxu0 0.0
        %4038 = vmatprep.subr.mxu0 0.0
        %4039 = vmatpush2.msra.mxu0 0.0
        %4040 = vmatprep.subr.mxu0 0.0
        %4041 = vmatpush2.msra.mxu0 0.0
        %4042 = vmatprep.subr.mxu0 0.0
        %4043 = vmatpush2.msra.mxu0 0.0
        %4044 = vmatprep.mubr.f32.mxu0 0.0
        %4045 = vmatmul.mubr.f32.gmra.mxu0 %v3978
        %v4046 = vpop.f32.mrf.mxu0
        %v4047 = vadd.f32 0.0, %v4046
        %v4048 = vpop.f32.mrf.mxu0
        %v4049 = vadd.f32 0.0, %v4048
        %4050 = vdwg.mxu0
        %v4051 = vadd.f32 %v3902, %v4047
        %v4052 = vadd.f32 %v3903, %v4049
        %4053 = vmatprep.subr.mxu0 %v607
        %4054 = vmatpush1.msra.mxu0 %v606
        %4055 = vmatprep.subr.mxu0 %v605
        %4056 = vmatpush1.msra.mxu0 %v604
        %4057 = vmatprep.subr.mxu0 %v603
        %4058 = vmatpush1.msra.mxu0 %v602
        %4059 = vmatprep.subr.mxu0 %v601
        %4060 = vmatpush1.msra.mxu0 %v600
        %4061 = vmatprep.subr.mxu0 %v599
        %4062 = vmatpush1.msra.mxu0 %v598
        %4063 = vmatprep.subr.mxu0 %v597
        %4064 = vmatpush1.msra.mxu0 %v596
        %4065 = vmatprep.subr.mxu0 %v595
        %4066 = vmatpush1.msra.mxu0 %v594
        %4067 = vmatprep.subr.mxu0 %v593
        %4068 = vmatpush1.msra.mxu0 %v592
        %4069 = vmatprep.subr.mxu0 %v591
        %4070 = vmatpush1.msra.mxu0 %v590
        %4071 = vmatprep.subr.mxu0 %v589
        %4072 = vmatpush1.msra.mxu0 %v588
        %4073 = vmatprep.subr.mxu0 %v587
        %4074 = vmatpush1.msra.mxu0 %v586
        %4075 = vmatprep.subr.mxu0 %v585
        %4076 = vmatpush1.msra.mxu0 %v584
        %4077 = vmatprep.subr.mxu0 %v583
        %4078 = vmatpush1.msra.mxu0 %v582
        %4079 = vmatprep.subr.mxu0 %v581
        %4080 = vmatpush1.msra.mxu0 %v580
        %4081 = vmatprep.subr.mxu0 %v579
        %4082 = vmatpush1.msra.mxu0 %v578
        %4083 = vmatprep.subr.mxu0 %v577
        %4084 = vmatpush1.msra.mxu0 %v576
        %4085 = vmatprep.subr.mxu0 %v639
        %4086 = vmatpush2.msra.mxu0 %v638
        %4087 = vmatprep.subr.mxu0 %v637
        %4088 = vmatpush2.msra.mxu0 %v636
        %4089 = vmatprep.subr.mxu0 %v635
        %4090 = vmatpush2.msra.mxu0 %v634
        %4091 = vmatprep.subr.mxu0 %v633
        %4092 = vmatpush2.msra.mxu0 %v632
        %4093 = vmatprep.subr.mxu0 %v631
        %4094 = vmatpush2.msra.mxu0 %v630
        %4095 = vmatprep.subr.mxu0 %v629
        %4096 = vmatpush2.msra.mxu0 %v628
        %4097 = vmatprep.subr.mxu0 %v627
        %4098 = vmatpush2.msra.mxu0 %v626
        %4099 = vmatprep.subr.mxu0 %v625
        %4100 = vmatpush2.msra.mxu0 %v624
        %4101 = vmatprep.subr.mxu0 %v623
        %4102 = vmatpush2.msra.mxu0 %v622
        %4103 = vmatprep.subr.mxu0 %v621
        %4104 = vmatpush2.msra.mxu0 %v620
        %4105 = vmatprep.subr.mxu0 %v619
        %4106 = vmatpush2.msra.mxu0 %v618
        %4107 = vmatprep.subr.mxu0 %v617
        %4108 = vmatpush2.msra.mxu0 %v616
        %4109 = vmatprep.subr.mxu0 %v615
        %4110 = vmatpush2.msra.mxu0 %v614
        %4111 = vmatprep.subr.mxu0 %v613
        %4112 = vmatpush2.msra.mxu0 %v612
        %4113 = vmatprep.subr.mxu0 %v611
        %4114 = vmatpush2.msra.mxu0 %v610
        %4115 = vmatprep.subr.mxu0 %v609
        %4116 = vmatpush2.msra.mxu0 %v608
        %4117 = vmatprep.mubr.f32.mxu0 %v3745
        %4118 = vmatmul.mubr.f32.gmra.mxu0 %v3744
        %v4119 = vpop.f32.mrf.mxu0
        %v4120 = vadd.f32 0.0, %v4119
        %v4121 = vpop.f32.mrf.mxu0
        %v4122 = vadd.f32 0.0, %v4121
        %4123 = vdwg.mxu0
        %s4124 = scalar_lea.vmem [#allocation7], 2
        %v4125 = vld [vmem:[%s4124] sm:$0x1]
        %v4127 = vsel %vm2546, %v4125, 0
        %4129 = vmatprep.subr.mxu0 0.0
        %4130 = vmatpush1.msra.mxu0 0.0
        %4131 = vmatprep.subr.mxu0 0.0
        %4132 = vmatpush1.msra.mxu0 0.0
        %4133 = vmatprep.subr.mxu0 0.0
        %4134 = vmatpush1.msra.mxu0 0.0
        %4135 = vmatprep.subr.mxu0 0.0
        %4136 = vmatpush1.msra.mxu0 0.0
        %4137 = vmatprep.subr.mxu0 0.0
        %4138 = vmatpush1.msra.mxu0 0.0
        %4139 = vmatprep.subr.mxu0 0.0
        %4140 = vmatpush1.msra.mxu0 0.0
        %4141 = vmatprep.subr.mxu0 0.0
        %4142 = vmatpush1.msra.mxu0 0.0
        %4143 = vmatprep.subr.mxu0 0.0
        %4144 = vmatpush1.msra.mxu0 0.0
        %4145 = vmatprep.subr.mxu0 0.0
        %4146 = vmatpush1.msra.mxu0 0.0
        %4147 = vmatprep.subr.mxu0 0.0
        %4148 = vmatpush1.msra.mxu0 0.0
        %4149 = vmatprep.subr.mxu0 0.0
        %4150 = vmatpush1.msra.mxu0 0.0
        %4151 = vmatprep.subr.mxu0 0.0
        %4152 = vmatpush1.msra.mxu0 0.0
        %4153 = vmatprep.subr.mxu0 0.0
        %4154 = vmatpush1.msra.mxu0 0.0
        %4155 = vmatprep.subr.mxu0 0.0
        %4156 = vmatpush1.msra.mxu0 0.0
        %4157 = vmatprep.subr.mxu0 0.0
        %4158 = vmatpush1.msra.mxu0 0.0
        %4159 = vmatprep.subr.mxu0 %v4122
        %4160 = vmatpush1.msra.mxu0 %v4120
        %4161 = vmatprep.subr.mxu0 0.0
        %4162 = vmatpush2.msra.mxu0 0.0
        %4163 = vmatprep.subr.mxu0 0.0
        %4164 = vmatpush2.msra.mxu0 0.0
        %4165 = vmatprep.subr.mxu0 0.0
        %4166 = vmatpush2.msra.mxu0 0.0
        %4167 = vmatprep.subr.mxu0 0.0
        %4168 = vmatpush2.msra.mxu0 0.0
        %4169 = vmatprep.subr.mxu0 0.0
        %4170 = vmatpush2.msra.mxu0 0.0
        %4171 = vmatprep.subr.mxu0 0.0
        %4172 = vmatpush2.msra.mxu0 0.0
        %4173 = vmatprep.subr.mxu0 0.0
        %4174 = vmatpush2.msra.mxu0 0.0
        %4175 = vmatprep.subr.mxu0 0.0
        %4176 = vmatpush2.msra.mxu0 0.0
        %4177 = vmatprep.subr.mxu0 0.0
        %4178 = vmatpush2.msra.mxu0 0.0
        %4179 = vmatprep.subr.mxu0 0.0
        %4180 = vmatpush2.msra.mxu0 0.0
        %4181 = vmatprep.subr.mxu0 0.0
        %4182 = vmatpush2.msra.mxu0 0.0
        %4183 = vmatprep.subr.mxu0 0.0
        %4184 = vmatpush2.msra.mxu0 0.0
        %4185 = vmatprep.subr.mxu0 0.0
        %4186 = vmatpush2.msra.mxu0 0.0
        %4187 = vmatprep.subr.mxu0 0.0
        %4188 = vmatpush2.msra.mxu0 0.0
        %4189 = vmatprep.subr.mxu0 0.0
        %4190 = vmatpush2.msra.mxu0 0.0
        %4191 = vmatprep.subr.mxu0 0.0
        %4192 = vmatpush2.msra.mxu0 0.0
        %4193 = vmatprep.mubr.f32.mxu0 0.0
        %4194 = vmatmul.mubr.f32.gmra.mxu0 %v4127
        %v4195 = vpop.f32.mrf.mxu0
        %v4196 = vadd.f32 0.0, %v4195
        %v4197 = vpop.f32.mrf.mxu0
        %v4198 = vadd.f32 0.0, %v4197
        %4199 = vdwg.mxu0
        %v4200 = vadd.f32 %v4051, %v4196
        %v4201 = vadd.f32 %v4052, %v4198
        %4202 = vmatprep.subr.mxu0 %v704
        %4203 = vmatpush1.msra.mxu0 %v703
        %4204 = vmatprep.subr.mxu0 %v702
        %4205 = vmatpush1.msra.mxu0 %v701
        %4206 = vmatprep.subr.mxu0 %v700
        %4207 = vmatpush1.msra.mxu0 %v699
        %4208 = vmatprep.subr.mxu0 %v698
        %4209 = vmatpush1.msra.mxu0 %v697
        %4210 = vmatprep.subr.mxu0 %v696
        %4211 = vmatpush1.msra.mxu0 %v695
        %4212 = vmatprep.subr.mxu0 %v694
        %4213 = vmatpush1.msra.mxu0 %v693
        %4214 = vmatprep.subr.mxu0 %v692
        %4215 = vmatpush1.msra.mxu0 %v691
        %4216 = vmatprep.subr.mxu0 %v690
        %4217 = vmatpush1.msra.mxu0 %v689
        %4218 = vmatprep.subr.mxu0 %v688
        %4219 = vmatpush1.msra.mxu0 %v687
        %4220 = vmatprep.subr.mxu0 %v686
        %4221 = vmatpush1.msra.mxu0 %v685
        %4222 = vmatprep.subr.mxu0 %v684
        %4223 = vmatpush1.msra.mxu0 %v683
        %4224 = vmatprep.subr.mxu0 %v682
        %4225 = vmatpush1.msra.mxu0 %v681
        %4226 = vmatprep.subr.mxu0 %v680
        %4227 = vmatpush1.msra.mxu0 %v679
        %4228 = vmatprep.subr.mxu0 %v678
        %4229 = vmatpush1.msra.mxu0 %v677
        %4230 = vmatprep.subr.mxu0 %v676
        %4231 = vmatpush1.msra.mxu0 %v675
        %4232 = vmatprep.subr.mxu0 %v674
        %4233 = vmatpush1.msra.mxu0 %v673
        %4234 = vmatprep.subr.mxu0 %v736
        %4235 = vmatpush2.msra.mxu0 %v735
        %4236 = vmatprep.subr.mxu0 %v734
        %4237 = vmatpush2.msra.mxu0 %v733
        %4238 = vmatprep.subr.mxu0 %v732
        %4239 = vmatpush2.msra.mxu0 %v731
        %4240 = vmatprep.subr.mxu0 %v730
        %4241 = vmatpush2.msra.mxu0 %v729
        %4242 = vmatprep.subr.mxu0 %v728
        %4243 = vmatpush2.msra.mxu0 %v727
        %4244 = vmatprep.subr.mxu0 %v726
        %4245 = vmatpush2.msra.mxu0 %v725
        %4246 = vmatprep.subr.mxu0 %v724
        %4247 = vmatpush2.msra.mxu0 %v723
        %4248 = vmatprep.subr.mxu0 %v722
        %4249 = vmatpush2.msra.mxu0 %v721
        %4250 = vmatprep.subr.mxu0 %v720
        %4251 = vmatpush2.msra.mxu0 %v719
        %4252 = vmatprep.subr.mxu0 %v718
        %4253 = vmatpush2.msra.mxu0 %v717
        %4254 = vmatprep.subr.mxu0 %v716
        %4255 = vmatpush2.msra.mxu0 %v715
        %4256 = vmatprep.subr.mxu0 %v714
        %4257 = vmatpush2.msra.mxu0 %v713
        %4258 = vmatprep.subr.mxu0 %v712
        %4259 = vmatpush2.msra.mxu0 %v711
        %4260 = vmatprep.subr.mxu0 %v710
        %4261 = vmatpush2.msra.mxu0 %v709
        %4262 = vmatprep.subr.mxu0 %v708
        %4263 = vmatpush2.msra.mxu0 %v707
        %4264 = vmatprep.subr.mxu0 %v706
        %4265 = vmatpush2.msra.mxu0 %v705
        %4266 = vmatprep.mubr.f32.mxu0 %v3745
        %4267 = vmatmul.mubr.f32.gmra.mxu0 %v3744
        %v4268 = vpop.f32.mrf.mxu0
        %v4269 = vadd.f32 0.0, %v4268
        %v4270 = vpop.f32.mrf.mxu0
        %v4271 = vadd.f32 0.0, %v4270
        %4272 = vdwg.mxu0
        %s4273 = scalar_lea.vmem [#allocation7], 3
        %v4274 = vld [vmem:[%s4273] sm:$0x1]
        %v4276 = vsel %vm2546, %v4274, 0
        %4278 = vmatprep.subr.mxu0 0.0
        %4279 = vmatpush1.msra.mxu0 0.0
        %4280 = vmatprep.subr.mxu0 0.0
        %4281 = vmatpush1.msra.mxu0 0.0
        %4282 = vmatprep.subr.mxu0 0.0
        %4283 = vmatpush1.msra.mxu0 0.0
        %4284 = vmatprep.subr.mxu0 0.0
        %4285 = vmatpush1.msra.mxu0 0.0
        %4286 = vmatprep.subr.mxu0 0.0
        %4287 = vmatpush1.msra.mxu0 0.0
        %4288 = vmatprep.subr.mxu0 0.0
        %4289 = vmatpush1.msra.mxu0 0.0
        %4290 = vmatprep.subr.mxu0 0.0
        %4291 = vmatpush1.msra.mxu0 0.0
        %4292 = vmatprep.subr.mxu0 0.0
        %4293 = vmatpush1.msra.mxu0 0.0
        %4294 = vmatprep.subr.mxu0 0.0
        %4295 = vmatpush1.msra.mxu0 0.0
        %4296 = vmatprep.subr.mxu0 0.0
        %4297 = vmatpush1.msra.mxu0 0.0
        %4298 = vmatprep.subr.mxu0 0.0
        %4299 = vmatpush1.msra.mxu0 0.0
        %4300 = vmatprep.subr.mxu0 0.0
        %4301 = vmatpush1.msra.mxu0 0.0
        %4302 = vmatprep.subr.mxu0 0.0
        %4303 = vmatpush1.msra.mxu0 0.0
        %4304 = vmatprep.subr.mxu0 0.0
        %4305 = vmatpush1.msra.mxu0 0.0
        %4306 = vmatprep.subr.mxu0 0.0
        %4307 = vmatpush1.msra.mxu0 0.0
        %4308 = vmatprep.subr.mxu0 %v4271
        %4309 = vmatpush1.msra.mxu0 %v4269
        %4310 = vmatprep.subr.mxu0 0.0
        %4311 = vmatpush2.msra.mxu0 0.0
        %4312 = vmatprep.subr.mxu0 0.0
        %4313 = vmatpush2.msra.mxu0 0.0
        %4314 = vmatprep.subr.mxu0 0.0
        %4315 = vmatpush2.msra.mxu0 0.0
        %4316 = vmatprep.subr.mxu0 0.0
        %4317 = vmatpush2.msra.mxu0 0.0
        %4318 = vmatprep.subr.mxu0 0.0
        %4319 = vmatpush2.msra.mxu0 0.0
        %4320 = vmatprep.subr.mxu0 0.0
        %4321 = vmatpush2.msra.mxu0 0.0
        %4322 = vmatprep.subr.mxu0 0.0
        %4323 = vmatpush2.msra.mxu0 0.0
        %4324 = vmatprep.subr.mxu0 0.0
        %4325 = vmatpush2.msra.mxu0 0.0
        %4326 = vmatprep.subr.mxu0 0.0
        %4327 = vmatpush2.msra.mxu0 0.0
        %4328 = vmatprep.subr.mxu0 0.0
        %4329 = vmatpush2.msra.mxu0 0.0
        %4330 = vmatprep.subr.mxu0 0.0
        %4331 = vmatpush2.msra.mxu0 0.0
        %4332 = vmatprep.subr.mxu0 0.0
        %4333 = vmatpush2.msra.mxu0 0.0
        %4334 = vmatprep.subr.mxu0 0.0
        %4335 = vmatpush2.msra.mxu0 0.0
        %4336 = vmatprep.subr.mxu0 0.0
        %4337 = vmatpush2.msra.mxu0 0.0
        %4338 = vmatprep.subr.mxu0 0.0
        %4339 = vmatpush2.msra.mxu0 0.0
        %4340 = vmatprep.subr.mxu0 0.0
        %4341 = vmatpush2.msra.mxu0 0.0
        %4342 = vmatprep.mubr.f32.mxu0 0.0
        %4343 = vmatmul.mubr.f32.gmra.mxu0 %v4276
        %v4344 = vpop.f32.mrf.mxu0
        %v4345 = vadd.f32 0.0, %v4344
        %v4346 = vpop.f32.mrf.mxu0
        %v4347 = vadd.f32 0.0, %v4346
        %4348 = vdwg.mxu0
        %v4349 = vadd.f32 %v4200, %v4345
        %v4350 = vadd.f32 %v4201, %v4347
        %s4351 = scalar_lea.vmem [#allocation7], 4
        %v4352 = vld [vmem:[%s4351] sm:$0x1]
        %v4354 = vsel %vm2546, %v4352, 0
        %4356 = vmatprep.subr.mxu0 0.0
        %4357 = vmatpush1.msra.mxu0 0.0
        %4358 = vmatprep.subr.mxu0 0.0
        %4359 = vmatpush1.msra.mxu0 0.0
        %4360 = vmatprep.subr.mxu0 0.0
        %4361 = vmatpush1.msra.mxu0 0.0
        %4362 = vmatprep.subr.mxu0 0.0
        %4363 = vmatpush1.msra.mxu0 0.0
        %4364 = vmatprep.subr.mxu0 0.0
        %4365 = vmatpush1.msra.mxu0 0.0
        %4366 = vmatprep.subr.mxu0 0.0
        %4367 = vmatpush1.msra.mxu0 0.0
        %4368 = vmatprep.subr.mxu0 0.0
        %4369 = vmatpush1.msra.mxu0 0.0
        %4370 = vmatprep.subr.mxu0 0.0
        %4371 = vmatpush1.msra.mxu0 0.0
        %4372 = vmatprep.subr.mxu0 0.0
        %4373 = vmatpush1.msra.mxu0 0.0
        %4374 = vmatprep.subr.mxu0 0.0
        %4375 = vmatpush1.msra.mxu0 0.0
        %4376 = vmatprep.subr.mxu0 0.0
        %4377 = vmatpush1.msra.mxu0 0.0
        %4378 = vmatprep.subr.mxu0 0.0
        %4379 = vmatpush1.msra.mxu0 0.0
        %4380 = vmatprep.subr.mxu0 0.0
        %4381 = vmatpush1.msra.mxu0 0.0
        %4382 = vmatprep.subr.mxu0 0.0
        %4383 = vmatpush1.msra.mxu0 0.0
        %4384 = vmatprep.subr.mxu0 0.0
        %4385 = vmatpush1.msra.mxu0 0.0
        %4386 = vmatprep.subr.mxu0 %v3745
        %4387 = vmatpush1.msra.mxu0 %v3744
        %4388 = vmatprep.subr.mxu0 0.0
        %4389 = vmatpush2.msra.mxu0 0.0
        %4390 = vmatprep.subr.mxu0 0.0
        %4391 = vmatpush2.msra.mxu0 0.0
        %4392 = vmatprep.subr.mxu0 0.0
        %4393 = vmatpush2.msra.mxu0 0.0
        %4394 = vmatprep.subr.mxu0 0.0
        %4395 = vmatpush2.msra.mxu0 0.0
        %4396 = vmatprep.subr.mxu0 0.0
        %4397 = vmatpush2.msra.mxu0 0.0
        %4398 = vmatprep.subr.mxu0 0.0
        %4399 = vmatpush2.msra.mxu0 0.0
        %4400 = vmatprep.subr.mxu0 0.0
        %4401 = vmatpush2.msra.mxu0 0.0
        %4402 = vmatprep.subr.mxu0 0.0
        %4403 = vmatpush2.msra.mxu0 0.0
        %4404 = vmatprep.subr.mxu0 0.0
        %4405 = vmatpush2.msra.mxu0 0.0
        %4406 = vmatprep.subr.mxu0 0.0
        %4407 = vmatpush2.msra.mxu0 0.0
        %4408 = vmatprep.subr.mxu0 0.0
        %4409 = vmatpush2.msra.mxu0 0.0
        %4410 = vmatprep.subr.mxu0 0.0
        %4411 = vmatpush2.msra.mxu0 0.0
        %4412 = vmatprep.subr.mxu0 0.0
        %4413 = vmatpush2.msra.mxu0 0.0
        %4414 = vmatprep.subr.mxu0 0.0
        %4415 = vmatpush2.msra.mxu0 0.0
        %4416 = vmatprep.subr.mxu0 0.0
        %4417 = vmatpush2.msra.mxu0 0.0
        %4418 = vmatprep.subr.mxu0 0.0
        %4419 = vmatpush2.msra.mxu0 0.0
        %4420 = vmatprep.mubr.f32.mxu0 0.0
        %4421 = vmatmul.mubr.f32.gmra.mxu0 %v4354
        %v4422 = vpop.f32.mrf.mxu0
        %v4423 = vadd.f32 0.0, %v4422
        %v4424 = vpop.f32.mrf.mxu0
        %v4425 = vadd.f32 0.0, %v4424
        %4426 = vdwg.mxu0
        %v4427 = vadd.f32 %v4349, %v4423
        %v4428 = vadd.f32 %v4350, %v4425
        %4429 = vmatprep.subr.mxu0 %v801
        %4430 = vmatpush1.msra.mxu0 %v800
        %4431 = vmatprep.subr.mxu0 %v799
        %4432 = vmatpush1.msra.mxu0 %v798
        %4433 = vmatprep.subr.mxu0 %v797
        %4434 = vmatpush1.msra.mxu0 %v796
        %4435 = vmatprep.subr.mxu0 %v795
        %4436 = vmatpush1.msra.mxu0 %v794
        %4437 = vmatprep.subr.mxu0 %v793
        %4438 = vmatpush1.msra.mxu0 %v792
        %4439 = vmatprep.subr.mxu0 %v791
        %4440 = vmatpush1.msra.mxu0 %v790
        %4441 = vmatprep.subr.mxu0 %v789
        %4442 = vmatpush1.msra.mxu0 %v788
        %4443 = vmatprep.subr.mxu0 %v787
        %4444 = vmatpush1.msra.mxu0 %v786
        %4445 = vmatprep.subr.mxu0 %v785
        %4446 = vmatpush1.msra.mxu0 %v784
        %4447 = vmatprep.subr.mxu0 %v783
        %4448 = vmatpush1.msra.mxu0 %v782
        %4449 = vmatprep.subr.mxu0 %v781
        %4450 = vmatpush1.msra.mxu0 %v780
        %4451 = vmatprep.subr.mxu0 %v779
        %4452 = vmatpush1.msra.mxu0 %v778
        %4453 = vmatprep.subr.mxu0 %v777
        %4454 = vmatpush1.msra.mxu0 %v776
        %4455 = vmatprep.subr.mxu0 %v775
        %4456 = vmatpush1.msra.mxu0 %v774
        %4457 = vmatprep.subr.mxu0 %v773
        %4458 = vmatpush1.msra.mxu0 %v772
        %4459 = vmatprep.subr.mxu0 %v771
        %4460 = vmatpush1.msra.mxu0 %v770
        %4461 = vmatprep.subr.mxu0 %v833
        %4462 = vmatpush2.msra.mxu0 %v832
        %4463 = vmatprep.subr.mxu0 %v831
        %4464 = vmatpush2.msra.mxu0 %v830
        %4465 = vmatprep.subr.mxu0 %v829
        %4466 = vmatpush2.msra.mxu0 %v828
        %4467 = vmatprep.subr.mxu0 %v827
        %4468 = vmatpush2.msra.mxu0 %v826
        %4469 = vmatprep.subr.mxu0 %v825
        %4470 = vmatpush2.msra.mxu0 %v824
        %4471 = vmatprep.subr.mxu0 %v823
        %4472 = vmatpush2.msra.mxu0 %v822
        %4473 = vmatprep.subr.mxu0 %v821
        %4474 = vmatpush2.msra.mxu0 %v820
        %4475 = vmatprep.subr.mxu0 %v819
        %4476 = vmatpush2.msra.mxu0 %v818
        %4477 = vmatprep.subr.mxu0 %v817
        %4478 = vmatpush2.msra.mxu0 %v816
        %4479 = vmatprep.subr.mxu0 %v815
        %4480 = vmatpush2.msra.mxu0 %v814
        %4481 = vmatprep.subr.mxu0 %v813
        %4482 = vmatpush2.msra.mxu0 %v812
        %4483 = vmatprep.subr.mxu0 %v811
        %4484 = vmatpush2.msra.mxu0 %v810
        %4485 = vmatprep.subr.mxu0 %v809
        %4486 = vmatpush2.msra.mxu0 %v808
        %4487 = vmatprep.subr.mxu0 %v807
        %4488 = vmatpush2.msra.mxu0 %v806
        %4489 = vmatprep.subr.mxu0 %v805
        %4490 = vmatpush2.msra.mxu0 %v804
        %4491 = vmatprep.subr.mxu0 %v803
        %4492 = vmatpush2.msra.mxu0 %v802
        %4493 = vmatprep.mubr.f32.mxu0 %v3745
        %4494 = vmatmul.mubr.f32.gmra.mxu0 %v3744
        %v4495 = vpop.f32.mrf.mxu0
        %v4496 = vadd.f32 0.0, %v4495
        %v4497 = vpop.f32.mrf.mxu0
        %v4498 = vadd.f32 0.0, %v4497
        %4499 = vdwg.mxu0
        %s4500 = scalar_lea.vmem [#allocation7], 5
        %v4501 = vld [vmem:[%s4500] sm:$0x1]
        %v4503 = vsel %vm2546, %v4501, 0
        %4505 = vmatprep.subr.mxu0 0.0
        %4506 = vmatpush1.msra.mxu0 0.0
        %4507 = vmatprep.subr.mxu0 0.0
        %4508 = vmatpush1.msra.mxu0 0.0
        %4509 = vmatprep.subr.mxu0 0.0
        %4510 = vmatpush1.msra.mxu0 0.0
        %4511 = vmatprep.subr.mxu0 0.0
        %4512 = vmatpush1.msra.mxu0 0.0
        %4513 = vmatprep.subr.mxu0 0.0
        %4514 = vmatpush1.msra.mxu0 0.0
        %4515 = vmatprep.subr.mxu0 0.0
        %4516 = vmatpush1.msra.mxu0 0.0
        %4517 = vmatprep.subr.mxu0 0.0
        %4518 = vmatpush1.msra.mxu0 0.0
        %4519 = vmatprep.subr.mxu0 0.0
        %4520 = vmatpush1.msra.mxu0 0.0
        %4521 = vmatprep.subr.mxu0 0.0
        %4522 = vmatpush1.msra.mxu0 0.0
        %4523 = vmatprep.subr.mxu0 0.0
        %4524 = vmatpush1.msra.mxu0 0.0
        %4525 = vmatprep.subr.mxu0 0.0
        %4526 = vmatpush1.msra.mxu0 0.0
        %4527 = vmatprep.subr.mxu0 0.0
        %4528 = vmatpush1.msra.mxu0 0.0
        %4529 = vmatprep.subr.mxu0 0.0
        %4530 = vmatpush1.msra.mxu0 0.0
        %4531 = vmatprep.subr.mxu0 0.0
        %4532 = vmatpush1.msra.mxu0 0.0
        %4533 = vmatprep.subr.mxu0 0.0
        %4534 = vmatpush1.msra.mxu0 0.0
        %4535 = vmatprep.subr.mxu0 %v4498
        %4536 = vmatpush1.msra.mxu0 %v4496
        %4537 = vmatprep.subr.mxu0 0.0
        %4538 = vmatpush2.msra.mxu0 0.0
        %4539 = vmatprep.subr.mxu0 0.0
        %4540 = vmatpush2.msra.mxu0 0.0
        %4541 = vmatprep.subr.mxu0 0.0
        %4542 = vmatpush2.msra.mxu0 0.0
        %4543 = vmatprep.subr.mxu0 0.0
        %4544 = vmatpush2.msra.mxu0 0.0
        %4545 = vmatprep.subr.mxu0 0.0
        %4546 = vmatpush2.msra.mxu0 0.0
        %4547 = vmatprep.subr.mxu0 0.0
        %4548 = vmatpush2.msra.mxu0 0.0
        %4549 = vmatprep.subr.mxu0 0.0
        %4550 = vmatpush2.msra.mxu0 0.0
        %4551 = vmatprep.subr.mxu0 0.0
        %4552 = vmatpush2.msra.mxu0 0.0
        %4553 = vmatprep.subr.mxu0 0.0
        %4554 = vmatpush2.msra.mxu0 0.0
        %4555 = vmatprep.subr.mxu0 0.0
        %4556 = vmatpush2.msra.mxu0 0.0
        %4557 = vmatprep.subr.mxu0 0.0
        %4558 = vmatpush2.msra.mxu0 0.0
        %4559 = vmatprep.subr.mxu0 0.0
        %4560 = vmatpush2.msra.mxu0 0.0
        %4561 = vmatprep.subr.mxu0 0.0
        %4562 = vmatpush2.msra.mxu0 0.0
        %4563 = vmatprep.subr.mxu0 0.0
        %4564 = vmatpush2.msra.mxu0 0.0
        %4565 = vmatprep.subr.mxu0 0.0
        %4566 = vmatpush2.msra.mxu0 0.0
        %4567 = vmatprep.subr.mxu0 0.0
        %4568 = vmatpush2.msra.mxu0 0.0
        %4569 = vmatprep.mubr.f32.mxu0 0.0
        %4570 = vmatmul.mubr.f32.gmra.mxu0 %v4503
        %v4571 = vpop.f32.mrf.mxu0
        %v4572 = vadd.f32 0.0, %v4571
        %v4573 = vpop.f32.mrf.mxu0
        %v4574 = vadd.f32 0.0, %v4573
        %4575 = vdwg.mxu0
        %v4576 = vadd.f32 %v4427, %v4572
        %v4577 = vadd.f32 %v4428, %v4574
        %4578 = vmatprep.subr.mxu0 %v898
        %4579 = vmatpush1.msra.mxu0 %v897
        %4580 = vmatprep.subr.mxu0 %v896
        %4581 = vmatpush1.msra.mxu0 %v895
        %4582 = vmatprep.subr.mxu0 %v894
        %4583 = vmatpush1.msra.mxu0 %v893
        %4584 = vmatprep.subr.mxu0 %v892
        %4585 = vmatpush1.msra.mxu0 %v891
        %4586 = vmatprep.subr.mxu0 %v890
        %4587 = vmatpush1.msra.mxu0 %v889
        %4588 = vmatprep.subr.mxu0 %v888
        %4589 = vmatpush1.msra.mxu0 %v887
        %4590 = vmatprep.subr.mxu0 %v886
        %4591 = vmatpush1.msra.mxu0 %v885
        %4592 = vmatprep.subr.mxu0 %v884
        %4593 = vmatpush1.msra.mxu0 %v883
        %4594 = vmatprep.subr.mxu0 %v882
        %4595 = vmatpush1.msra.mxu0 %v881
        %4596 = vmatprep.subr.mxu0 %v880
        %4597 = vmatpush1.msra.mxu0 %v879
        %4598 = vmatprep.subr.mxu0 %v878
        %4599 = vmatpush1.msra.mxu0 %v877
        %4600 = vmatprep.subr.mxu0 %v876
        %4601 = vmatpush1.msra.mxu0 %v875
        %4602 = vmatprep.subr.mxu0 %v874
        %4603 = vmatpush1.msra.mxu0 %v873
        %4604 = vmatprep.subr.mxu0 %v872
        %4605 = vmatpush1.msra.mxu0 %v871
        %4606 = vmatprep.subr.mxu0 %v870
        %4607 = vmatpush1.msra.mxu0 %v869
        %4608 = vmatprep.subr.mxu0 %v868
        %4609 = vmatpush1.msra.mxu0 %v867
        %4610 = vmatprep.subr.mxu0 %v930
        %4611 = vmatpush2.msra.mxu0 %v929
        %4612 = vmatprep.subr.mxu0 %v928
        %4613 = vmatpush2.msra.mxu0 %v927
        %4614 = vmatprep.subr.mxu0 %v926
        %4615 = vmatpush2.msra.mxu0 %v925
        %4616 = vmatprep.subr.mxu0 %v924
        %4617 = vmatpush2.msra.mxu0 %v923
        %4618 = vmatprep.subr.mxu0 %v922
        %4619 = vmatpush2.msra.mxu0 %v921
        %4620 = vmatprep.subr.mxu0 %v920
        %4621 = vmatpush2.msra.mxu0 %v919
        %4622 = vmatprep.subr.mxu0 %v918
        %4623 = vmatpush2.msra.mxu0 %v917
        %4624 = vmatprep.subr.mxu0 %v916
        %4625 = vmatpush2.msra.mxu0 %v915
        %4626 = vmatprep.subr.mxu0 %v914
        %4627 = vmatpush2.msra.mxu0 %v913
        %4628 = vmatprep.subr.mxu0 %v912
        %4629 = vmatpush2.msra.mxu0 %v911
        %4630 = vmatprep.subr.mxu0 %v910
        %4631 = vmatpush2.msra.mxu0 %v909
        %4632 = vmatprep.subr.mxu0 %v908
        %4633 = vmatpush2.msra.mxu0 %v907
        %4634 = vmatprep.subr.mxu0 %v906
        %4635 = vmatpush2.msra.mxu0 %v905
        %4636 = vmatprep.subr.mxu0 %v904
        %4637 = vmatpush2.msra.mxu0 %v903
        %4638 = vmatprep.subr.mxu0 %v902
        %4639 = vmatpush2.msra.mxu0 %v901
        %4640 = vmatprep.subr.mxu0 %v900
        %4641 = vmatpush2.msra.mxu0 %v899
        %4642 = vmatprep.mubr.f32.mxu0 %v3745
        %4643 = vmatmul.mubr.f32.gmra.mxu0 %v3744
        %v4644 = vpop.f32.mrf.mxu0
        %v4645 = vadd.f32 0.0, %v4644
        %v4646 = vpop.f32.mrf.mxu0
        %v4647 = vadd.f32 0.0, %v4646
        %4648 = vdwg.mxu0
        %s4649 = scalar_lea.vmem [#allocation7], 6
        %v4650 = vld [vmem:[%s4649] sm:$0x1]
        %v4652 = vsel %vm2546, %v4650, 0
        %4654 = vmatprep.subr.mxu0 0.0
        %4655 = vmatpush1.msra.mxu0 0.0
        %4656 = vmatprep.subr.mxu0 0.0
        %4657 = vmatpush1.msra.mxu0 0.0
        %4658 = vmatprep.subr.mxu0 0.0
        %4659 = vmatpush1.msra.mxu0 0.0
        %4660 = vmatprep.subr.mxu0 0.0
        %4661 = vmatpush1.msra.mxu0 0.0
        %4662 = vmatprep.subr.mxu0 0.0
        %4663 = vmatpush1.msra.mxu0 0.0
        %4664 = vmatprep.subr.mxu0 0.0
        %4665 = vmatpush1.msra.mxu0 0.0
        %4666 = vmatprep.subr.mxu0 0.0
        %4667 = vmatpush1.msra.mxu0 0.0
        %4668 = vmatprep.subr.mxu0 0.0
        %4669 = vmatpush1.msra.mxu0 0.0
        %4670 = vmatprep.subr.mxu0 0.0
        %4671 = vmatpush1.msra.mxu0 0.0
        %4672 = vmatprep.subr.mxu0 0.0
        %4673 = vmatpush1.msra.mxu0 0.0
        %4674 = vmatprep.subr.mxu0 0.0
        %4675 = vmatpush1.msra.mxu0 0.0
        %4676 = vmatprep.subr.mxu0 0.0
        %4677 = vmatpush1.msra.mxu0 0.0
        %4678 = vmatprep.subr.mxu0 0.0
        %4679 = vmatpush1.msra.mxu0 0.0
        %4680 = vmatprep.subr.mxu0 0.0
        %4681 = vmatpush1.msra.mxu0 0.0
        %4682 = vmatprep.subr.mxu0 0.0
        %4683 = vmatpush1.msra.mxu0 0.0
        %4684 = vmatprep.subr.mxu0 %v4647
        %4685 = vmatpush1.msra.mxu0 %v4645
        %4686 = vmatprep.subr.mxu0 0.0
        %4687 = vmatpush2.msra.mxu0 0.0
        %4688 = vmatprep.subr.mxu0 0.0
        %4689 = vmatpush2.msra.mxu0 0.0
        %4690 = vmatprep.subr.mxu0 0.0
        %4691 = vmatpush2.msra.mxu0 0.0
        %4692 = vmatprep.subr.mxu0 0.0
        %4693 = vmatpush2.msra.mxu0 0.0
        %4694 = vmatprep.subr.mxu0 0.0
        %4695 = vmatpush2.msra.mxu0 0.0
        %4696 = vmatprep.subr.mxu0 0.0
        %4697 = vmatpush2.msra.mxu0 0.0
        %4698 = vmatprep.subr.mxu0 0.0
        %4699 = vmatpush2.msra.mxu0 0.0
        %4700 = vmatprep.subr.mxu0 0.0
        %4701 = vmatpush2.msra.mxu0 0.0
        %4702 = vmatprep.subr.mxu0 0.0
        %4703 = vmatpush2.msra.mxu0 0.0
        %4704 = vmatprep.subr.mxu0 0.0
        %4705 = vmatpush2.msra.mxu0 0.0
        %4706 = vmatprep.subr.mxu0 0.0
        %4707 = vmatpush2.msra.mxu0 0.0
        %4708 = vmatprep.subr.mxu0 0.0
        %4709 = vmatpush2.msra.mxu0 0.0
        %4710 = vmatprep.subr.mxu0 0.0
        %4711 = vmatpush2.msra.mxu0 0.0
        %4712 = vmatprep.subr.mxu0 0.0
        %4713 = vmatpush2.msra.mxu0 0.0
        %4714 = vmatprep.subr.mxu0 0.0
        %4715 = vmatpush2.msra.mxu0 0.0
        %4716 = vmatprep.subr.mxu0 0.0
        %4717 = vmatpush2.msra.mxu0 0.0
        %4718 = vmatprep.mubr.f32.mxu0 0.0
        %4719 = vmatmul.mubr.f32.gmra.mxu0 %v4652
        %v4720 = vpop.f32.mrf.mxu0
        %v4721 = vadd.f32 0.0, %v4720
        %v4722 = vpop.f32.mrf.mxu0
        %v4723 = vadd.f32 0.0, %v4722
        %4724 = vdwg.mxu0
        %v4725 = vadd.f32 %v4576, %v4721
        %v4726 = vadd.f32 %v4577, %v4723
        %4727 = vmatprep.subr.mxu0 %v995
        %4728 = vmatpush1.msra.mxu0 %v994
        %4729 = vmatprep.subr.mxu0 %v993
        %4730 = vmatpush1.msra.mxu0 %v992
        %4731 = vmatprep.subr.mxu0 %v991
        %4732 = vmatpush1.msra.mxu0 %v990
        %4733 = vmatprep.subr.mxu0 %v989
        %4734 = vmatpush1.msra.mxu0 %v988
        %4735 = vmatprep.subr.mxu0 %v987
        %4736 = vmatpush1.msra.mxu0 %v986
        %4737 = vmatprep.subr.mxu0 %v985
        %4738 = vmatpush1.msra.mxu0 %v984
        %4739 = vmatprep.subr.mxu0 %v983
        %4740 = vmatpush1.msra.mxu0 %v982
        %4741 = vmatprep.subr.mxu0 %v981
        %4742 = vmatpush1.msra.mxu0 %v980
        %4743 = vmatprep.subr.mxu0 %v979
        %4744 = vmatpush1.msra.mxu0 %v978
        %4745 = vmatprep.subr.mxu0 %v977
        %4746 = vmatpush1.msra.mxu0 %v976
        %4747 = vmatprep.subr.mxu0 %v975
        %4748 = vmatpush1.msra.mxu0 %v974
        %4749 = vmatprep.subr.mxu0 %v973
        %4750 = vmatpush1.msra.mxu0 %v972
        %4751 = vmatprep.subr.mxu0 %v971
        %4752 = vmatpush1.msra.mxu0 %v970
        %4753 = vmatprep.subr.mxu0 %v969
        %4754 = vmatpush1.msra.mxu0 %v968
        %4755 = vmatprep.subr.mxu0 %v967
        %4756 = vmatpush1.msra.mxu0 %v966
        %4757 = vmatprep.subr.mxu0 %v965
        %4758 = vmatpush1.msra.mxu0 %v964
        %4759 = vmatprep.subr.mxu0 %v1027
        %4760 = vmatpush2.msra.mxu0 %v1026
        %4761 = vmatprep.subr.mxu0 %v1025
        %4762 = vmatpush2.msra.mxu0 %v1024
        %4763 = vmatprep.subr.mxu0 %v1023
        %4764 = vmatpush2.msra.mxu0 %v1022
        %4765 = vmatprep.subr.mxu0 %v1021
        %4766 = vmatpush2.msra.mxu0 %v1020
        %4767 = vmatprep.subr.mxu0 %v1019
        %4768 = vmatpush2.msra.mxu0 %v1018
        %4769 = vmatprep.subr.mxu0 %v1017
        %4770 = vmatpush2.msra.mxu0 %v1016
        %4771 = vmatprep.subr.mxu0 %v1015
        %4772 = vmatpush2.msra.mxu0 %v1014
        %4773 = vmatprep.subr.mxu0 %v1013
        %4774 = vmatpush2.msra.mxu0 %v1012
        %4775 = vmatprep.subr.mxu0 %v1011
        %4776 = vmatpush2.msra.mxu0 %v1010
        %4777 = vmatprep.subr.mxu0 %v1009
        %4778 = vmatpush2.msra.mxu0 %v1008
        %4779 = vmatprep.subr.mxu0 %v1007
        %4780 = vmatpush2.msra.mxu0 %v1006
        %4781 = vmatprep.subr.mxu0 %v1005
        %4782 = vmatpush2.msra.mxu0 %v1004
        %4783 = vmatprep.subr.mxu0 %v1003
        %4784 = vmatpush2.msra.mxu0 %v1002
        %4785 = vmatprep.subr.mxu0 %v1001
        %4786 = vmatpush2.msra.mxu0 %v1000
        %4787 = vmatprep.subr.mxu0 %v999
        %4788 = vmatpush2.msra.mxu0 %v998
        %4789 = vmatprep.subr.mxu0 %v997
        %4790 = vmatpush2.msra.mxu0 %v996
        %4791 = vmatprep.mubr.f32.mxu0 %v3745
        %4792 = vmatmul.mubr.f32.gmra.mxu0 %v3744
        %v4793 = vpop.f32.mrf.mxu0
        %v4794 = vadd.f32 0.0, %v4793
        %v4795 = vpop.f32.mrf.mxu0
        %v4796 = vadd.f32 0.0, %v4795
        %4797 = vdwg.mxu0
        %s4798 = scalar_lea.vmem [#allocation7], 7
        %v4799 = vld [vmem:[%s4798] sm:$0x1]
        %v4801 = vsel %vm2546, %v4799, 0
        %4803 = vmatprep.subr.mxu0 0.0
        %4804 = vmatpush1.msra.mxu0 0.0
        %4805 = vmatprep.subr.mxu0 0.0
        %4806 = vmatpush1.msra.mxu0 0.0
        %4807 = vmatprep.subr.mxu0 0.0
        %4808 = vmatpush1.msra.mxu0 0.0
        %4809 = vmatprep.subr.mxu0 0.0
        %4810 = vmatpush1.msra.mxu0 0.0
        %4811 = vmatprep.subr.mxu0 0.0
        %4812 = vmatpush1.msra.mxu0 0.0
        %4813 = vmatprep.subr.mxu0 0.0
        %4814 = vmatpush1.msra.mxu0 0.0
        %4815 = vmatprep.subr.mxu0 0.0
        %4816 = vmatpush1.msra.mxu0 0.0
        %4817 = vmatprep.subr.mxu0 0.0
        %4818 = vmatpush1.msra.mxu0 0.0
        %4819 = vmatprep.subr.mxu0 0.0
        %4820 = vmatpush1.msra.mxu0 0.0
        %4821 = vmatprep.subr.mxu0 0.0
        %4822 = vmatpush1.msra.mxu0 0.0
        %4823 = vmatprep.subr.mxu0 0.0
        %4824 = vmatpush1.msra.mxu0 0.0
        %4825 = vmatprep.subr.mxu0 0.0
        %4826 = vmatpush1.msra.mxu0 0.0
        %4827 = vmatprep.subr.mxu0 0.0
        %4828 = vmatpush1.msra.mxu0 0.0
        %4829 = vmatprep.subr.mxu0 0.0
        %4830 = vmatpush1.msra.mxu0 0.0
        %4831 = vmatprep.subr.mxu0 0.0
        %4832 = vmatpush1.msra.mxu0 0.0
        %4833 = vmatprep.subr.mxu0 %v4796
        %4834 = vmatpush1.msra.mxu0 %v4794
        %4835 = vmatprep.subr.mxu0 0.0
        %4836 = vmatpush2.msra.mxu0 0.0
        %4837 = vmatprep.subr.mxu0 0.0
        %4838 = vmatpush2.msra.mxu0 0.0
        %4839 = vmatprep.subr.mxu0 0.0
        %4840 = vmatpush2.msra.mxu0 0.0
        %4841 = vmatprep.subr.mxu0 0.0
        %4842 = vmatpush2.msra.mxu0 0.0
        %4843 = vmatprep.subr.mxu0 0.0
        %4844 = vmatpush2.msra.mxu0 0.0
        %4845 = vmatprep.subr.mxu0 0.0
        %4846 = vmatpush2.msra.mxu0 0.0
        %4847 = vmatprep.subr.mxu0 0.0
        %4848 = vmatpush2.msra.mxu0 0.0
        %4849 = vmatprep.subr.mxu0 0.0
        %4850 = vmatpush2.msra.mxu0 0.0
        %4851 = vmatprep.subr.mxu0 0.0
        %4852 = vmatpush2.msra.mxu0 0.0
        %4853 = vmatprep.subr.mxu0 0.0
        %4854 = vmatpush2.msra.mxu0 0.0
        %4855 = vmatprep.subr.mxu0 0.0
        %4856 = vmatpush2.msra.mxu0 0.0
        %4857 = vmatprep.subr.mxu0 0.0
        %4858 = vmatpush2.msra.mxu0 0.0
        %4859 = vmatprep.subr.mxu0 0.0
        %4860 = vmatpush2.msra.mxu0 0.0
        %4861 = vmatprep.subr.mxu0 0.0
        %4862 = vmatpush2.msra.mxu0 0.0
        %4863 = vmatprep.subr.mxu0 0.0
        %4864 = vmatpush2.msra.mxu0 0.0
        %4865 = vmatprep.subr.mxu0 0.0
        %4866 = vmatpush2.msra.mxu0 0.0
        %4867 = vmatprep.mubr.f32.mxu0 0.0
        %4868 = vmatmul.mubr.f32.gmra.mxu0 %v4801
        %v4869 = vpop.f32.mrf.mxu0
        %v4870 = vadd.f32 0.0, %v4869
        %v4871 = vpop.f32.mrf.mxu0
        %v4872 = vadd.f32 0.0, %v4871
        %4873 = vdwg.mxu0
        %v4874 = vadd.f32 %v4725, %v4870
        %v4875 = vadd.f32 %v4726, %v4872
        %4876 = vmatprep.subr.mxu0 %v1092
        %4877 = vmatpush1.msra.mxu0 %v1091
        %4878 = vmatprep.subr.mxu0 %v1090
        %4879 = vmatpush1.msra.mxu0 %v1089
        %4880 = vmatprep.subr.mxu0 %v1088
        %4881 = vmatpush1.msra.mxu0 %v1087
        %4882 = vmatprep.subr.mxu0 %v1086
        %4883 = vmatpush1.msra.mxu0 %v1085
        %4884 = vmatprep.subr.mxu0 %v1084
        %4885 = vmatpush1.msra.mxu0 %v1083
        %4886 = vmatprep.subr.mxu0 %v1082
        %4887 = vmatpush1.msra.mxu0 %v1081
        %4888 = vmatprep.subr.mxu0 %v1080
        %4889 = vmatpush1.msra.mxu0 %v1079
        %4890 = vmatprep.subr.mxu0 %v1078
        %4891 = vmatpush1.msra.mxu0 %v1077
        %4892 = vmatprep.subr.mxu0 %v1076
        %4893 = vmatpush1.msra.mxu0 %v1075
        %4894 = vmatprep.subr.mxu0 %v1074
        %4895 = vmatpush1.msra.mxu0 %v1073
        %4896 = vmatprep.subr.mxu0 %v1072
        %4897 = vmatpush1.msra.mxu0 %v1071
        %4898 = vmatprep.subr.mxu0 %v1070
        %4899 = vmatpush1.msra.mxu0 %v1069
        %4900 = vmatprep.subr.mxu0 %v1068
        %4901 = vmatpush1.msra.mxu0 %v1067
        %4902 = vmatprep.subr.mxu0 %v1066
        %4903 = vmatpush1.msra.mxu0 %v1065
        %4904 = vmatprep.subr.mxu0 %v1064
        %4905 = vmatpush1.msra.mxu0 %v1063
        %4906 = vmatprep.subr.mxu0 %v1062
        %4907 = vmatpush1.msra.mxu0 %v1061
        %4908 = vmatprep.subr.mxu0 %v1124
        %4909 = vmatpush2.msra.mxu0 %v1123
        %4910 = vmatprep.subr.mxu0 %v1122
        %4911 = vmatpush2.msra.mxu0 %v1121
        %4912 = vmatprep.subr.mxu0 %v1120
        %4913 = vmatpush2.msra.mxu0 %v1119
        %4914 = vmatprep.subr.mxu0 %v1118
        %4915 = vmatpush2.msra.mxu0 %v1117
        %4916 = vmatprep.subr.mxu0 %v1116
        %4917 = vmatpush2.msra.mxu0 %v1115
        %4918 = vmatprep.subr.mxu0 %v1114
        %4919 = vmatpush2.msra.mxu0 %v1113
        %4920 = vmatprep.subr.mxu0 %v1112
        %4921 = vmatpush2.msra.mxu0 %v1111
        %4922 = vmatprep.subr.mxu0 %v1110
        %4923 = vmatpush2.msra.mxu0 %v1109
        %4924 = vmatprep.subr.mxu0 %v1108
        %4925 = vmatpush2.msra.mxu0 %v1107
        %4926 = vmatprep.subr.mxu0 %v1106
        %4927 = vmatpush2.msra.mxu0 %v1105
        %4928 = vmatprep.subr.mxu0 %v1104
        %4929 = vmatpush2.msra.mxu0 %v1103
        %4930 = vmatprep.subr.mxu0 %v1102
        %4931 = vmatpush2.msra.mxu0 %v1101
        %4932 = vmatprep.subr.mxu0 %v1100
        %4933 = vmatpush2.msra.mxu0 %v1099
        %4934 = vmatprep.subr.mxu0 %v1098
        %4935 = vmatpush2.msra.mxu0 %v1097
        %4936 = vmatprep.subr.mxu0 %v1096
        %4937 = vmatpush2.msra.mxu0 %v1095
        %4938 = vmatprep.subr.mxu0 %v1094
        %4939 = vmatpush2.msra.mxu0 %v1093
        %4940 = vmatprep.mubr.f32.mxu0 %v3745
        %4941 = vmatmul.mubr.f32.gmra.mxu0 %v3744
        %v4942 = vpop.f32.mrf.mxu0
        %v4943 = vadd.f32 0.0, %v4942
        %v4944 = vpop.f32.mrf.mxu0
        %v4945 = vadd.f32 0.0, %v4944
        %4946 = vdwg.mxu0
        %s4947 = scalar_lea.vmem [#allocation7], 8
        %v4948 = vld [vmem:[%s4947] sm:$0x1]
        %v4950 = vsel %vm2546, %v4948, 0
        %4952 = vmatprep.subr.mxu0 0.0
        %4953 = vmatpush1.msra.mxu0 0.0
        %4954 = vmatprep.subr.mxu0 0.0
        %4955 = vmatpush1.msra.mxu0 0.0
        %4956 = vmatprep.subr.mxu0 0.0
        %4957 = vmatpush1.msra.mxu0 0.0
        %4958 = vmatprep.subr.mxu0 0.0
        %4959 = vmatpush1.msra.mxu0 0.0
        %4960 = vmatprep.subr.mxu0 0.0
        %4961 = vmatpush1.msra.mxu0 0.0
        %4962 = vmatprep.subr.mxu0 0.0
        %4963 = vmatpush1.msra.mxu0 0.0
        %4964 = vmatprep.subr.mxu0 0.0
        %4965 = vmatpush1.msra.mxu0 0.0
        %4966 = vmatprep.subr.mxu0 0.0
        %4967 = vmatpush1.msra.mxu0 0.0
        %4968 = vmatprep.subr.mxu0 0.0
        %4969 = vmatpush1.msra.mxu0 0.0
        %4970 = vmatprep.subr.mxu0 0.0
        %4971 = vmatpush1.msra.mxu0 0.0
        %4972 = vmatprep.subr.mxu0 0.0
        %4973 = vmatpush1.msra.mxu0 0.0
        %4974 = vmatprep.subr.mxu0 0.0
        %4975 = vmatpush1.msra.mxu0 0.0
        %4976 = vmatprep.subr.mxu0 0.0
        %4977 = vmatpush1.msra.mxu0 0.0
        %4978 = vmatprep.subr.mxu0 0.0
        %4979 = vmatpush1.msra.mxu0 0.0
        %4980 = vmatprep.subr.mxu0 0.0
        %4981 = vmatpush1.msra.mxu0 0.0
        %4982 = vmatprep.subr.mxu0 %v4945
        %4983 = vmatpush1.msra.mxu0 %v4943
        %4984 = vmatprep.subr.mxu0 0.0
        %4985 = vmatpush2.msra.mxu0 0.0
        %4986 = vmatprep.subr.mxu0 0.0
        %4987 = vmatpush2.msra.mxu0 0.0
        %4988 = vmatprep.subr.mxu0 0.0
        %4989 = vmatpush2.msra.mxu0 0.0
        %4990 = vmatprep.subr.mxu0 0.0
        %4991 = vmatpush2.msra.mxu0 0.0
        %4992 = vmatprep.subr.mxu0 0.0
        %4993 = vmatpush2.msra.mxu0 0.0
        %4994 = vmatprep.subr.mxu0 0.0
        %4995 = vmatpush2.msra.mxu0 0.0
        %4996 = vmatprep.subr.mxu0 0.0
        %4997 = vmatpush2.msra.mxu0 0.0
        %4998 = vmatprep.subr.mxu0 0.0
        %4999 = vmatpush2.msra.mxu0 0.0
        %5000 = vmatprep.subr.mxu0 0.0
        %5001 = vmatpush2.msra.mxu0 0.0
        %5002 = vmatprep.subr.mxu0 0.0
        %5003 = vmatpush2.msra.mxu0 0.0
        %5004 = vmatprep.subr.mxu0 0.0
        %5005 = vmatpush2.msra.mxu0 0.0
        %5006 = vmatprep.subr.mxu0 0.0
        %5007 = vmatpush2.msra.mxu0 0.0
        %5008 = vmatprep.subr.mxu0 0.0
        %5009 = vmatpush2.msra.mxu0 0.0
        %5010 = vmatprep.subr.mxu0 0.0
        %5011 = vmatpush2.msra.mxu0 0.0
        %5012 = vmatprep.subr.mxu0 0.0
        %5013 = vmatpush2.msra.mxu0 0.0
        %5014 = vmatprep.subr.mxu0 0.0
        %5015 = vmatpush2.msra.mxu0 0.0
        %5016 = vmatprep.mubr.f32.mxu0 0.0
        %5017 = vmatmul.mubr.f32.gmra.mxu0 %v4950
        %v5018 = vpop.f32.mrf.mxu0
        %v5019 = vadd.f32 0.0, %v5018
        %v5020 = vpop.f32.mrf.mxu0
        %v5021 = vadd.f32 0.0, %v5020
        %5022 = vdwg.mxu0
        %v5023 = vadd.f32 %v4874, %v5019
        %v5024 = vadd.f32 %v4875, %v5021
        %v5027 = vcombine.low %v5023, %v5024
        %v5029 = vunpack.c.l.s4 1966171168
        %v5030 = vunpack.c.0.s8 %v5029
        %v5031 = vlaneseq
        %v5032 = vshrl.u32 %v5031, 7
        %v5033 = vsub.s32 %v5030, %v5032
        %v5034 = vrot.slane %v5027, %v5033
        %v5036 = vunpack.c.l.s4 1966171168
        %v5037 = vunpack.c.0.s8 %v5036
        %v5038 = vlaneseq
        %v5039 = vshrl.u32 %v5038, 7
        %v5040 = vsub.s32 %v5037, %v5039
        %v5041 = vrot.slane %v5034, %v5040
        %v5043 = vlaneseq
        %vm5044 = vcmp.ge.s32.totalorder %v5043, 0
        %vm5045 = vcmp.lt.s32.totalorder %v5043, 256
        %vm5046 = vmand %vm5044, %vm5045
        %5047 = vst.msk [vmem:[%s349] sm:$0x3] %vm5046, %v5041
        %p5048 = scmp.lt.s32.totalorder %s23, 1
        %s5049 = scalar_select %p5048, %s23, 1
        %s5050 = smul.addr %s5049, 2
        %s5051 = scalar_lea.vmem %s8, %s5050
        // Predicated region
        $region65: #{tddft_cnn_forward.1} parent=51 // pred_check
          %p5052 = pneg %p214
        $region66: #{tddft_cnn_forward.1} parent=51 // pred_check_branch
          %5054 = sbr.rel (%p5052) target = $region68
        $region67: #{tddft_cnn_forward.1} parent=51 // pred_region
          _
        $region68: #{tddft_cnn_forward.1} parent=51 // pred_fallthru
          _
      $region52: #{tddft_cnn_forward.1} parent=5 // pred_fallthru
        _
      %p5055 = scmp.le.s32.totalorder 2, %s18
      // Predicated region
      $region69: #{tddft_cnn_forward.1} parent=5 // pred_check
        %p5056 = pneg %p5055
      $region70: #{tddft_cnn_forward.1} parent=5 // pred_check_branch
        %5058 = sbr.rel (%p5056) target = $region72
      $region71: #{tddft_cnn_forward.1} parent=5 // pred_region
        %s5059 = ssub.s32 %s18, 2
        // Predicated region
        $region73: #{tddft_cnn_forward.1} parent=71 // pred_check
          %p5060 = pneg %p220
        $region74: #{tddft_cnn_forward.1} parent=71 // pred_check_branch
          %5062 = sbr.rel (%p5060) target = $region76
        $region75: #{tddft_cnn_forward.1} parent=71 // pred_region
          %p5063 = scmp.lt.s32.totalorder %s24, 1
          %s5064 = scalar_select %p5063, %s24, 1
          %s5065 = smul.addr %s5064, 2
          %s5066 = scalar_lea.vmem %s8, %s5065
        $region76: #{tddft_cnn_forward.1} parent=71 // pred_fallthru
          _
      $region72: #{tddft_cnn_forward.1} parent=5 // pred_fallthru
        _
    $region6: #{tddft_cnn_forward.1} parent=1 // loop_footer
      %s22 = sadd.s32 1, %s18
    $region7: #{tddft_cnn_forward.1} parent=1 // loop_footer_branch
      %17 = sbr.rel target = $region3
    $region8: #{tddft_cnn_forward.1} parent=1 // loop_exit
      _
    %5067 = vsyncpa [#allocation4], 1
    %s5068 = scalar_lea.sflag [#allocation4], 1
    %5069 = vsyncpa %s5068, 1
    %5070 = vsyncpa [#allocation6], 1

</llo_original>
